<compile_context>
chip_gen: v7x
topology: tpu7x:2x2x1
jax: 0.10.0
libtpu: 0.0.40
codegen_flags: <defaults>
</compile_context>

<pallas_src>
import functools

import numpy as np
import jax
import jax.numpy as jnp
from jax import lax
from jax.experimental import pallas as pl
from jax.experimental.pallas import tpu as pltpu


# Fixed perception filters (same constants as the PyTorch module; conv2d is
# cross-correlation so no flipping is needed).
_IDENT = np.array([[0., 0., 0.], [0., 1., 0.], [0., 0., 0.]], np.float32)
_SOBEL_X = np.array([[-1., 0., 1.], [-2., 0., 2.], [-1., 0., 1.]], np.float32) / 8.0
_LAP = np.array([[1., 2., 1.], [2., -12., 2.], [1., 2., 1.]], np.float32) / 16.0
_FILTERS = np.stack([_IDENT, _SOBEL_X, _SOBEL_X.T, _LAP])  # (4, 3, 3)


def _pad_hw(v, pad_val):
    """Constant-pad a (H, W, K) value by 1 on both spatial dims -> (H+2, W+2, K)."""
    H, W, K = v.shape
    row = jnp.full((1, W, K), pad_val, v.dtype)
    v = jnp.concatenate([row, v, row], axis=0)
    col = jnp.full((H + 2, 1, K), pad_val, v.dtype)
    return jnp.concatenate([col, v, col], axis=1)


def _cea_kernel(xpad_ref, xflat_ref, rnd_ref, ataps_ref,
                w1_ref, b1_ref, w2_ref, b2_ref,
                out_ref, alive_ref, clamp_ref,
                *, use_pooled_alive, background_intensity, step_size):
    _, Hp2, Wp2, C = xpad_ref.shape
    H, W = Hp2 - 2, Wp2 - 2
    HW = H * W

    xp = xpad_ref[0]                     # (H+2, W+2, C) circularly padded, NHWC
    x_int = xp[1:H + 1, 1:W + 1, :]      # interior == original image (no extra input)
    xflat = xflat_ref[0]                 # (C, H*W)  lane-dense NCHW-flat view of x
    rnd = rnd_ref[0]                     # (1, H*W)  random 0/1 mask

    # ---- perception: per-channel circular 3x3 conv with 3 fixed filters (VPU) ----
    accs = [jnp.zeros((H, W, C), jnp.float32) for _ in range(3)]  # sobel_x, sobel_x.T, lap
    for dy in range(3):
        for dx in range(3):
            coefs = [float(_FILTERS[f, dy, dx]) for f in (1, 2, 3)]
            if all(c == 0.0 for c in coefs):
                continue
            slab = xp[dy:dy + H, dx:dx + W, :]
            for k, c in enumerate(coefs):
                if c != 0.0:
                    accs[k] = accs[k] + c * slab
    # channel order: filter-major (f*C + c); conv1 weights are permuted to match.
    p = jnp.concatenate([x_int] + accs, axis=-1)            # (H, W, 4C), f32
    p_bf = p.astype(jnp.bfloat16)

    # ---- conv1: 3x3, zero padding, 4C -> HID as a SINGLE im2col matmul ----
    pz = _pad_hw(p_bf, 0.0)                                  # (H+2, W+2, 4C)
    cols = [pz[dy:dy + H, dx:dx + W, :] for dy in range(3) for dx in range(3)]
    slab = jnp.concatenate(cols, axis=-1).reshape(HW, 9 * 4 * C)   # (HW, 576) bf16
    hidden = jnp.dot(slab, w1_ref[...], preferred_element_type=jnp.float32)
    hidden = jnp.maximum(hidden + b1_ref[...], 0.0)          # ReLU, (HW, HID) f32

    # ---- conv2: 1x1, HID -> C, produced TRANSPOSED (C, HW) so the result,
    #      the CA update and the store are all lane-dense. ----
    y_t = lax.dot_general(w2_ref[...], hidden.astype(jnp.bfloat16),
                          (((1,), (1,)), ((), ())),
                          preferred_element_type=jnp.float32) + b2_ref[...]   # (C, HW)

    # ---- alive mask (lane-dense, spatial flat on the lane dim) ----
    alpha = xflat[1:2, :]                                    # (1, HW)
    thresholded = (alpha > 0.1).astype(jnp.float32)
    if use_pooled_alive:
        # 3x3 max-pool with implicit -inf padding: taps are pre-shifted copies of
        # alpha with a large negative fill; the centre tap is always real so the
        # max equals F.max_pool2d(alpha, 3, 1, padding=1).
        taps = ataps_ref[0]                                  # (9, HW)
        pooled = jnp.max(taps, axis=0, keepdims=True)        # (1, HW)
        alive = (pooled > 0.1).astype(jnp.float32)
        mask_prev = thresholded
    else:
        alive = thresholded
        mask_prev = jnp.zeros_like(alive)

    # ---- mask_clamp channel 0 (channels 1..C-1 are a constant -> wrapper) ----
    clamp_ref[0] = jnp.clip(1.0 - (alive - mask_prev) + background_intensity,
                            0.0, step_size)
    alive_ref[0] = alive

    # ---- CA update, computed and stored lane-dense: out = (x + Y*rand01)*alive ----
    out_ref[0] = (xflat + y_t * rnd) * alive


def cea_forward(x_nchw, rnd_nchw, w1, b1, w2, b2, epoch_in, epoch_outside, *,
                grow_on_k_iter=1, background_intensity=0.19, step_size=1,
                scale_mask=1, pretrain_thres=100):
    """Pallas implementation of CeA_BASE_1CNN.forward. Inputs/outputs are NCHW."""
    B, C, H, W = x_nchw.shape
    HW = H * W
    HID = w1.shape[0]
    assert w1.shape == (HID, 4 * C, 3, 3) and w2.shape == (C, HID, 1, 1)

    x_nchw = x_nchw.astype(jnp.float32)
    # NHWC circular-padded copy feeds perception + conv1 (channel-minor for MXU K).
    x_nhwc = jnp.transpose(x_nchw, (0, 2, 3, 1))
    xpad = jnp.pad(x_nhwc, ((0, 0), (1, 1), (1, 1), (0, 0)), mode="wrap")
    # Lane-dense NCHW-flat views (free reshapes of the original layout).
    x_flat = x_nchw.reshape(B, C, HW)
    rnd_flat = rnd_nchw.astype(jnp.float32).reshape(B, 1, HW)
    # Pre-shifted alpha taps for the 3x3 max-pool. -inf padding is emulated with a
    # large negative constant; safe because the centre tap is always a real value.
    alpha = x_nchw[:, 1, :, :]
    apad = jnp.pad(alpha, ((0, 0), (1, 1), (1, 1)), constant_values=-1e30)
    alpha_taps = jnp.stack(
        [apad[:, dy:dy + H, dx:dx + W] for dy in range(3) for dx in range(3)],
        axis=1).reshape(B, 9, HW)

    # Static branch selection (mirrors the PyTorch if/elif/else on python ints).
    use_pooled = (epoch_outside < pretrain_thres) or (epoch_in % grow_on_k_iter == 0)

    # conv1 weights: torch (HID, c*4+f, ky, kx) -> ((3*ky+kx)*4C + f*C + c, HID), bf16.
    w1_k = jnp.transpose(w1.reshape(HID, C, 4, 3, 3), (3, 4, 2, 1, 0)) \
              .reshape(9 * 4 * C, HID).astype(jnp.bfloat16)
    b1_k = b1.reshape(1, HID).astype(jnp.float32)
    w2_k = w2.reshape(C, HID).astype(jnp.bfloat16)        # used as y^T = w2 @ hidden^T
    b2_k = b2.reshape(C, 1).astype(jnp.float32)

    kernel = functools.partial(
        _cea_kernel,
        use_pooled_alive=bool(use_pooled),
        background_intensity=float(background_intensity),
        step_size=float(step_size),
    )

    in_specs = [
        pl.BlockSpec((1, H + 2, W + 2, C), lambda b: (b, 0, 0, 0)),  # circular-padded x (NHWC)
        pl.BlockSpec((1, C, HW), lambda b: (b, 0, 0)),               # x, NCHW-flat (lane dense)
        pl.BlockSpec((1, 1, HW), lambda b: (b, 0, 0)),               # random 0/1 mask
        pl.BlockSpec((1, 9, HW), lambda b: (b, 0, 0)),               # pre-shifted alpha taps
        pl.BlockSpec((9 * 4 * C, HID), lambda b: (0, 0)),            # conv1 weights (bf16)
        pl.BlockSpec((1, HID), lambda b: (0, 0)),                    # conv1 bias
        pl.BlockSpec((C, HID), lambda b: (0, 0)),                    # conv2 weights (bf16)
        pl.BlockSpec((C, 1), lambda b: (0, 0)),                      # conv2 bias
    ]
    out_specs = [
        pl.BlockSpec((1, C, HW), lambda b: (b, 0, 0)),               # out (lane dense)
        pl.BlockSpec((1, 1, HW), lambda b: (b, 0, 0)),               # alive mask
        pl.BlockSpec((1, 1, HW), lambda b: (b, 0, 0)),               # mask_clamp channel 0
    ]
    out_shape = (
        jax.ShapeDtypeStruct((B, C, HW), jnp.float32),
        jax.ShapeDtypeStruct((B, 1, HW), jnp.float32),
        jax.ShapeDtypeStruct((B, 1, HW), jnp.float32),
    )

    out_flat, alive_flat, clamp0_flat = pl.pallas_call(
        kernel,
        out_shape=out_shape,
        grid_spec=pltpu.PrefetchScalarGridSpec(
            num_scalar_prefetch=0,
            grid=(B,),
            in_specs=in_specs,
            out_specs=out_specs,
        ),
        compiler_params=pltpu.CompilerParams(dimension_semantics=("parallel",)),
    )(xpad, x_flat, rnd_flat, alpha_taps, w1_k, b1_k, w2_k, b2_k)

    out = out_flat.reshape(B, C, H, W)          # free reshape: kernel emitted NCHW-flat
    alive = alive_flat.reshape(B, 1, H, W)
    clamp0 = clamp0_flat.reshape(B, 1, H, W)
    clamp = jnp.concatenate(
        [clamp0, jnp.full((B, C - 1, H, W), float(scale_mask), jnp.float32)], axis=1)
    return out, alive, clamp


def reference_forward(x_nchw, rnd_nchw, w1, b1, w2, b2, epoch_in, epoch_outside, *,
                      grow_on_k_iter=1, background_intensity=0.19, step_size=1,
                      scale_mask=1, pretrain_thres=100, matmul_inputs_bf16=False):
    """Pure-JAX NCHW reference mirroring the PyTorch forward (for verification).

    matmul_inputs_bf16=True emulates the kernel's bf16 MXU inputs (f32 accumulate)
    so the comparison can use a tight tolerance.
    """
    B, C, H, W = x_nchw.shape
    HID = w1.shape[0]
    filters = jnp.asarray(_FILTERS)                                            # (4, 3, 3)
    xpad = jnp.pad(x_nchw, ((0, 0), (0, 0), (1, 1), (1, 1)), mode="wrap")
    taps = jnp.stack([xpad[:, :, dy:dy + H, dx:dx + W]
                      for dy in range(3) for dx in range(3)], axis=-1)         # (B,C,H,W,9)
    P = jnp.einsum("bchwt,ft->bcfhw", taps, filters.reshape(4, 9),
                   precision=lax.Precision.HIGHEST).reshape(B, 4 * C, H, W)
    Ppad = jnp.pad(P, ((0, 0), (0, 0), (1, 1), (1, 1)))
    taps1 = jnp.stack([Ppad[:, :, dy:dy + H, dx:dx + W]
                       for dy in range(3) for dx in range(3)], axis=-1)        # (B,4C,H,W,9)
    w1r = w1.reshape(HID, 4 * C, 9)
    if matmul_inputs_bf16:
        taps1 = taps1.astype(jnp.bfloat16).astype(jnp.float32)
        w1r = w1r.astype(jnp.bfloat16).astype(jnp.float32)
    h = jnp.einsum("bihwt,oit->bohw", taps1, w1r,
                   precision=lax.Precision.HIGHEST) + b1[None, :, None, None]
    h = jnp.maximum(h, 0.0)
    w2r = w2.reshape(C, HID)
    if matmul_inputs_bf16:
        h = h.astype(jnp.bfloat16).astype(jnp.float32)
        w2r = w2r.astype(jnp.bfloat16).astype(jnp.float32)
    y = jnp.einsum("bihw,oi->bohw", h, w2r,
                   precision=lax.Precision.HIGHEST) + b2[None, :, None, None]

    alpha = x_nchw[:, 1:2]
    thr = (alpha > 0.1).astype(jnp.float32)
    use_pooled = (epoch_outside < pretrain_thres) or (epoch_in % grow_on_k_iter == 0)
    if use_pooled:
        apad = jnp.pad(alpha, ((0, 0), (0, 0), (1, 1), (1, 1)), constant_values=-jnp.inf)
        pooled = apad[:, :, 0:H, 0:W]
        for dy in range(3):
            for dx in range(3):
                pooled = jnp.maximum(pooled, apad[:, :, dy:dy + H, dx:dx + W])
        alive = (pooled > 0.1).astype(jnp.float32)
        prev = thr
    else:
        alive = thr
        prev = jnp.zeros_like(alive)
    diff = alive - prev
    ch0 = jnp.clip(1.0 - diff + background_intensity, 0.0, float(step_size))
    clamp = jnp.concatenate([ch0, jnp.full((B, C - 1, H, W), float(scale_mask))], axis=1)
    out = (x_nchw + y * rnd_nchw) * alive
    return out, alive, clamp


if __name__ == "__main__":
    key = jax.random.PRNGKey(0)
    kx, kw1, kw2, kr = jax.random.split(key, 4)

    B, C, H, W, HID = 2, 16, 16, 16, 256
    x = jax.random.uniform(kx, (B, C, H, W), jnp.float32)

    # Shapes from the module's nn.Sequential: Conv2d(64,256,3,pad=1) -> ReLU ->
    # Conv2d(256,16,1). The "do nothing" init zeroes biases and the last conv
    # weight; biases stay zero but conv weights are small random values so the
    # hot path is numerically exercised.
    w1 = 0.05 * jax.random.normal(kw1, (HID, 4 * C, 3, 3), jnp.float32)
    b1 = jnp.zeros((HID,), jnp.float32)
    w2 = 0.05 * jax.random.normal(kw2, (C, HID, 1, 1), jnp.float32)
    b2 = jnp.zeros((C,), jnp.float32)

    # torch.clamp(torch.round(torch.rand_like(x[:, :1])), 0, 1): generated host-side
    # with jax.random and passed in (RNG stays out of the kernel).
    rnd = jnp.clip(jnp.round(jax.random.uniform(kr, (B, 1, H, W), jnp.float32)), 0.0, 1.0)

    out, alive, clamp = cea_forward(x, rnd, w1, b1, w2, b2, epoch_in=0, epoch_outside=1000)
    (out, alive, clamp) = jax.block_until_ready((out, alive, clamp))

    # Tight check against a reference that emulates the kernel's bf16 MXU inputs.
    ref_out_bf, ref_alive, ref_clamp = reference_forward(
        x, rnd, w1, b1, w2, b2, 0, 1000, matmul_inputs_bf16=True)
    np.testing.assert_allclose(np.asarray(out), np.asarray(ref_out_bf),
                               rtol=5e-3, atol=5e-3)
    # Looser sanity check against the full-f32 reference (bf16 quantization noise).
    ref_out_f32, _, _ = reference_forward(x, rnd, w1, b1, w2, b2, 0, 1000)
    np.testing.assert_allclose(np.asarray(out), np.asarray(ref_out_f32),
                               rtol=5e-2, atol=5e-2)
    np.testing.assert_allclose(np.asarray(alive), np.asarray(ref_alive), rtol=0, atol=1e-6)
    np.testing.assert_allclose(np.asarray(clamp), np.asarray(ref_clamp), rtol=0, atol=1e-6)

    print("KERNEL_OK")
</pallas_src>

<mosaic_0001>
module attributes {stable_mosaic.version = 11 : i64} {
  func.func @_cea_kernel(%arg0: i32, %arg1: memref<1x18x18x16xf32, #tpu.memory_space<vmem>>, %arg2: memref<1x16x256xf32, #tpu.memory_space<vmem>>, %arg3: memref<1x1x256xf32, #tpu.memory_space<vmem>>, %arg4: memref<1x9x256xf32, #tpu.memory_space<vmem>>, %arg5: memref<576x256xbf16, #tpu.memory_space<vmem>>, %arg6: memref<1x256xf32, #tpu.memory_space<vmem>>, %arg7: memref<16x256xbf16, #tpu.memory_space<vmem>>, %arg8: memref<16x1xf32, #tpu.memory_space<vmem>>, %arg9: memref<1x16x256xf32, #tpu.memory_space<vmem>>, %arg10: memref<1x1x256xf32, #tpu.memory_space<vmem>>, %arg11: memref<1x1x256xf32, #tpu.memory_space<vmem>>) attributes {dimension_semantics = [#tpu.dimension_semantics<parallel>], iteration_bounds = array<i64: 2>, scalar_prefetch = 0 : i64, scratch_operands = 0 : i64, tpu.core_type = #tpu.core_type<tc>, window_params = [{transform_indices = @transform_0, window_bounds = array<i64: 1, 18, 18, 16>}, {transform_indices = @transform_1, window_bounds = array<i64: 1, 16, 256>}, {transform_indices = @transform_2, window_bounds = array<i64: 1, 1, 256>}, {transform_indices = @transform_3, window_bounds = array<i64: 1, 9, 256>}, {pipeline_mode = #tpu.pipeline_mode<synchronous>, transform_indices = @transform_4, window_bounds = array<i64: 576, 256>}, {pipeline_mode = #tpu.pipeline_mode<synchronous>, transform_indices = @transform_5, window_bounds = array<i64: 1, 256>}, {pipeline_mode = #tpu.pipeline_mode<synchronous>, transform_indices = @transform_6, window_bounds = array<i64: 16, 256>}, {pipeline_mode = #tpu.pipeline_mode<synchronous>, transform_indices = @transform_7, window_bounds = array<i64: 16, 1>}, {transform_indices = @transform_8, window_bounds = array<i64: 1, 16, 256>}, {transform_indices = @transform_9, window_bounds = array<i64: 1, 1, 256>}, {transform_indices = @transform_10, window_bounds = array<i64: 1, 1, 256>}]} {
    %c0 = arith.constant 0 : index
    %c0_0 = arith.constant 0 : index
    %c0_1 = arith.constant 0 : index
    %c0_2 = arith.constant 0 : index
    %0 = vector.load %arg1[%c0, %c0_0, %c0_1, %c0_2] : memref<1x18x18x16xf32, #tpu.memory_space<vmem>>, vector<1x18x18x16xf32>
    %1 = vector.shape_cast %0 : vector<1x18x18x16xf32> to vector<18x18x16xf32>
    %2 = vector.extract_strided_slice %1 {offsets = [1, 1, 0], sizes = [16, 16, 16], strides = [1, 1, 1]} : vector<18x18x16xf32> to vector<16x16x16xf32>
    %c0_3 = arith.constant 0 : index
    %c0_4 = arith.constant 0 : index
    %c0_5 = arith.constant 0 : index
    %3 = vector.load %arg2[%c0_3, %c0_4, %c0_5] : memref<1x16x256xf32, #tpu.memory_space<vmem>>, vector<1x16x256xf32>
    %4 = vector.shape_cast %3 : vector<1x16x256xf32> to vector<16x256xf32>
    %c0_6 = arith.constant 0 : index
    %c0_7 = arith.constant 0 : index
    %c0_8 = arith.constant 0 : index
    %5 = vector.load %arg3[%c0_6, %c0_7, %c0_8] : memref<1x1x256xf32, #tpu.memory_space<vmem>>, vector<1x1x256xf32>
    %6 = vector.shape_cast %5 : vector<1x1x256xf32> to vector<1x256xf32>
    %cst = arith.constant 0.000000e+00 : f32
    %7 = vector.broadcast %cst : f32 to vector<16x16x16xf32>
    %cst_9 = arith.constant 0.000000e+00 : f32
    %8 = vector.broadcast %cst_9 : f32 to vector<16x16x16xf32>
    %cst_10 = arith.constant 0.000000e+00 : f32
    %9 = vector.broadcast %cst_10 : f32 to vector<16x16x16xf32>
    %10 = vector.extract_strided_slice %1 {offsets = [0, 0, 0], sizes = [16, 16, 16], strides = [1, 1, 1]} : vector<18x18x16xf32> to vector<16x16x16xf32>
    %cst_11 = arith.constant -1.250000e-01 : f32
    %11 = vector.broadcast %cst_11 : f32 to vector<16x16x16xf32>
    %12 = arith.mulf %11, %10 : vector<16x16x16xf32>
    %13 = arith.addf %7, %12 : vector<16x16x16xf32>
    %cst_12 = arith.constant -1.250000e-01 : f32
    %14 = vector.broadcast %cst_12 : f32 to vector<16x16x16xf32>
    %15 = arith.mulf %14, %10 : vector<16x16x16xf32>
    %16 = arith.addf %8, %15 : vector<16x16x16xf32>
    %cst_13 = arith.constant 6.250000e-02 : f32
    %17 = vector.broadcast %cst_13 : f32 to vector<16x16x16xf32>
    %18 = arith.mulf %17, %10 : vector<16x16x16xf32>
    %19 = arith.addf %9, %18 : vector<16x16x16xf32>
    %20 = vector.extract_strided_slice %1 {offsets = [0, 1, 0], sizes = [16, 16, 16], strides = [1, 1, 1]} : vector<18x18x16xf32> to vector<16x16x16xf32>
    %cst_14 = arith.constant -2.500000e-01 : f32
    %21 = vector.broadcast %cst_14 : f32 to vector<16x16x16xf32>
    %22 = arith.mulf %21, %20 : vector<16x16x16xf32>
    %23 = arith.addf %16, %22 : vector<16x16x16xf32>
    %cst_15 = arith.constant 1.250000e-01 : f32
    %24 = vector.broadcast %cst_15 : f32 to vector<16x16x16xf32>
    %25 = arith.mulf %24, %20 : vector<16x16x16xf32>
    %26 = arith.addf %19, %25 : vector<16x16x16xf32>
    %27 = vector.extract_strided_slice %1 {offsets = [0, 2, 0], sizes = [16, 16, 16], strides = [1, 1, 1]} : vector<18x18x16xf32> to vector<16x16x16xf32>
    %cst_16 = arith.constant 1.250000e-01 : f32
    %28 = vector.broadcast %cst_16 : f32 to vector<16x16x16xf32>
    %29 = arith.mulf %28, %27 : vector<16x16x16xf32>
    %30 = arith.addf %13, %29 : vector<16x16x16xf32>
    %cst_17 = arith.constant -1.250000e-01 : f32
    %31 = vector.broadcast %cst_17 : f32 to vector<16x16x16xf32>
    %32 = arith.mulf %31, %27 : vector<16x16x16xf32>
    %33 = arith.addf %23, %32 : vector<16x16x16xf32>
    %cst_18 = arith.constant 6.250000e-02 : f32
    %34 = vector.broadcast %cst_18 : f32 to vector<16x16x16xf32>
    %35 = arith.mulf %34, %27 : vector<16x16x16xf32>
    %36 = arith.addf %26, %35 : vector<16x16x16xf32>
    %37 = vector.extract_strided_slice %1 {offsets = [1, 0, 0], sizes = [16, 16, 16], strides = [1, 1, 1]} : vector<18x18x16xf32> to vector<16x16x16xf32>
    %cst_19 = arith.constant -2.500000e-01 : f32
    %38 = vector.broadcast %cst_19 : f32 to vector<16x16x16xf32>
    %39 = arith.mulf %38, %37 : vector<16x16x16xf32>
    %40 = arith.addf %30, %39 : vector<16x16x16xf32>
    %cst_20 = arith.constant 1.250000e-01 : f32
    %41 = vector.broadcast %cst_20 : f32 to vector<16x16x16xf32>
    %42 = arith.mulf %41, %37 : vector<16x16x16xf32>
    %43 = arith.addf %36, %42 : vector<16x16x16xf32>
    %44 = vector.extract_strided_slice %1 {offsets = [1, 1, 0], sizes = [16, 16, 16], strides = [1, 1, 1]} : vector<18x18x16xf32> to vector<16x16x16xf32>
    %cst_21 = arith.constant -7.500000e-01 : f32
    %45 = vector.broadcast %cst_21 : f32 to vector<16x16x16xf32>
    %46 = arith.mulf %45, %44 : vector<16x16x16xf32>
    %47 = arith.addf %43, %46 : vector<16x16x16xf32>
    %48 = vector.extract_strided_slice %1 {offsets = [1, 2, 0], sizes = [16, 16, 16], strides = [1, 1, 1]} : vector<18x18x16xf32> to vector<16x16x16xf32>
    %cst_22 = arith.constant 2.500000e-01 : f32
    %49 = vector.broadcast %cst_22 : f32 to vector<16x16x16xf32>
    %50 = arith.mulf %49, %48 : vector<16x16x16xf32>
    %51 = arith.addf %40, %50 : vector<16x16x16xf32>
    %cst_23 = arith.constant 1.250000e-01 : f32
    %52 = vector.broadcast %cst_23 : f32 to vector<16x16x16xf32>
    %53 = arith.mulf %52, %48 : vector<16x16x16xf32>
    %54 = arith.addf %47, %53 : vector<16x16x16xf32>
    %55 = vector.extract_strided_slice %1 {offsets = [2, 0, 0], sizes = [16, 16, 16], strides = [1, 1, 1]} : vector<18x18x16xf32> to vector<16x16x16xf32>
    %cst_24 = arith.constant -1.250000e-01 : f32
    %56 = vector.broadcast %cst_24 : f32 to vector<16x16x16xf32>
    %57 = arith.mulf %56, %55 : vector<16x16x16xf32>
    %58 = arith.addf %51, %57 : vector<16x16x16xf32>
    %cst_25 = arith.constant 1.250000e-01 : f32
    %59 = vector.broadcast %cst_25 : f32 to vector<16x16x16xf32>
    %60 = arith.mulf %59, %55 : vector<16x16x16xf32>
    %61 = arith.addf %33, %60 : vector<16x16x16xf32>
    %cst_26 = arith.constant 6.250000e-02 : f32
    %62 = vector.broadcast %cst_26 : f32 to vector<16x16x16xf32>
    %63 = arith.mulf %62, %55 : vector<16x16x16xf32>
    %64 = arith.addf %54, %63 : vector<16x16x16xf32>
    %65 = vector.extract_strided_slice %1 {offsets = [2, 1, 0], sizes = [16, 16, 16], strides = [1, 1, 1]} : vector<18x18x16xf32> to vector<16x16x16xf32>
    %cst_27 = arith.constant 2.500000e-01 : f32
    %66 = vector.broadcast %cst_27 : f32 to vector<16x16x16xf32>
    %67 = arith.mulf %66, %65 : vector<16x16x16xf32>
    %68 = arith.addf %61, %67 : vector<16x16x16xf32>
    %cst_28 = arith.constant 1.250000e-01 : f32
    %69 = vector.broadcast %cst_28 : f32 to vector<16x16x16xf32>
    %70 = arith.mulf %69, %65 : vector<16x16x16xf32>
    %71 = arith.addf %64, %70 : vector<16x16x16xf32>
    %72 = vector.extract_strided_slice %1 {offsets = [2, 2, 0], sizes = [16, 16, 16], strides = [1, 1, 1]} : vector<18x18x16xf32> to vector<16x16x16xf32>
    %cst_29 = arith.constant 1.250000e-01 : f32
    %73 = vector.broadcast %cst_29 : f32 to vector<16x16x16xf32>
    %74 = arith.mulf %73, %72 : vector<16x16x16xf32>
    %75 = arith.addf %58, %74 : vector<16x16x16xf32>
    %cst_30 = arith.constant 1.250000e-01 : f32
    %76 = vector.broadcast %cst_30 : f32 to vector<16x16x16xf32>
    %77 = arith.mulf %76, %72 : vector<16x16x16xf32>
    %78 = arith.addf %68, %77 : vector<16x16x16xf32>
    %cst_31 = arith.constant 6.250000e-02 : f32
    %79 = vector.broadcast %cst_31 : f32 to vector<16x16x16xf32>
    %80 = arith.mulf %79, %72 : vector<16x16x16xf32>
    %81 = arith.addf %71, %80 : vector<16x16x16xf32>
    %82 = tpu.concatenate %2, %75, %78, %81 in 2 : vector<16x16x16xf32>, vector<16x16x16xf32>, vector<16x16x16xf32>, vector<16x16x16xf32> -> vector<16x16x64xf32>
    %83 = arith.truncf %82 : vector<16x16x64xf32> to vector<16x16x64xbf16>
    %cst_32 = arith.constant 0.000000e+00 : bf16
    %84 = vector.broadcast %cst_32 : bf16 to vector<1x16x64xbf16>
    %85 = tpu.concatenate %84, %83, %84 in 0 : vector<1x16x64xbf16>, vector<16x16x64xbf16>, vector<1x16x64xbf16> -> vector<18x16x64xbf16>
    %cst_33 = arith.constant 0.000000e+00 : bf16
    %86 = vector.broadcast %cst_33 : bf16 to vector<18x1x64xbf16>
    %87 = tpu.concatenate %86, %85, %86 in 1 : vector<18x1x64xbf16>, vector<18x16x64xbf16>, vector<18x1x64xbf16> -> vector<18x18x64xbf16>
    %88 = vector.extract_strided_slice %87 {offsets = [0, 0, 0], sizes = [16, 16, 64], strides = [1, 1, 1]} : vector<18x18x64xbf16> to vector<16x16x64xbf16>
    %89 = vector.extract_strided_slice %87 {offsets = [0, 1, 0], sizes = [16, 16, 64], strides = [1, 1, 1]} : vector<18x18x64xbf16> to vector<16x16x64xbf16>
    %90 = vector.extract_strided_slice %87 {offsets = [0, 2, 0], sizes = [16, 16, 64], strides = [1, 1, 1]} : vector<18x18x64xbf16> to vector<16x16x64xbf16>
    %91 = vector.extract_strided_slice %87 {offsets = [1, 0, 0], sizes = [16, 16, 64], strides = [1, 1, 1]} : vector<18x18x64xbf16> to vector<16x16x64xbf16>
    %92 = vector.extract_strided_slice %87 {offsets = [1, 1, 0], sizes = [16, 16, 64], strides = [1, 1, 1]} : vector<18x18x64xbf16> to vector<16x16x64xbf16>
    %93 = vector.extract_strided_slice %87 {offsets = [1, 2, 0], sizes = [16, 16, 64], strides = [1, 1, 1]} : vector<18x18x64xbf16> to vector<16x16x64xbf16>
    %94 = vector.extract_strided_slice %87 {offsets = [2, 0, 0], sizes = [16, 16, 64], strides = [1, 1, 1]} : vector<18x18x64xbf16> to vector<16x16x64xbf16>
    %95 = vector.extract_strided_slice %87 {offsets = [2, 1, 0], sizes = [16, 16, 64], strides = [1, 1, 1]} : vector<18x18x64xbf16> to vector<16x16x64xbf16>
    %96 = vector.extract_strided_slice %87 {offsets = [2, 2, 0], sizes = [16, 16, 64], strides = [1, 1, 1]} : vector<18x18x64xbf16> to vector<16x16x64xbf16>
    %97 = tpu.concatenate %88, %89, %90, %91, %92, %93, %94, %95, %96 in 2 : vector<16x16x64xbf16>, vector<16x16x64xbf16>, vector<16x16x64xbf16>, vector<16x16x64xbf16>, vector<16x16x64xbf16>, vector<16x16x64xbf16>, vector<16x16x64xbf16>, vector<16x16x64xbf16>, vector<16x16x64xbf16> -> vector<16x16x576xbf16>
    %98 = vector.shape_cast %97 : vector<16x16x576xbf16> to vector<256x576xbf16>
    %c0_34 = arith.constant 0 : index
    %c0_35 = arith.constant 0 : index
    %99 = vector.load %arg5[%c0_34, %c0_35] : memref<576x256xbf16, #tpu.memory_space<vmem>>, vector<576x256xbf16>
    %cst_36 = arith.constant dense<0.000000e+00> : vector<256x256xf32>
    %100 = tpu.matmul %98, %99, %cst_36 {dimension_numbers = #tpu.dot_dimension_numbers<[1], [0], [0], [1], [0, 0, 1, 1], [], []>} : vector<256x576xbf16>, vector<576x256xbf16>, vector<256x256xf32> -> vector<256x256xf32>
    %c0_37 = arith.constant 0 : index
    %c0_38 = arith.constant 0 : index
    %101 = vector.load %arg6[%c0_37, %c0_38] : memref<1x256xf32, #tpu.memory_space<vmem>>, vector<1x256xf32>
    %102 = vector.broadcast %101 : vector<1x256xf32> to vector<256x256xf32>
    %103 = arith.addf %100, %102 : vector<256x256xf32>
    %cst_39 = arith.constant 0.000000e+00 : f32
    %104 = vector.broadcast %cst_39 : f32 to vector<256x256xf32>
    %105 = arith.maximumf %103, %104 : vector<256x256xf32>
    %c0_40 = arith.constant 0 : index
    %c0_41 = arith.constant 0 : index
    %106 = vector.load %arg7[%c0_40, %c0_41] : memref<16x256xbf16, #tpu.memory_space<vmem>>, vector<16x256xbf16>
    %107 = arith.truncf %105 : vector<256x256xf32> to vector<256x256xbf16>
    %cst_42 = arith.constant dense<0.000000e+00> : vector<16x256xf32>
    %108 = tpu.matmul %106, %107, %cst_42 {dimension_numbers = #tpu.dot_dimension_numbers<[1], [1], [0], [0], [0, 0, 1, 0], [], []>} : vector<16x256xbf16>, vector<256x256xbf16>, vector<16x256xf32> -> vector<16x256xf32>
    %c0_43 = arith.constant 0 : index
    %c0_44 = arith.constant 0 : index
    %109 = vector.load %arg8[%c0_43, %c0_44] : memref<16x1xf32, #tpu.memory_space<vmem>>, vector<16x1xf32>
    %110 = vector.broadcast %109 : vector<16x1xf32> to vector<16x256xf32>
    %111 = arith.addf %108, %110 : vector<16x256xf32>
    %112 = vector.extract_strided_slice %4 {offsets = [1, 0], sizes = [1, 256], strides = [1, 1]} : vector<16x256xf32> to vector<1x256xf32>
    %cst_45 = arith.constant 1.000000e-01 : f32
    %113 = vector.broadcast %cst_45 : f32 to vector<1x256xf32>
    %114 = arith.cmpf ogt, %112, %113 : vector<1x256xf32>
    %115 = arith.extui %114 : vector<1x256xi1> to vector<1x256xi32>
    %116 = arith.sitofp %115 : vector<1x256xi32> to vector<1x256xf32>
    %c0_46 = arith.constant 0 : index
    %c0_47 = arith.constant 0 : index
    %c0_48 = arith.constant 0 : index
    %117 = vector.load %arg4[%c0_46, %c0_47, %c0_48] : memref<1x9x256xf32, #tpu.memory_space<vmem>>, vector<1x9x256xf32>
    %118 = vector.shape_cast %117 : vector<1x9x256xf32> to vector<9x256xf32>
    %cst_49 = arith.constant dense<0xFF800000> : vector<256xf32>
    %119 = vector.multi_reduction <maximumf>, %118, %cst_49 [0] : vector<9x256xf32> to vector<256xf32>
    %120 = vector.shape_cast %119 : vector<256xf32> to vector<1x256xf32>
    %cst_50 = arith.constant 1.000000e-01 : f32
    %121 = vector.broadcast %cst_50 : f32 to vector<1x256xf32>
    %122 = arith.cmpf ogt, %120, %121 : vector<1x256xf32>
    %123 = arith.extui %122 : vector<1x256xi1> to vector<1x256xi32>
    %124 = arith.sitofp %123 : vector<1x256xi32> to vector<1x256xf32>
    %125 = arith.subf %124, %116 : vector<1x256xf32>
    %cst_51 = arith.constant 1.000000e+00 : f32
    %126 = vector.broadcast %cst_51 : f32 to vector<1x256xf32>
    %127 = arith.subf %126, %125 : vector<1x256xf32>
    %cst_52 = arith.constant 1.900000e-01 : f32
    %128 = vector.broadcast %cst_52 : f32 to vector<1x256xf32>
    %129 = arith.addf %127, %128 : vector<1x256xf32>
    %cst_53 = arith.constant 0.000000e+00 : f32
    %cst_54 = arith.constant 1.000000e+00 : f32
    %130 = vector.broadcast %cst_53 : f32 to vector<1x256xf32>
    %131 = arith.maximumf %130, %129 : vector<1x256xf32>
    %132 = vector.broadcast %cst_54 : f32 to vector<1x256xf32>
    %133 = arith.minimumf %132, %131 : vector<1x256xf32>
    %c0_55 = arith.constant 0 : index
    %c0_56 = arith.constant 0 : index
    %c0_57 = arith.constant 0 : index
    %134 = vector.load %arg11[%c0_55, %c0_56, %c0_57] : memref<1x1x256xf32, #tpu.memory_space<vmem>>, vector<1x1x256xf32>
    %135 = vector.shape_cast %134 : vector<1x1x256xf32> to vector<1x256xf32>
    %136 = vector.shape_cast %133 : vector<1x256xf32> to vector<1x1x256xf32>
    tpu.vector_store %arg11[%c0_55, %c0_56, %c0_57], %136 {strides = array<i32>} : memref<1x1x256xf32, #tpu.memory_space<vmem>>, vector<1x1x256xf32>,
    %c0_58 = arith.constant 0 : index
    %c0_59 = arith.constant 0 : index
    %c0_60 = arith.constant 0 : index
    %137 = vector.load %arg10[%c0_58, %c0_59, %c0_60] : memref<1x1x256xf32, #tpu.memory_space<vmem>>, vector<1x1x256xf32>
    %138 = vector.shape_cast %137 : vector<1x1x256xf32> to vector<1x256xf32>
    %139 = vector.shape_cast %124 : vector<1x256xf32> to vector<1x1x256xf32>
    tpu.vector_store %arg10[%c0_58, %c0_59, %c0_60], %139 {strides = array<i32>} : memref<1x1x256xf32, #tpu.memory_space<vmem>>, vector<1x1x256xf32>,
    %140 = vector.broadcast %6 : vector<1x256xf32> to vector<16x256xf32>
    %141 = arith.mulf %111, %140 : vector<16x256xf32>
    %142 = arith.addf %4, %141 : vector<16x256xf32>
    %143 = vector.broadcast %124 : vector<1x256xf32> to vector<16x256xf32>
    %144 = arith.mulf %142, %143 : vector<16x256xf32>
    %c0_61 = arith.constant 0 : index
    %c0_62 = arith.constant 0 : index
    %c0_63 = arith.constant 0 : index
    %145 = vector.load %arg9[%c0_61, %c0_62, %c0_63] : memref<1x16x256xf32, #tpu.memory_space<vmem>>, vector<1x16x256xf32>
    %146 = vector.shape_cast %145 : vector<1x16x256xf32> to vector<16x256xf32>
    %147 = vector.shape_cast %144 : vector<16x256xf32> to vector<1x16x256xf32>
    tpu.vector_store %arg9[%c0_61, %c0_62, %c0_63], %147 {strides = array<i32>} : memref<1x16x256xf32, #tpu.memory_space<vmem>>, vector<1x16x256xf32>,
    return
  }
  func.func @transform_0(%arg0: i32) -> (i32, i32, i32, i32) {
    %c0_i32 = arith.constant 0 : i32
    %c0_i32_0 = arith.constant 0 : i32
    %c0_i32_1 = arith.constant 0 : i32
    %c0_i32_2 = arith.constant 0 : i32
    return %arg0, %c0_i32, %c0_i32_0, %c0_i32_1 : i32, i32, i32, i32
  }
  func.func @transform_1(%arg0: i32) -> (i32, i32, i32) {
    %c0_i32 = arith.constant 0 : i32
    %c0_i32_0 = arith.constant 0 : i32
    %c0_i32_1 = arith.constant 0 : i32
    return %arg0, %c0_i32, %c0_i32_0 : i32, i32, i32
  }
  func.func @transform_2(%arg0: i32) -> (i32, i32, i32) {
    %c0_i32 = arith.constant 0 : i32
    %c0_i32_0 = arith.constant 0 : i32
    %c0_i32_1 = arith.constant 0 : i32
    return %arg0, %c0_i32, %c0_i32_0 : i32, i32, i32
  }
  func.func @transform_3(%arg0: i32) -> (i32, i32, i32) {
    %c0_i32 = arith.constant 0 : i32
    %c0_i32_0 = arith.constant 0 : i32
    %c0_i32_1 = arith.constant 0 : i32
    return %arg0, %c0_i32, %c0_i32_0 : i32, i32, i32
  }
  func.func @transform_4(%arg0: i32) -> (i32, i32) {
    %c0_i32 = arith.constant 0 : i32
    %c0_i32_0 = arith.constant 0 : i32
    %c0_i32_1 = arith.constant 0 : i32
    return %c0_i32, %c0_i32_0 : i32, i32
  }
  func.func @transform_5(%arg0: i32) -> (i32, i32) {
    %c0_i32 = arith.constant 0 : i32
    %c0_i32_0 = arith.constant 0 : i32
    %c0_i32_1 = arith.constant 0 : i32
    return %c0_i32, %c0_i32_0 : i32, i32
  }
  func.func @transform_6(%arg0: i32) -> (i32, i32) {
    %c0_i32 = arith.constant 0 : i32
    %c0_i32_0 = arith.constant 0 : i32
    %c0_i32_1 = arith.constant 0 : i32
    return %c0_i32, %c0_i32_0 : i32, i32
  }
  func.func @transform_7(%arg0: i32) -> (i32, i32) {
    %c0_i32 = arith.constant 0 : i32
    %c0_i32_0 = arith.constant 0 : i32
    %c0_i32_1 = arith.constant 0 : i32
    return %c0_i32, %c0_i32_0 : i32, i32
  }
  func.func @transform_8(%arg0: i32) -> (i32, i32, i32) {
    %c0_i32 = arith.constant 0 : i32
    %c0_i32_0 = arith.constant 0 : i32
    %c0_i32_1 = arith.constant 0 : i32
    return %arg0, %c0_i32, %c0_i32_0 : i32, i32, i32
  }
  func.func @transform_9(%arg0: i32) -> (i32, i32, i32) {
    %c0_i32 = arith.constant 0 : i32
    %c0_i32_0 = arith.constant 0 : i32
    %c0_i32_1 = arith.constant 0 : i32
    return %arg0, %c0_i32, %c0_i32_0 : i32, i32, i32
  }
  func.func @transform_10(%arg0: i32) -> (i32, i32, i32) {
    %c0_i32 = arith.constant 0 : i32
    %c0_i32_0 = arith.constant 0 : i32
    %c0_i32_1 = arith.constant 0 : i32
    return %arg0, %c0_i32, %c0_i32_0 : i32, i32, i32
  }
}

</mosaic_0001>

<llo_original>
// kernel: tpu_custom_call.1
$region0: #{tpu_custom_call.1}
  #allocation0 [shape = 'u32[]', space=smem, size = 0x4, offset = 0x4, fixed_abs, tag = 'smem constant byte address 0x4 - core index']
  #allocation1 [shape = 'u32[144,128]{1,0:T(1,128)}', space=vmem, size = 0x12000, scoped, tag = 'internal scratch']
  %s0 = inlined_call_operand.vmem [shape: f32[2,18,18,16], index: 0, kind: input, shape index: {}]
  %s1 = inlined_call_operand.vmem [shape: f32[2,16,256], index: 1, kind: input, shape index: {}]
  %s2 = inlined_call_operand.vmem [shape: f32[2,1,256], index: 2, kind: input, shape index: {}]
  %s3 = inlined_call_operand.vmem [shape: f32[2,9,256], index: 3, kind: input, shape index: {}]
  %s4 = inlined_call_operand.vmem [shape: bf16[576,256], index: 4, kind: input, shape index: {}]
  %s5 = inlined_call_operand.vmem [shape: f32[1,256], index: 5, kind: input, shape index: {}]
  %s6 = inlined_call_operand.vmem [shape: bf16[16,256], index: 6, kind: input, shape index: {}]
  %s7 = inlined_call_operand.vmem [shape: f32[16,1], index: 7, kind: input, shape index: {}]
  %s8 = inlined_call_operand.hbm [shape: f32[2,16,256], index: 8, kind: output, shape index: {0}]
  %s9 = inlined_call_operand.hbm [shape: f32[2,1,256], index: 9, kind: output, shape index: {1}]
  %s10 = inlined_call_operand.hbm [shape: f32[2,1,256], index: 10, kind: output, shape index: {2}]
  %11 = xla_tuple %s8, %s9, %s10
  %s12 = sld [smem:[#allocation0]]
  $region81: #{tpu_custom_call.1} parent=0
    _
  %s14 = ssub.s32 1, %s12
  %s15 = scalar_select 0, %s14, %s12
  $region1: #{tpu_custom_call.1} parent=0
    #allocation2 [shape = 'u8[32768]{0}', space=vmem, size = 0x8000, scoped, tag = 'output window, operand 0']
    #allocation3 [shape = 's32[2]{0}', space=sflag, size = 0x8, scoped, tag = 'scoped memory for tpu_custom_call.1']
    #allocation4 [shape = 'u8[2048]{0}', space=vmem, size = 0x800, scoped, tag = 'output window, operand 1']
    #allocation5 [shape = 's32[2]{0}', space=sflag, size = 0x8, scoped, tag = 'scoped memory for tpu_custom_call.1']
    #allocation6 [shape = 'u8[2048]{0}', space=vmem, size = 0x800, scoped, tag = 'output window, operand 2']
    %16 = vsyncpa [#allocation3], 0
    %s17 = scalar_lea.sflag [#allocation3], 1
    %18 = vsyncpa %s17, 0
    %19 = vsyncpa [#allocation5], 0
    %s20 = scalar_lea.sflag [#allocation5], 1
    %21 = vsyncpa %s20, 0
    loop: start=0, step=1, limit=4
    $region2: #{tpu_custom_call.1} parent=1 // loop_pre_header
      _
    $region3: #{tpu_custom_call.1} parent=1 // loop_header
      %s23 = sphi 0, %s27
      %p24 = scmp.ge.s32.totalorder %s23, 4
      %s33 = sphi 0, %s35
      %s36 = sphi 0, %s33
      %s37 = sphi 0, %s36
      %s53 = sphi 0, %s37
      %s59 = sphi 0, %s61
      %s62 = sphi 0, %s59
      %s63 = sphi 0, %s62
      %s79 = sphi 0, %s63
      %s85 = sphi 0, %s87
      %s88 = sphi 0, %s85
      %s89 = sphi 0, %s88
      %s105 = sphi 0, %s89
      %s111 = sphi 0, %s113
      %s114 = sphi 0, %s111
      %s115 = sphi 0, %s114
      %s131 = sphi 0, %s115
      %s135 = sphi 0, %s135
      %s137 = sphi 0, %s135
      %s138 = sphi 0, %s137
      %s152 = sphi 0, %s138
      %s156 = sphi 0, %s156
      %s158 = sphi 0, %s156
      %s159 = sphi 0, %s158
      %s173 = sphi 0, %s159
      %s177 = sphi 0, %s177
      %s179 = sphi 0, %s177
      %s180 = sphi 0, %s179
      %s194 = sphi 0, %s180
      %s198 = sphi 0, %s198
      %s200 = sphi 0, %s198
      %s201 = sphi 0, %s200
      %s215 = sphi 0, %s201
      %s221 = sphi 0, %s223
      %s224 = sphi 0, %s221
      %s225 = sphi 0, %s224
      %s241 = sphi 0, %s225
      %s247 = sphi 0, %s249
      %s250 = sphi 0, %s247
      %s251 = sphi 0, %s250
      %s267 = sphi 0, %s251
      %s273 = sphi 0, %s275
      %s276 = sphi 0, %s273
      %s277 = sphi 0, %s276
      %s293 = sphi 0, %s277
    $region4: #{tpu_custom_call.1} parent=1 // loop_header_branch
      %26 = sbr.rel (%p24) target = $region8
    $region5: #{tpu_custom_call.1} parent=1 // loop_body
      %s28 = ssub.s32 %s23, 1
      %s29 = ssub.s32 %s23, 2
      %s30 = sadd.s32 %s23, 1
      %s31 = ssub.s32 %s23, %s30
      %p32 = scmp.eq.s32.totalorder %s31, 0
      %s34 = sadd.s32 %s33, 1
      %s35 = scalar_select %p32, %s33, %s34
      %p38 = pneg %p32
      %p39 = scmp.eq.s32.totalorder %s23, 1
      %p40 = por %p38, %p39
      %p41 = scmp.ne.s32.totalorder %s33, %s36
      %p42 = scmp.eq.s32.totalorder %s23, 0
      %p43 = por %p41, %p42
      %p44 = scmp.ne.s32.totalorder %s33, %s36
      %p45 = scmp.eq.s32.totalorder %s28, 1
      %p46 = por %p44, %p45
      %p47 = scmp.ne.s32.totalorder %s36, %s37
      %p48 = scmp.eq.s32.totalorder %s28, 0
      %p49 = por %p47, %p48
      %p50 = scmp.ne.s32.totalorder %s36, %s37
      %p51 = scmp.eq.s32.totalorder %s29, 1
      %p52 = por %p50, %p51
      %p54 = scmp.ne.s32.totalorder %s37, %s53
      %p55 = scmp.eq.s32.totalorder %s29, 0
      %p56 = por %p54, %p55
      %s57 = ssub.s32 %s23, %s30
      %p58 = scmp.eq.s32.totalorder %s57, 0
      %s60 = sadd.s32 %s59, 1
      %s61 = scalar_select %p58, %s59, %s60
      %p64 = pneg %p58
      %p65 = scmp.eq.s32.totalorder %s23, 1
      %p66 = por %p64, %p65
      %p67 = scmp.ne.s32.totalorder %s59, %s62
      %p68 = scmp.eq.s32.totalorder %s23, 0
      %p69 = por %p67, %p68
      %p70 = scmp.ne.s32.totalorder %s59, %s62
      %p71 = scmp.eq.s32.totalorder %s28, 1
      %p72 = por %p70, %p71
      %p73 = scmp.ne.s32.totalorder %s62, %s63
      %p74 = scmp.eq.s32.totalorder %s28, 0
      %p75 = por %p73, %p74
      %p76 = scmp.ne.s32.totalorder %s62, %s63
      %p77 = scmp.eq.s32.totalorder %s29, 1
      %p78 = por %p76, %p77
      %p80 = scmp.ne.s32.totalorder %s63, %s79
      %p81 = scmp.eq.s32.totalorder %s29, 0
      %p82 = por %p80, %p81
      %s83 = ssub.s32 %s23, %s30
      %p84 = scmp.eq.s32.totalorder %s83, 0
      %s86 = sadd.s32 %s85, 1
      %s87 = scalar_select %p84, %s85, %s86
      %p90 = pneg %p84
      %p91 = scmp.eq.s32.totalorder %s23, 1
      %p92 = por %p90, %p91
      %p93 = scmp.ne.s32.totalorder %s85, %s88
      %p94 = scmp.eq.s32.totalorder %s23, 0
      %p95 = por %p93, %p94
      %p96 = scmp.ne.s32.totalorder %s85, %s88
      %p97 = scmp.eq.s32.totalorder %s28, 1
      %p98 = por %p96, %p97
      %p99 = scmp.ne.s32.totalorder %s88, %s89
      %p100 = scmp.eq.s32.totalorder %s28, 0
      %p101 = por %p99, %p100
      %p102 = scmp.ne.s32.totalorder %s88, %s89
      %p103 = scmp.eq.s32.totalorder %s29, 1
      %p104 = por %p102, %p103
      %p106 = scmp.ne.s32.totalorder %s89, %s105
      %p107 = scmp.eq.s32.totalorder %s29, 0
      %p108 = por %p106, %p107
      %s109 = ssub.s32 %s23, %s30
      %p110 = scmp.eq.s32.totalorder %s109, 0
      %s112 = sadd.s32 %s111, 1
      %s113 = scalar_select %p110, %s111, %s112
      %p116 = pneg %p110
      %p117 = scmp.eq.s32.totalorder %s23, 1
      %p118 = por %p116, %p117
      %p119 = scmp.ne.s32.totalorder %s111, %s114
      %p120 = scmp.eq.s32.totalorder %s23, 0
      %p121 = por %p119, %p120
      %p122 = scmp.ne.s32.totalorder %s111, %s114
      %p123 = scmp.eq.s32.totalorder %s28, 1
      %p124 = por %p122, %p123
      %p125 = scmp.ne.s32.totalorder %s114, %s115
      %p126 = scmp.eq.s32.totalorder %s28, 0
      %p127 = por %p125, %p126
      %p128 = scmp.ne.s32.totalorder %s114, %s115
      %p129 = scmp.eq.s32.totalorder %s29, 1
      %p130 = por %p128, %p129
      %p132 = scmp.ne.s32.totalorder %s115, %s131
      %p133 = scmp.eq.s32.totalorder %s29, 0
      %p134 = por %p132, %p133
      %s136 = sadd.s32 %s135, 1
      %p139 = scmp.eq.s32.totalorder %s23, 1
      %p140 = scmp.ne.s32.totalorder %s135, %s137
      %p141 = scmp.eq.s32.totalorder %s23, 0
      %p142 = por %p140, %p141
      %p143 = scmp.ne.s32.totalorder %s135, %s137
      %p144 = scmp.eq.s32.totalorder %s28, 1
      %p145 = por %p143, %p144
      %p146 = scmp.ne.s32.totalorder %s137, %s138
      %p147 = scmp.eq.s32.totalorder %s28, 0
      %p148 = por %p146, %p147
      %p149 = scmp.ne.s32.totalorder %s137, %s138
      %p150 = scmp.eq.s32.totalorder %s29, 1
      %p151 = por %p149, %p150
      %p153 = scmp.ne.s32.totalorder %s138, %s152
      %p154 = scmp.eq.s32.totalorder %s29, 0
      %p155 = por %p153, %p154
      %s157 = sadd.s32 %s156, 1
      %p160 = scmp.eq.s32.totalorder %s23, 1
      %p161 = scmp.ne.s32.totalorder %s156, %s158
      %p162 = scmp.eq.s32.totalorder %s23, 0
      %p163 = por %p161, %p162
      %p164 = scmp.ne.s32.totalorder %s156, %s158
      %p165 = scmp.eq.s32.totalorder %s28, 1
      %p166 = por %p164, %p165
      %p167 = scmp.ne.s32.totalorder %s158, %s159
      %p168 = scmp.eq.s32.totalorder %s28, 0
      %p169 = por %p167, %p168
      %p170 = scmp.ne.s32.totalorder %s158, %s159
      %p171 = scmp.eq.s32.totalorder %s29, 1
      %p172 = por %p170, %p171
      %p174 = scmp.ne.s32.totalorder %s159, %s173
      %p175 = scmp.eq.s32.totalorder %s29, 0
      %p176 = por %p174, %p175
      %s178 = sadd.s32 %s177, 1
      %p181 = scmp.eq.s32.totalorder %s23, 1
      %p182 = scmp.ne.s32.totalorder %s177, %s179
      %p183 = scmp.eq.s32.totalorder %s23, 0
      %p184 = por %p182, %p183
      %p185 = scmp.ne.s32.totalorder %s177, %s179
      %p186 = scmp.eq.s32.totalorder %s28, 1
      %p187 = por %p185, %p186
      %p188 = scmp.ne.s32.totalorder %s179, %s180
      %p189 = scmp.eq.s32.totalorder %s28, 0
      %p190 = por %p188, %p189
      %p191 = scmp.ne.s32.totalorder %s179, %s180
      %p192 = scmp.eq.s32.totalorder %s29, 1
      %p193 = por %p191, %p192
      %p195 = scmp.ne.s32.totalorder %s180, %s194
      %p196 = scmp.eq.s32.totalorder %s29, 0
      %p197 = por %p195, %p196
      %s199 = sadd.s32 %s198, 1
      %p202 = scmp.eq.s32.totalorder %s23, 1
      %p203 = scmp.ne.s32.totalorder %s198, %s200
      %p204 = scmp.eq.s32.totalorder %s23, 0
      %p205 = por %p203, %p204
      %p206 = scmp.ne.s32.totalorder %s198, %s200
      %p207 = scmp.eq.s32.totalorder %s28, 1
      %p208 = por %p206, %p207
      %p209 = scmp.ne.s32.totalorder %s200, %s201
      %p210 = scmp.eq.s32.totalorder %s28, 0
      %p211 = por %p209, %p210
      %p212 = scmp.ne.s32.totalorder %s200, %s201
      %p213 = scmp.eq.s32.totalorder %s29, 1
      %p214 = por %p212, %p213
      %p216 = scmp.ne.s32.totalorder %s201, %s215
      %p217 = scmp.eq.s32.totalorder %s29, 0
      %p218 = por %p216, %p217
      %s219 = ssub.s32 %s23, %s30
      %p220 = scmp.eq.s32.totalorder %s219, 0
      %s222 = sadd.s32 %s221, 1
      %s223 = scalar_select %p220, %s221, %s222
      %p226 = pneg %p220
      %p227 = scmp.eq.s32.totalorder %s23, 1
      %p228 = por %p226, %p227
      %p229 = scmp.ne.s32.totalorder %s221, %s224
      %p230 = scmp.eq.s32.totalorder %s23, 0
      %p231 = por %p229, %p230
      %p232 = scmp.ne.s32.totalorder %s221, %s224
      %p233 = scmp.eq.s32.totalorder %s28, 1
      %p234 = por %p232, %p233
      %p235 = scmp.ne.s32.totalorder %s224, %s225
      %p236 = scmp.eq.s32.totalorder %s28, 0
      %p237 = por %p235, %p236
      %p238 = scmp.ne.s32.totalorder %s224, %s225
      %p239 = scmp.eq.s32.totalorder %s29, 1
      %p240 = por %p238, %p239
      %p242 = scmp.ne.s32.totalorder %s225, %s241
      %p243 = scmp.eq.s32.totalorder %s29, 0
      %p244 = por %p242, %p243
      %s245 = ssub.s32 %s23, %s30
      %p246 = scmp.eq.s32.totalorder %s245, 0
      %s248 = sadd.s32 %s247, 1
      %s249 = scalar_select %p246, %s247, %s248
      %p252 = pneg %p246
      %p253 = scmp.eq.s32.totalorder %s23, 1
      %p254 = por %p252, %p253
      %p255 = scmp.ne.s32.totalorder %s247, %s250
      %p256 = scmp.eq.s32.totalorder %s23, 0
      %p257 = por %p255, %p256
      %p258 = scmp.ne.s32.totalorder %s247, %s250
      %p259 = scmp.eq.s32.totalorder %s28, 1
      %p260 = por %p258, %p259
      %p261 = scmp.ne.s32.totalorder %s250, %s251
      %p262 = scmp.eq.s32.totalorder %s28, 0
      %p263 = por %p261, %p262
      %p264 = scmp.ne.s32.totalorder %s250, %s251
      %p265 = scmp.eq.s32.totalorder %s29, 1
      %p266 = por %p264, %p265
      %p268 = scmp.ne.s32.totalorder %s251, %s267
      %p269 = scmp.eq.s32.totalorder %s29, 0
      %p270 = por %p268, %p269
      %s271 = ssub.s32 %s23, %s30
      %p272 = scmp.eq.s32.totalorder %s271, 0
      %s274 = sadd.s32 %s273, 1
      %s275 = scalar_select %p272, %s273, %s274
      %p278 = pneg %p272
      %p279 = scmp.eq.s32.totalorder %s23, 1
      %p280 = por %p278, %p279
      %p281 = scmp.ne.s32.totalorder %s273, %s276
      %p282 = scmp.eq.s32.totalorder %s23, 0
      %p283 = por %p281, %p282
      %p284 = scmp.ne.s32.totalorder %s273, %s276
      %p285 = scmp.eq.s32.totalorder %s28, 1
      %p286 = por %p284, %p285
      %p287 = scmp.ne.s32.totalorder %s276, %s277
      %p288 = scmp.eq.s32.totalorder %s28, 0
      %p289 = por %p287, %p288
      %p290 = scmp.ne.s32.totalorder %s276, %s277
      %p291 = scmp.eq.s32.totalorder %s29, 1
      %p292 = por %p290, %p291
      %p294 = scmp.ne.s32.totalorder %s277, %s293
      %p295 = scmp.eq.s32.totalorder %s29, 0
      %p296 = por %p294, %p295
      %p297 = scmp.le.s32.totalorder 1, %s23
      %p298 = scmp.lt.s32.totalorder %s23, 3
      %p299 = pnand %p297, %p298
      %p300 = pneg %p299
      // Predicated region
      $region9: #{tpu_custom_call.1} parent=5 // pred_check
        _
      $region10: #{tpu_custom_call.1} parent=5 // pred_check_branch
        %302 = sbr.rel (%p299) target = $region12
      $region11: #{tpu_custom_call.1} parent=5 // pred_region
        %s303 = ssub.s32 %s23, 1
        // Predicated region
        $region13: #{tpu_custom_call.1} parent=11 // pred_check
          %p304 = pneg %p148
        $region14: #{tpu_custom_call.1} parent=11 // pred_check_branch
          %306 = sbr.rel (%p304) target = $region16
        $region15: #{tpu_custom_call.1} parent=11 // pred_region
          _
        $region16: #{tpu_custom_call.1} parent=11 // pred_fallthru
          _
        // Predicated region
        $region17: #{tpu_custom_call.1} parent=11 // pred_check
          %p307 = pneg %p169
        $region18: #{tpu_custom_call.1} parent=11 // pred_check_branch
          %309 = sbr.rel (%p307) target = $region20
        $region19: #{tpu_custom_call.1} parent=11 // pred_region
          _
        $region20: #{tpu_custom_call.1} parent=11 // pred_fallthru
          _
        // Predicated region
        $region21: #{tpu_custom_call.1} parent=11 // pred_check
          %p310 = pneg %p190
        $region22: #{tpu_custom_call.1} parent=11 // pred_check_branch
          %312 = sbr.rel (%p310) target = $region24
        $region23: #{tpu_custom_call.1} parent=11 // pred_region
          _
        $region24: #{tpu_custom_call.1} parent=11 // pred_fallthru
          _
        // Predicated region
        $region25: #{tpu_custom_call.1} parent=11 // pred_check
          %p313 = pneg %p211
        $region26: #{tpu_custom_call.1} parent=11 // pred_check_branch
          %315 = sbr.rel (%p313) target = $region28
        $region27: #{tpu_custom_call.1} parent=11 // pred_region
          _
        $region28: #{tpu_custom_call.1} parent=11 // pred_fallthru
          _
      $region12: #{tpu_custom_call.1} parent=5 // pred_fallthru
        _
      %p316 = scmp.lt.s32.totalorder %s23, 2
      // Predicated region
      $region29: #{tpu_custom_call.1} parent=5 // pred_check
        %p317 = pneg %p316
      $region30: #{tpu_custom_call.1} parent=5 // pred_check_branch
        %319 = sbr.rel (%p317) target = $region32
      $region31: #{tpu_custom_call.1} parent=5 // pred_region
        // Predicated region
        $region33: #{tpu_custom_call.1} parent=31 // pred_check
          %p320 = pneg %p43
        $region34: #{tpu_custom_call.1} parent=31 // pred_check_branch
          %322 = sbr.rel (%p320) target = $region36
        $region35: #{tpu_custom_call.1} parent=31 // pred_region
          %p323 = scmp.lt.s32.totalorder %s23, 1
          %s324 = scalar_select %p323, %s23, 1
          %s325 = smul.addr %s324, 54
          %s326 = smul.addr %s325, 8
          %s327 = scalar_lea.vmem %s0, %s326
        $region36: #{tpu_custom_call.1} parent=31 // pred_fallthru
          _
        // Predicated region
        $region37: #{tpu_custom_call.1} parent=31 // pred_check
          %p328 = pneg %p69
        $region38: #{tpu_custom_call.1} parent=31 // pred_check_branch
          %330 = sbr.rel (%p328) target = $region40
        $region39: #{tpu_custom_call.1} parent=31 // pred_region
          %p331 = scmp.lt.s32.totalorder %s23, 1
          %s332 = scalar_select %p331, %s23, 1
          %s333 = smul.addr %s332, 4
          %s334 = smul.addr %s333, 8
          %s335 = scalar_lea.vmem %s1, %s334
        $region40: #{tpu_custom_call.1} parent=31 // pred_fallthru
          _
        // Predicated region
        $region41: #{tpu_custom_call.1} parent=31 // pred_check
          %p336 = pneg %p95
        $region42: #{tpu_custom_call.1} parent=31 // pred_check_branch
          %338 = sbr.rel (%p336) target = $region44
        $region43: #{tpu_custom_call.1} parent=31 // pred_region
          %p339 = scmp.lt.s32.totalorder %s23, 1
          %s340 = scalar_select %p339, %s23, 1
          %s341 = smul.addr %s340, 2
          %s342 = scalar_lea.vmem %s2, %s341
        $region44: #{tpu_custom_call.1} parent=31 // pred_fallthru
          _
        // Predicated region
        $region45: #{tpu_custom_call.1} parent=31 // pred_check
          %p343 = pneg %p121
        $region46: #{tpu_custom_call.1} parent=31 // pred_check_branch
          %345 = sbr.rel (%p343) target = $region48
        $region47: #{tpu_custom_call.1} parent=31 // pred_region
          %p346 = scmp.lt.s32.totalorder %s23, 1
          %s347 = scalar_select %p346, %s23, 1
          %s348 = smul.addr %s347, 4
          %s349 = smul.addr %s348, 8
          %s350 = scalar_lea.vmem %s3, %s349
        $region48: #{tpu_custom_call.1} parent=31 // pred_fallthru
          _
      $region32: #{tpu_custom_call.1} parent=5 // pred_fallthru
        _
      %p351 = scmp.le.s32.totalorder 1, %s23
      %p352 = scmp.lt.s32.totalorder %s23, 3
      %p353 = pnand %p351, %p352
      %p354 = pneg %p353
      // Predicated region
      $region49: #{tpu_custom_call.1} parent=5 // pred_check
        _
      $region50: #{tpu_custom_call.1} parent=5 // pred_check_branch
        %356 = sbr.rel (%p353) target = $region52
      $region51: #{tpu_custom_call.1} parent=5 // pred_region
        %s357 = ssub.s32 %s23, 1
        %p358 = scmp.lt.s32.totalorder %s28, 1
        %s359 = scalar_select %p358, %s28, 1
        %s360 = smul.addr %s359, 54
        %s361 = smul.addr %s360, 8
        %s362 = scalar_lea.vmem %s0, %s361
        %p363 = pneg %p49
        %p364 = pneg %p46
        %p365 = scmp.lt.s32.totalorder %s28, 1
        %s366 = scalar_select %p365, %s28, 1
        %s367 = smul.addr %s366, 4
        %s368 = smul.addr %s367, 8
        %s369 = scalar_lea.vmem %s1, %s368
        %p370 = pneg %p75
        %p371 = pneg %p72
        %p372 = scmp.lt.s32.totalorder %s28, 1
        %s373 = scalar_select %p372, %s28, 1
        %s374 = smul.addr %s373, 2
        %s375 = scalar_lea.vmem %s2, %s374
        %p376 = pneg %p101
        %p377 = pneg %p98
        %p378 = scmp.lt.s32.totalorder %s28, 1
        %s379 = scalar_select %p378, %s28, 1
        %s380 = smul.addr %s379, 4
        %s381 = smul.addr %s380, 8
        %s382 = scalar_lea.vmem %s3, %s381
        %p383 = pneg %p127
        %p384 = pneg %p124
        %p385 = pneg %p148
        %p386 = pneg %p145
        %p387 = pneg %p169
        %p388 = pneg %p166
        %p389 = pneg %p190
        %p390 = pneg %p187
        %p391 = pneg %p211
        %p392 = pneg %p208
        %p393 = pneg %p237
        %p394 = pneg %p234
        %s395 = sand.u32 %s224, 1
        %s396 = scalar_lea.sflag [#allocation3], %s395
        %s397 = sand.u32 %s224, 1
        %s398 = smul.addr %s397, 32
        %s399 = scalar_lea.vmem [#allocation2], %s398
        %p400 = pneg %p263
        %p401 = pneg %p260
        %s402 = sand.u32 %s28, 1
        %s403 = scalar_lea.sflag [#allocation5], %s402
        %s404 = sand.u32 %s250, 1
        %s405 = smul.addr %s404, 2
        %s406 = scalar_lea.vmem [#allocation4], %s405
        %p407 = pneg %p289
        %p408 = pneg %p286
        %s409 = sand.u32 %s28, 1
        %s410 = scalar_lea.sflag [#allocation5], %s409
        %s411 = sand.u32 %s276, 1
        %s412 = smul.addr %s411, 2
        %s413 = scalar_lea.vmem [#allocation6], %s412
        %p414 = scmp.lt.s32.totalorder %s28, 1
        %s415 = scalar_select %p414, %s28, 1
        %s416 = smul.addr %s415, 54
        %s417 = smul.addr %s416, 8
        %s418 = scalar_lea.vmem %s0, %s417
        %p419 = scmp.lt.s32.totalorder %s28, 1
        %s420 = scalar_select %p419, %s28, 1
        %s421 = smul.addr %s420, 4
        %s422 = smul.addr %s421, 8
        %s423 = scalar_lea.vmem %s1, %s422
        %p424 = scmp.lt.s32.totalorder %s28, 1
        %s425 = scalar_select %p424, %s28, 1
        %s426 = smul.addr %s425, 2
        %s427 = scalar_lea.vmem %s2, %s426
        %p428 = scmp.lt.s32.totalorder %s28, 1
        %s429 = scalar_select %p428, %s28, 1
        %s430 = smul.addr %s429, 4
        %s431 = smul.addr %s430, 8
        %s432 = scalar_lea.vmem %s3, %s431
        %v434 = vld [vmem:[%s418] sm:$0xff]
        %v435 = vld [vmem:[%s418 + $0x8] sm:$0xff]
        %v436 = vld [vmem:[%s418 + $0x10] sm:$0x3]
        %v437 = vld [vmem:[%s418 + $0x18] sm:$0xff]
        %v438 = vld [vmem:[%s418 + $0x20] sm:$0xff]
        %v439 = vld [vmem:[%s418 + $0x28] sm:$0x3]
        %v440 = vld [vmem:[%s418 + $0x30] sm:$0xff]
        %v441 = vld [vmem:[%s418 + $0x38] sm:$0xff]
        %v442 = vld [vmem:[%s418 + $0x40] sm:$0x3]
        %v443 = vld [vmem:[%s418 + $0x48] sm:$0xff]
        %v444 = vld [vmem:[%s418 + $0x50] sm:$0xff]
        %v445 = vld [vmem:[%s418 + $0x58] sm:$0x3]
        %v446 = vld [vmem:[%s418 + $0x60] sm:$0xff]
        %v447 = vld [vmem:[%s418 + $0x68] sm:$0xff]
        %v448 = vld [vmem:[%s418 + $0x70] sm:$0x3]
        %v449 = vld [vmem:[%s418 + $0x78] sm:$0xff]
        %v450 = vld [vmem:[%s418 + $0x80] sm:$0xff]
        %v451 = vld [vmem:[%s418 + $0x88] sm:$0x3]
        %v452 = vld [vmem:[%s418 + $0x90] sm:$0xff]
        %v453 = vld [vmem:[%s418 + $0x98] sm:$0xff]
        %v454 = vld [vmem:[%s418 + $0xa0] sm:$0x3]
        %v455 = vld [vmem:[%s418 + $0xa8] sm:$0xff]
        %v456 = vld [vmem:[%s418 + $0xb0] sm:$0xff]
        %v457 = vld [vmem:[%s418 + $0xb8] sm:$0x3]
        %v458 = vld [vmem:[%s418 + $0xc0] sm:$0xff]
        %v459 = vld [vmem:[%s418 + $0xc8] sm:$0xff]
        %v460 = vld [vmem:[%s418 + $0xd0] sm:$0x3]
        %v461 = vld [vmem:[%s418 + $0xd8] sm:$0xff]
        %v462 = vld [vmem:[%s418 + $0xe0] sm:$0xff]
        %v463 = vld [vmem:[%s418 + $0xe8] sm:$0x3]
        %v464 = vld [vmem:[%s418 + $0xf0] sm:$0xff]
        %v465 = vld [vmem:[%s418 + $0xf8] sm:$0xff]
        %v466 = vld [vmem:[%s418 + $0x100] sm:$0x3]
        %v467 = vld [vmem:[%s418 + $0x108] sm:$0xff]
        %v468 = vld [vmem:[%s418 + $0x110] sm:$0xff]
        %v469 = vld [vmem:[%s418 + $0x118] sm:$0x3]
        %v470 = vld [vmem:[%s418 + $0x120] sm:$0xff]
        %v471 = vld [vmem:[%s418 + $0x128] sm:$0xff]
        %v472 = vld [vmem:[%s418 + $0x130] sm:$0x3]
        %v473 = vld [vmem:[%s418 + $0x138] sm:$0xff]
        %v474 = vld [vmem:[%s418 + $0x140] sm:$0xff]
        %v475 = vld [vmem:[%s418 + $0x148] sm:$0x3]
        %v476 = vld [vmem:[%s418 + $0x150] sm:$0xff]
        %v477 = vld [vmem:[%s418 + $0x158] sm:$0xff]
        %v478 = vld [vmem:[%s418 + $0x160] sm:$0x3]
        %v479 = vld [vmem:[%s418 + $0x168] sm:$0xff]
        %v480 = vld [vmem:[%s418 + $0x170] sm:$0xff]
        %v481 = vld [vmem:[%s418 + $0x178] sm:$0x3]
        %v482 = vld [vmem:[%s418 + $0x180] sm:$0xff]
        %v483 = vld [vmem:[%s418 + $0x188] sm:$0xff]
        %v484 = vld [vmem:[%s418 + $0x190] sm:$0x3]
        %v485 = vld [vmem:[%s418 + $0x198] sm:$0xff]
        %v486 = vld [vmem:[%s418 + $0x1a0] sm:$0xff]
        %v487 = vld [vmem:[%s418 + $0x1a8] sm:$0x3]
        %v488 = vld [vmem:[%s423] sm:$0xff]
        %v489 = vld [vmem:[%s423 + $0x8] sm:$0xff]
        %v490 = vld [vmem:[%s423 + $0x10] sm:$0xff]
        %v491 = vld [vmem:[%s423 + $0x18] sm:$0xff]
        %v492 = vld [vmem:[%s427] sm:$0x3]
        %v493 = vmul.f32 %v434, -0.125
        %v494 = vmul.f32 %v435, -0.125
        %v495 = vmul.f32 %v437, -0.125
        %v496 = vmul.f32 %v438, -0.125
        %v497 = vmul.f32 %v440, -0.125
        %v498 = vmul.f32 %v441, -0.125
        %v499 = vmul.f32 %v443, -0.125
        %v500 = vmul.f32 %v444, -0.125
        %v501 = vmul.f32 %v446, -0.125
        %v502 = vmul.f32 %v447, -0.125
        %v503 = vmul.f32 %v449, -0.125
        %v504 = vmul.f32 %v450, -0.125
        %v505 = vmul.f32 %v452, -0.125
        %v506 = vmul.f32 %v453, -0.125
        %v507 = vmul.f32 %v455, -0.125
        %v508 = vmul.f32 %v456, -0.125
        %v509 = vmul.f32 %v458, -0.125
        %v510 = vmul.f32 %v459, -0.125
        %v511 = vmul.f32 %v461, -0.125
        %v512 = vmul.f32 %v462, -0.125
        %v513 = vmul.f32 %v464, -0.125
        %v514 = vmul.f32 %v465, -0.125
        %v515 = vmul.f32 %v467, -0.125
        %v516 = vmul.f32 %v468, -0.125
        %v517 = vmul.f32 %v470, -0.125
        %v518 = vmul.f32 %v471, -0.125
        %v519 = vmul.f32 %v473, -0.125
        %v520 = vmul.f32 %v474, -0.125
        %v521 = vmul.f32 %v476, -0.125
        %v522 = vmul.f32 %v477, -0.125
        %v523 = vmul.f32 %v479, -0.125
        %v524 = vmul.f32 %v480, -0.125
        %v525 = vadd.f32 %v493, 0.0
        %v526 = vadd.f32 %v494, 0.0
        %v527 = vadd.f32 %v495, 0.0
        %v528 = vadd.f32 %v496, 0.0
        %v529 = vadd.f32 %v497, 0.0
        %v530 = vadd.f32 %v498, 0.0
        %v531 = vadd.f32 %v499, 0.0
        %v532 = vadd.f32 %v500, 0.0
        %v533 = vadd.f32 %v501, 0.0
        %v534 = vadd.f32 %v502, 0.0
        %v535 = vadd.f32 %v503, 0.0
        %v536 = vadd.f32 %v504, 0.0
        %v537 = vadd.f32 %v505, 0.0
        %v538 = vadd.f32 %v506, 0.0
        %v539 = vadd.f32 %v507, 0.0
        %v540 = vadd.f32 %v508, 0.0
        %v541 = vadd.f32 %v509, 0.0
        %v542 = vadd.f32 %v510, 0.0
        %v543 = vadd.f32 %v511, 0.0
        %v544 = vadd.f32 %v512, 0.0
        %v545 = vadd.f32 %v513, 0.0
        %v546 = vadd.f32 %v514, 0.0
        %v547 = vadd.f32 %v515, 0.0
        %v548 = vadd.f32 %v516, 0.0
        %v549 = vadd.f32 %v517, 0.0
        %v550 = vadd.f32 %v518, 0.0
        %v551 = vadd.f32 %v519, 0.0
        %v552 = vadd.f32 %v520, 0.0
        %v553 = vadd.f32 %v521, 0.0
        %v554 = vadd.f32 %v522, 0.0
        %v555 = vadd.f32 %v523, 0.0
        %v556 = vadd.f32 %v524, 0.0
        %v557 = vmul.f32 %v434, 0.0625
        %v558 = vmul.f32 %v435, 0.0625
        %v559 = vmul.f32 %v437, 0.0625
        %v560 = vmul.f32 %v438, 0.0625
        %v561 = vmul.f32 %v440, 0.0625
        %v562 = vmul.f32 %v441, 0.0625
        %v563 = vmul.f32 %v443, 0.0625
        %v564 = vmul.f32 %v444, 0.0625
        %v565 = vmul.f32 %v446, 0.0625
        %v566 = vmul.f32 %v447, 0.0625
        %v567 = vmul.f32 %v449, 0.0625
        %v568 = vmul.f32 %v450, 0.0625
        %v569 = vmul.f32 %v452, 0.0625
        %v570 = vmul.f32 %v453, 0.0625
        %v571 = vmul.f32 %v455, 0.0625
        %v572 = vmul.f32 %v456, 0.0625
        %v573 = vmul.f32 %v458, 0.0625
        %v574 = vmul.f32 %v459, 0.0625
        %v575 = vmul.f32 %v461, 0.0625
        %v576 = vmul.f32 %v462, 0.0625
        %v577 = vmul.f32 %v464, 0.0625
        %v578 = vmul.f32 %v465, 0.0625
        %v579 = vmul.f32 %v467, 0.0625
        %v580 = vmul.f32 %v468, 0.0625
        %v581 = vmul.f32 %v470, 0.0625
        %v582 = vmul.f32 %v471, 0.0625
        %v583 = vmul.f32 %v473, 0.0625
        %v584 = vmul.f32 %v474, 0.0625
        %v585 = vmul.f32 %v476, 0.0625
        %v586 = vmul.f32 %v477, 0.0625
        %v587 = vmul.f32 %v479, 0.0625
        %v588 = vmul.f32 %v480, 0.0625
        %v589 = vadd.f32 %v557, 0.0
        %v590 = vadd.f32 %v558, 0.0
        %v591 = vadd.f32 %v559, 0.0
        %v592 = vadd.f32 %v560, 0.0
        %v593 = vadd.f32 %v561, 0.0
        %v594 = vadd.f32 %v562, 0.0
        %v595 = vadd.f32 %v563, 0.0
        %v596 = vadd.f32 %v564, 0.0
        %v597 = vadd.f32 %v565, 0.0
        %v598 = vadd.f32 %v566, 0.0
        %v599 = vadd.f32 %v567, 0.0
        %v600 = vadd.f32 %v568, 0.0
        %v601 = vadd.f32 %v569, 0.0
        %v602 = vadd.f32 %v570, 0.0
        %v603 = vadd.f32 %v571, 0.0
        %v604 = vadd.f32 %v572, 0.0
        %v605 = vadd.f32 %v573, 0.0
        %v606 = vadd.f32 %v574, 0.0
        %v607 = vadd.f32 %v575, 0.0
        %v608 = vadd.f32 %v576, 0.0
        %v609 = vadd.f32 %v577, 0.0
        %v610 = vadd.f32 %v578, 0.0
        %v611 = vadd.f32 %v579, 0.0
        %v612 = vadd.f32 %v580, 0.0
        %v613 = vadd.f32 %v581, 0.0
        %v614 = vadd.f32 %v582, 0.0
        %v615 = vadd.f32 %v583, 0.0
        %v616 = vadd.f32 %v584, 0.0
        %v617 = vadd.f32 %v585, 0.0
        %v618 = vadd.f32 %v586, 0.0
        %v619 = vadd.f32 %v587, 0.0
        %v620 = vadd.f32 %v588, 0.0
        %v621 = vmul.f32 %v434, -0.25
        %v622 = vmul.f32 %v435, -0.25
        %v623 = vmul.f32 %v436, -0.25
        %v624 = vmul.f32 %v437, -0.25
        %v625 = vmul.f32 %v438, -0.25
        %v626 = vmul.f32 %v439, -0.25
        %v627 = vmul.f32 %v440, -0.25
        %v628 = vmul.f32 %v441, -0.25
        %v629 = vmul.f32 %v442, -0.25
        %v630 = vmul.f32 %v443, -0.25
        %v631 = vmul.f32 %v444, -0.25
        %v632 = vmul.f32 %v445, -0.25
        %v633 = vmul.f32 %v446, -0.25
        %v634 = vmul.f32 %v447, -0.25
        %v635 = vmul.f32 %v448, -0.25
        %v636 = vmul.f32 %v449, -0.25
        %v637 = vmul.f32 %v450, -0.25
        %v638 = vmul.f32 %v451, -0.25
        %v639 = vmul.f32 %v452, -0.25
        %v640 = vmul.f32 %v453, -0.25
        %v641 = vmul.f32 %v454, -0.25
        %v642 = vmul.f32 %v455, -0.25
        %v643 = vmul.f32 %v456, -0.25
        %v644 = vmul.f32 %v457, -0.25
        %v645 = vmul.f32 %v458, -0.25
        %v646 = vmul.f32 %v459, -0.25
        %v647 = vmul.f32 %v460, -0.25
        %v648 = vmul.f32 %v461, -0.25
        %v649 = vmul.f32 %v462, -0.25
        %v650 = vmul.f32 %v463, -0.25
        %v651 = vmul.f32 %v464, -0.25
        %v652 = vmul.f32 %v465, -0.25
        %v653 = vmul.f32 %v466, -0.25
        %v654 = vmul.f32 %v467, -0.25
        %v655 = vmul.f32 %v468, -0.25
        %v656 = vmul.f32 %v469, -0.25
        %v657 = vmul.f32 %v470, -0.25
        %v658 = vmul.f32 %v471, -0.25
        %v659 = vmul.f32 %v472, -0.25
        %v660 = vmul.f32 %v473, -0.25
        %v661 = vmul.f32 %v474, -0.25
        %v662 = vmul.f32 %v475, -0.25
        %v663 = vmul.f32 %v476, -0.25
        %v664 = vmul.f32 %v477, -0.25
        %v665 = vmul.f32 %v478, -0.25
        %v666 = vmul.f32 %v479, -0.25
        %v667 = vmul.f32 %v480, -0.25
        %v668 = vmul.f32 %v481, -0.25
        %vm717 = vcmask 1046528
        %v718 = vrot.slane %v621, 1
        %v719 = vrot.slane %v622, 1
        %v720 = vsel %vm717, %v718, %v719
        %v721 = vrot.slane %v623, 1
        %v722 = vsel %vm717, %v719, %v721
        %v723 = vrot.slane %v624, 1
        %v724 = vrot.slane %v625, 1
        %v725 = vsel %vm717, %v723, %v724
        %v726 = vrot.slane %v626, 1
        %v727 = vsel %vm717, %v724, %v726
        %v728 = vrot.slane %v627, 1
        %v729 = vrot.slane %v628, 1
        %v730 = vsel %vm717, %v728, %v729
        %v731 = vrot.slane %v629, 1
        %v732 = vsel %vm717, %v729, %v731
        %v733 = vrot.slane %v630, 1
        %v734 = vrot.slane %v631, 1
        %v735 = vsel %vm717, %v733, %v734
        %v736 = vrot.slane %v632, 1
        %v737 = vsel %vm717, %v734, %v736
        %v738 = vrot.slane %v633, 1
        %v739 = vrot.slane %v634, 1
        %v740 = vsel %vm717, %v738, %v739
        %v741 = vrot.slane %v635, 1
        %v742 = vsel %vm717, %v739, %v741
        %v743 = vrot.slane %v636, 1
        %v744 = vrot.slane %v637, 1
        %v745 = vsel %vm717, %v743, %v744
        %v746 = vrot.slane %v638, 1
        %v747 = vsel %vm717, %v744, %v746
        %v748 = vrot.slane %v639, 1
        %v749 = vrot.slane %v640, 1
        %v750 = vsel %vm717, %v748, %v749
        %v751 = vrot.slane %v641, 1
        %v752 = vsel %vm717, %v749, %v751
        %v753 = vrot.slane %v642, 1
        %v754 = vrot.slane %v643, 1
        %v755 = vsel %vm717, %v753, %v754
        %v756 = vrot.slane %v644, 1
        %v757 = vsel %vm717, %v754, %v756
        %v758 = vrot.slane %v645, 1
        %v759 = vrot.slane %v646, 1
        %v760 = vsel %vm717, %v758, %v759
        %v761 = vrot.slane %v647, 1
        %v762 = vsel %vm717, %v759, %v761
        %v763 = vrot.slane %v648, 1
        %v764 = vrot.slane %v649, 1
        %v765 = vsel %vm717, %v763, %v764
        %v766 = vrot.slane %v650, 1
        %v767 = vsel %vm717, %v764, %v766
        %v768 = vrot.slane %v651, 1
        %v769 = vrot.slane %v652, 1
        %v770 = vsel %vm717, %v768, %v769
        %v771 = vrot.slane %v653, 1
        %v772 = vsel %vm717, %v769, %v771
        %v773 = vrot.slane %v654, 1
        %v774 = vrot.slane %v655, 1
        %v775 = vsel %vm717, %v773, %v774
        %v776 = vrot.slane %v656, 1
        %v777 = vsel %vm717, %v774, %v776
        %v778 = vrot.slane %v657, 1
        %v779 = vrot.slane %v658, 1
        %v780 = vsel %vm717, %v778, %v779
        %v781 = vrot.slane %v659, 1
        %v782 = vsel %vm717, %v779, %v781
        %v783 = vrot.slane %v660, 1
        %v784 = vrot.slane %v661, 1
        %v785 = vsel %vm717, %v783, %v784
        %v786 = vrot.slane %v662, 1
        %v787 = vsel %vm717, %v784, %v786
        %v788 = vrot.slane %v663, 1
        %v789 = vrot.slane %v664, 1
        %v790 = vsel %vm717, %v788, %v789
        %v791 = vrot.slane %v665, 1
        %v792 = vsel %vm717, %v789, %v791
        %v793 = vrot.slane %v666, 1
        %v794 = vrot.slane %v667, 1
        %v795 = vsel %vm717, %v793, %v794
        %v796 = vrot.slane %v668, 1
        %v797 = vsel %vm717, %v794, %v796
        %v830 = vadd.f32 %v525, %v720
        %v831 = vadd.f32 %v526, %v722
        %v832 = vadd.f32 %v527, %v725
        %v833 = vadd.f32 %v528, %v727
        %v834 = vadd.f32 %v529, %v730
        %v835 = vadd.f32 %v530, %v732
        %v836 = vadd.f32 %v531, %v735
        %v837 = vadd.f32 %v532, %v737
        %v838 = vadd.f32 %v533, %v740
        %v839 = vadd.f32 %v534, %v742
        %v840 = vadd.f32 %v535, %v745
        %v841 = vadd.f32 %v536, %v747
        %v842 = vadd.f32 %v537, %v750
        %v843 = vadd.f32 %v538, %v752
        %v844 = vadd.f32 %v539, %v755
        %v845 = vadd.f32 %v540, %v757
        %v846 = vadd.f32 %v541, %v760
        %v847 = vadd.f32 %v542, %v762
        %v848 = vadd.f32 %v543, %v765
        %v849 = vadd.f32 %v544, %v767
        %v850 = vadd.f32 %v545, %v770
        %v851 = vadd.f32 %v546, %v772
        %v852 = vadd.f32 %v547, %v775
        %v853 = vadd.f32 %v548, %v777
        %v854 = vadd.f32 %v549, %v780
        %v855 = vadd.f32 %v550, %v782
        %v856 = vadd.f32 %v551, %v785
        %v857 = vadd.f32 %v552, %v787
        %v858 = vadd.f32 %v553, %v790
        %v859 = vadd.f32 %v554, %v792
        %v860 = vadd.f32 %v555, %v795
        %v861 = vadd.f32 %v556, %v797
        %v862 = vmul.f32 %v434, 0.125
        %v863 = vmul.f32 %v435, 0.125
        %v864 = vmul.f32 %v436, 0.125
        %v865 = vmul.f32 %v437, 0.125
        %v866 = vmul.f32 %v438, 0.125
        %v867 = vmul.f32 %v439, 0.125
        %v868 = vmul.f32 %v440, 0.125
        %v869 = vmul.f32 %v441, 0.125
        %v870 = vmul.f32 %v442, 0.125
        %v871 = vmul.f32 %v443, 0.125
        %v872 = vmul.f32 %v444, 0.125
        %v873 = vmul.f32 %v445, 0.125
        %v874 = vmul.f32 %v446, 0.125
        %v875 = vmul.f32 %v447, 0.125
        %v876 = vmul.f32 %v448, 0.125
        %v877 = vmul.f32 %v449, 0.125
        %v878 = vmul.f32 %v450, 0.125
        %v879 = vmul.f32 %v451, 0.125
        %v880 = vmul.f32 %v452, 0.125
        %v881 = vmul.f32 %v453, 0.125
        %v882 = vmul.f32 %v454, 0.125
        %v883 = vmul.f32 %v455, 0.125
        %v884 = vmul.f32 %v456, 0.125
        %v885 = vmul.f32 %v457, 0.125
        %v886 = vmul.f32 %v458, 0.125
        %v887 = vmul.f32 %v459, 0.125
        %v888 = vmul.f32 %v460, 0.125
        %v889 = vmul.f32 %v461, 0.125
        %v890 = vmul.f32 %v462, 0.125
        %v891 = vmul.f32 %v463, 0.125
        %v892 = vmul.f32 %v464, 0.125
        %v893 = vmul.f32 %v465, 0.125
        %v894 = vmul.f32 %v466, 0.125
        %v895 = vmul.f32 %v467, 0.125
        %v896 = vmul.f32 %v468, 0.125
        %v897 = vmul.f32 %v469, 0.125
        %v898 = vmul.f32 %v470, 0.125
        %v899 = vmul.f32 %v471, 0.125
        %v900 = vmul.f32 %v472, 0.125
        %v901 = vmul.f32 %v473, 0.125
        %v902 = vmul.f32 %v474, 0.125
        %v903 = vmul.f32 %v475, 0.125
        %v904 = vmul.f32 %v476, 0.125
        %v905 = vmul.f32 %v477, 0.125
        %v906 = vmul.f32 %v478, 0.125
        %v907 = vmul.f32 %v479, 0.125
        %v908 = vmul.f32 %v480, 0.125
        %v909 = vmul.f32 %v481, 0.125
        %v958 = vrot.slane %v862, 1
        %v959 = vrot.slane %v863, 1
        %v960 = vsel %vm717, %v958, %v959
        %v961 = vrot.slane %v864, 1
        %v962 = vsel %vm717, %v959, %v961
        %v963 = vrot.slane %v865, 1
        %v964 = vrot.slane %v866, 1
        %v965 = vsel %vm717, %v963, %v964
        %v966 = vrot.slane %v867, 1
        %v967 = vsel %vm717, %v964, %v966
        %v968 = vrot.slane %v868, 1
        %v969 = vrot.slane %v869, 1
        %v970 = vsel %vm717, %v968, %v969
        %v971 = vrot.slane %v870, 1
        %v972 = vsel %vm717, %v969, %v971
        %v973 = vrot.slane %v871, 1
        %v974 = vrot.slane %v872, 1
        %v975 = vsel %vm717, %v973, %v974
        %v976 = vrot.slane %v873, 1
        %v977 = vsel %vm717, %v974, %v976
        %v978 = vrot.slane %v874, 1
        %v979 = vrot.slane %v875, 1
        %v980 = vsel %vm717, %v978, %v979
        %v981 = vrot.slane %v876, 1
        %v982 = vsel %vm717, %v979, %v981
        %v983 = vrot.slane %v877, 1
        %v984 = vrot.slane %v878, 1
        %v985 = vsel %vm717, %v983, %v984
        %v986 = vrot.slane %v879, 1
        %v987 = vsel %vm717, %v984, %v986
        %v988 = vrot.slane %v880, 1
        %v989 = vrot.slane %v881, 1
        %v990 = vsel %vm717, %v988, %v989
        %v991 = vrot.slane %v882, 1
        %v992 = vsel %vm717, %v989, %v991
        %v993 = vrot.slane %v883, 1
        %v994 = vrot.slane %v884, 1
        %v995 = vsel %vm717, %v993, %v994
        %v996 = vrot.slane %v885, 1
        %v997 = vsel %vm717, %v994, %v996
        %v998 = vrot.slane %v886, 1
        %v999 = vrot.slane %v887, 1
        %v1000 = vsel %vm717, %v998, %v999
        %v1001 = vrot.slane %v888, 1
        %v1002 = vsel %vm717, %v999, %v1001
        %v1003 = vrot.slane %v889, 1
        %v1004 = vrot.slane %v890, 1
        %v1005 = vsel %vm717, %v1003, %v1004
        %v1006 = vrot.slane %v891, 1
        %v1007 = vsel %vm717, %v1004, %v1006
        %v1008 = vrot.slane %v892, 1
        %v1009 = vrot.slane %v893, 1
        %v1010 = vsel %vm717, %v1008, %v1009
        %v1011 = vrot.slane %v894, 1
        %v1012 = vsel %vm717, %v1009, %v1011
        %v1013 = vrot.slane %v895, 1
        %v1014 = vrot.slane %v896, 1
        %v1015 = vsel %vm717, %v1013, %v1014
        %v1016 = vrot.slane %v897, 1
        %v1017 = vsel %vm717, %v1014, %v1016
        %v1018 = vrot.slane %v898, 1
        %v1019 = vrot.slane %v899, 1
        %v1020 = vsel %vm717, %v1018, %v1019
        %v1021 = vrot.slane %v900, 1
        %v1022 = vsel %vm717, %v1019, %v1021
        %v1023 = vrot.slane %v901, 1
        %v1024 = vrot.slane %v902, 1
        %v1025 = vsel %vm717, %v1023, %v1024
        %v1026 = vrot.slane %v903, 1
        %v1027 = vsel %vm717, %v1024, %v1026
        %v1028 = vrot.slane %v904, 1
        %v1029 = vrot.slane %v905, 1
        %v1030 = vsel %vm717, %v1028, %v1029
        %v1031 = vrot.slane %v906, 1
        %v1032 = vsel %vm717, %v1029, %v1031
        %v1033 = vrot.slane %v907, 1
        %v1034 = vrot.slane %v908, 1
        %v1035 = vsel %vm717, %v1033, %v1034
        %v1036 = vrot.slane %v909, 1
        %v1037 = vsel %vm717, %v1034, %v1036
        %v1070 = vadd.f32 %v589, %v960
        %v1071 = vadd.f32 %v590, %v962
        %v1072 = vadd.f32 %v591, %v965
        %v1073 = vadd.f32 %v592, %v967
        %v1074 = vadd.f32 %v593, %v970
        %v1075 = vadd.f32 %v594, %v972
        %v1076 = vadd.f32 %v595, %v975
        %v1077 = vadd.f32 %v596, %v977
        %v1078 = vadd.f32 %v597, %v980
        %v1079 = vadd.f32 %v598, %v982
        %v1080 = vadd.f32 %v599, %v985
        %v1081 = vadd.f32 %v600, %v987
        %v1082 = vadd.f32 %v601, %v990
        %v1083 = vadd.f32 %v602, %v992
        %v1084 = vadd.f32 %v603, %v995
        %v1085 = vadd.f32 %v604, %v997
        %v1086 = vadd.f32 %v605, %v1000
        %v1087 = vadd.f32 %v606, %v1002
        %v1088 = vadd.f32 %v607, %v1005
        %v1089 = vadd.f32 %v608, %v1007
        %v1090 = vadd.f32 %v609, %v1010
        %v1091 = vadd.f32 %v610, %v1012
        %v1092 = vadd.f32 %v611, %v1015
        %v1093 = vadd.f32 %v612, %v1017
        %v1094 = vadd.f32 %v613, %v1020
        %v1095 = vadd.f32 %v614, %v1022
        %v1096 = vadd.f32 %v615, %v1025
        %v1097 = vadd.f32 %v616, %v1027
        %v1098 = vadd.f32 %v617, %v1030
        %v1099 = vadd.f32 %v618, %v1032
        %v1100 = vadd.f32 %v619, %v1035
        %v1101 = vadd.f32 %v620, %v1037
        %vm1102 = vcmask 1045504
        %v1103 = vrot.slane %v862, 2
        %v1104 = vrot.slane %v863, 2
        %v1105 = vsel %vm1102, %v1103, %v1104
        %v1106 = vrot.slane %v864, 2
        %v1107 = vsel %vm1102, %v1104, %v1106
        %v1108 = vrot.slane %v865, 2
        %v1109 = vrot.slane %v866, 2
        %v1110 = vsel %vm1102, %v1108, %v1109
        %v1111 = vrot.slane %v867, 2
        %v1112 = vsel %vm1102, %v1109, %v1111
        %v1113 = vrot.slane %v868, 2
        %v1114 = vrot.slane %v869, 2
        %v1115 = vsel %vm1102, %v1113, %v1114
        %v1116 = vrot.slane %v870, 2
        %v1117 = vsel %vm1102, %v1114, %v1116
        %v1118 = vrot.slane %v871, 2
        %v1119 = vrot.slane %v872, 2
        %v1120 = vsel %vm1102, %v1118, %v1119
        %v1121 = vrot.slane %v873, 2
        %v1122 = vsel %vm1102, %v1119, %v1121
        %v1123 = vrot.slane %v874, 2
        %v1124 = vrot.slane %v875, 2
        %v1125 = vsel %vm1102, %v1123, %v1124
        %v1126 = vrot.slane %v876, 2
        %v1127 = vsel %vm1102, %v1124, %v1126
        %v1128 = vrot.slane %v877, 2
        %v1129 = vrot.slane %v878, 2
        %v1130 = vsel %vm1102, %v1128, %v1129
        %v1131 = vrot.slane %v879, 2
        %v1132 = vsel %vm1102, %v1129, %v1131
        %v1133 = vrot.slane %v880, 2
        %v1134 = vrot.slane %v881, 2
        %v1135 = vsel %vm1102, %v1133, %v1134
        %v1136 = vrot.slane %v882, 2
        %v1137 = vsel %vm1102, %v1134, %v1136
        %v1138 = vrot.slane %v883, 2
        %v1139 = vrot.slane %v884, 2
        %v1140 = vsel %vm1102, %v1138, %v1139
        %v1141 = vrot.slane %v885, 2
        %v1142 = vsel %vm1102, %v1139, %v1141
        %v1143 = vrot.slane %v886, 2
        %v1144 = vrot.slane %v887, 2
        %v1145 = vsel %vm1102, %v1143, %v1144
        %v1146 = vrot.slane %v888, 2
        %v1147 = vsel %vm1102, %v1144, %v1146
        %v1148 = vrot.slane %v889, 2
        %v1149 = vrot.slane %v890, 2
        %v1150 = vsel %vm1102, %v1148, %v1149
        %v1151 = vrot.slane %v891, 2
        %v1152 = vsel %vm1102, %v1149, %v1151
        %v1153 = vrot.slane %v892, 2
        %v1154 = vrot.slane %v893, 2
        %v1155 = vsel %vm1102, %v1153, %v1154
        %v1156 = vrot.slane %v894, 2
        %v1157 = vsel %vm1102, %v1154, %v1156
        %v1158 = vrot.slane %v895, 2
        %v1159 = vrot.slane %v896, 2
        %v1160 = vsel %vm1102, %v1158, %v1159
        %v1161 = vrot.slane %v897, 2
        %v1162 = vsel %vm1102, %v1159, %v1161
        %v1163 = vrot.slane %v898, 2
        %v1164 = vrot.slane %v899, 2
        %v1165 = vsel %vm1102, %v1163, %v1164
        %v1166 = vrot.slane %v900, 2
        %v1167 = vsel %vm1102, %v1164, %v1166
        %v1168 = vrot.slane %v901, 2
        %v1169 = vrot.slane %v902, 2
        %v1170 = vsel %vm1102, %v1168, %v1169
        %v1171 = vrot.slane %v903, 2
        %v1172 = vsel %vm1102, %v1169, %v1171
        %v1173 = vrot.slane %v904, 2
        %v1174 = vrot.slane %v905, 2
        %v1175 = vsel %vm1102, %v1173, %v1174
        %v1176 = vrot.slane %v906, 2
        %v1177 = vsel %vm1102, %v1174, %v1176
        %v1178 = vrot.slane %v907, 2
        %v1179 = vrot.slane %v908, 2
        %v1180 = vsel %vm1102, %v1178, %v1179
        %v1181 = vrot.slane %v909, 2
        %v1182 = vsel %vm1102, %v1179, %v1181
        %v1215 = vadd.f32 %v525, %v1105
        %v1216 = vadd.f32 %v526, %v1107
        %v1217 = vadd.f32 %v527, %v1110
        %v1218 = vadd.f32 %v528, %v1112
        %v1219 = vadd.f32 %v529, %v1115
        %v1220 = vadd.f32 %v530, %v1117
        %v1221 = vadd.f32 %v531, %v1120
        %v1222 = vadd.f32 %v532, %v1122
        %v1223 = vadd.f32 %v533, %v1125
        %v1224 = vadd.f32 %v534, %v1127
        %v1225 = vadd.f32 %v535, %v1130
        %v1226 = vadd.f32 %v536, %v1132
        %v1227 = vadd.f32 %v537, %v1135
        %v1228 = vadd.f32 %v538, %v1137
        %v1229 = vadd.f32 %v539, %v1140
        %v1230 = vadd.f32 %v540, %v1142
        %v1231 = vadd.f32 %v541, %v1145
        %v1232 = vadd.f32 %v542, %v1147
        %v1233 = vadd.f32 %v543, %v1150
        %v1234 = vadd.f32 %v544, %v1152
        %v1235 = vadd.f32 %v545, %v1155
        %v1236 = vadd.f32 %v546, %v1157
        %v1237 = vadd.f32 %v547, %v1160
        %v1238 = vadd.f32 %v548, %v1162
        %v1239 = vadd.f32 %v549, %v1165
        %v1240 = vadd.f32 %v550, %v1167
        %v1241 = vadd.f32 %v551, %v1170
        %v1242 = vadd.f32 %v552, %v1172
        %v1243 = vadd.f32 %v553, %v1175
        %v1244 = vadd.f32 %v554, %v1177
        %v1245 = vadd.f32 %v555, %v1180
        %v1246 = vadd.f32 %v556, %v1182
        %v1247 = vmul.f32 %v436, -0.125
        %v1248 = vmul.f32 %v439, -0.125
        %v1249 = vmul.f32 %v442, -0.125
        %v1250 = vmul.f32 %v445, -0.125
        %v1251 = vmul.f32 %v448, -0.125
        %v1252 = vmul.f32 %v451, -0.125
        %v1253 = vmul.f32 %v454, -0.125
        %v1254 = vmul.f32 %v457, -0.125
        %v1255 = vmul.f32 %v460, -0.125
        %v1256 = vmul.f32 %v463, -0.125
        %v1257 = vmul.f32 %v466, -0.125
        %v1258 = vmul.f32 %v469, -0.125
        %v1259 = vmul.f32 %v472, -0.125
        %v1260 = vmul.f32 %v475, -0.125
        %v1261 = vmul.f32 %v478, -0.125
        %v1262 = vmul.f32 %v481, -0.125
        %v1311 = vrot.slane %v493, 2
        %v1312 = vrot.slane %v494, 2
        %v1313 = vsel %vm1102, %v1311, %v1312
        %v1314 = vrot.slane %v1247, 2
        %v1315 = vsel %vm1102, %v1312, %v1314
        %v1316 = vrot.slane %v495, 2
        %v1317 = vrot.slane %v496, 2
        %v1318 = vsel %vm1102, %v1316, %v1317
        %v1319 = vrot.slane %v1248, 2
        %v1320 = vsel %vm1102, %v1317, %v1319
        %v1321 = vrot.slane %v497, 2
        %v1322 = vrot.slane %v498, 2
        %v1323 = vsel %vm1102, %v1321, %v1322
        %v1324 = vrot.slane %v1249, 2
        %v1325 = vsel %vm1102, %v1322, %v1324
        %v1326 = vrot.slane %v499, 2
        %v1327 = vrot.slane %v500, 2
        %v1328 = vsel %vm1102, %v1326, %v1327
        %v1329 = vrot.slane %v1250, 2
        %v1330 = vsel %vm1102, %v1327, %v1329
        %v1331 = vrot.slane %v501, 2
        %v1332 = vrot.slane %v502, 2
        %v1333 = vsel %vm1102, %v1331, %v1332
        %v1334 = vrot.slane %v1251, 2
        %v1335 = vsel %vm1102, %v1332, %v1334
        %v1336 = vrot.slane %v503, 2
        %v1337 = vrot.slane %v504, 2
        %v1338 = vsel %vm1102, %v1336, %v1337
        %v1339 = vrot.slane %v1252, 2
        %v1340 = vsel %vm1102, %v1337, %v1339
        %v1341 = vrot.slane %v505, 2
        %v1342 = vrot.slane %v506, 2
        %v1343 = vsel %vm1102, %v1341, %v1342
        %v1344 = vrot.slane %v1253, 2
        %v1345 = vsel %vm1102, %v1342, %v1344
        %v1346 = vrot.slane %v507, 2
        %v1347 = vrot.slane %v508, 2
        %v1348 = vsel %vm1102, %v1346, %v1347
        %v1349 = vrot.slane %v1254, 2
        %v1350 = vsel %vm1102, %v1347, %v1349
        %v1351 = vrot.slane %v509, 2
        %v1352 = vrot.slane %v510, 2
        %v1353 = vsel %vm1102, %v1351, %v1352
        %v1354 = vrot.slane %v1255, 2
        %v1355 = vsel %vm1102, %v1352, %v1354
        %v1356 = vrot.slane %v511, 2
        %v1357 = vrot.slane %v512, 2
        %v1358 = vsel %vm1102, %v1356, %v1357
        %v1359 = vrot.slane %v1256, 2
        %v1360 = vsel %vm1102, %v1357, %v1359
        %v1361 = vrot.slane %v513, 2
        %v1362 = vrot.slane %v514, 2
        %v1363 = vsel %vm1102, %v1361, %v1362
        %v1364 = vrot.slane %v1257, 2
        %v1365 = vsel %vm1102, %v1362, %v1364
        %v1366 = vrot.slane %v515, 2
        %v1367 = vrot.slane %v516, 2
        %v1368 = vsel %vm1102, %v1366, %v1367
        %v1369 = vrot.slane %v1258, 2
        %v1370 = vsel %vm1102, %v1367, %v1369
        %v1371 = vrot.slane %v517, 2
        %v1372 = vrot.slane %v518, 2
        %v1373 = vsel %vm1102, %v1371, %v1372
        %v1374 = vrot.slane %v1259, 2
        %v1375 = vsel %vm1102, %v1372, %v1374
        %v1376 = vrot.slane %v519, 2
        %v1377 = vrot.slane %v520, 2
        %v1378 = vsel %vm1102, %v1376, %v1377
        %v1379 = vrot.slane %v1260, 2
        %v1380 = vsel %vm1102, %v1377, %v1379
        %v1381 = vrot.slane %v521, 2
        %v1382 = vrot.slane %v522, 2
        %v1383 = vsel %vm1102, %v1381, %v1382
        %v1384 = vrot.slane %v1261, 2
        %v1385 = vsel %vm1102, %v1382, %v1384
        %v1386 = vrot.slane %v523, 2
        %v1387 = vrot.slane %v524, 2
        %v1388 = vsel %vm1102, %v1386, %v1387
        %v1389 = vrot.slane %v1262, 2
        %v1390 = vsel %vm1102, %v1387, %v1389
        %v1423 = vadd.f32 %v830, %v1313
        %v1424 = vadd.f32 %v831, %v1315
        %v1425 = vadd.f32 %v832, %v1318
        %v1426 = vadd.f32 %v833, %v1320
        %v1427 = vadd.f32 %v834, %v1323
        %v1428 = vadd.f32 %v835, %v1325
        %v1429 = vadd.f32 %v836, %v1328
        %v1430 = vadd.f32 %v837, %v1330
        %v1431 = vadd.f32 %v838, %v1333
        %v1432 = vadd.f32 %v839, %v1335
        %v1433 = vadd.f32 %v840, %v1338
        %v1434 = vadd.f32 %v841, %v1340
        %v1435 = vadd.f32 %v842, %v1343
        %v1436 = vadd.f32 %v843, %v1345
        %v1437 = vadd.f32 %v844, %v1348
        %v1438 = vadd.f32 %v845, %v1350
        %v1439 = vadd.f32 %v846, %v1353
        %v1440 = vadd.f32 %v847, %v1355
        %v1441 = vadd.f32 %v848, %v1358
        %v1442 = vadd.f32 %v849, %v1360
        %v1443 = vadd.f32 %v850, %v1363
        %v1444 = vadd.f32 %v851, %v1365
        %v1445 = vadd.f32 %v852, %v1368
        %v1446 = vadd.f32 %v853, %v1370
        %v1447 = vadd.f32 %v854, %v1373
        %v1448 = vadd.f32 %v855, %v1375
        %v1449 = vadd.f32 %v856, %v1378
        %v1450 = vadd.f32 %v857, %v1380
        %v1451 = vadd.f32 %v858, %v1383
        %v1452 = vadd.f32 %v859, %v1385
        %v1453 = vadd.f32 %v860, %v1388
        %v1454 = vadd.f32 %v861, %v1390
        %v1455 = vmul.f32 %v436, 0.0625
        %v1456 = vmul.f32 %v439, 0.0625
        %v1457 = vmul.f32 %v442, 0.0625
        %v1458 = vmul.f32 %v445, 0.0625
        %v1459 = vmul.f32 %v448, 0.0625
        %v1460 = vmul.f32 %v451, 0.0625
        %v1461 = vmul.f32 %v454, 0.0625
        %v1462 = vmul.f32 %v457, 0.0625
        %v1463 = vmul.f32 %v460, 0.0625
        %v1464 = vmul.f32 %v463, 0.0625
        %v1465 = vmul.f32 %v466, 0.0625
        %v1466 = vmul.f32 %v469, 0.0625
        %v1467 = vmul.f32 %v472, 0.0625
        %v1468 = vmul.f32 %v475, 0.0625
        %v1469 = vmul.f32 %v478, 0.0625
        %v1470 = vmul.f32 %v481, 0.0625
        %v1519 = vrot.slane %v557, 2
        %v1520 = vrot.slane %v558, 2
        %v1521 = vsel %vm1102, %v1519, %v1520
        %v1522 = vrot.slane %v1455, 2
        %v1523 = vsel %vm1102, %v1520, %v1522
        %v1524 = vrot.slane %v559, 2
        %v1525 = vrot.slane %v560, 2
        %v1526 = vsel %vm1102, %v1524, %v1525
        %v1527 = vrot.slane %v1456, 2
        %v1528 = vsel %vm1102, %v1525, %v1527
        %v1529 = vrot.slane %v561, 2
        %v1530 = vrot.slane %v562, 2
        %v1531 = vsel %vm1102, %v1529, %v1530
        %v1532 = vrot.slane %v1457, 2
        %v1533 = vsel %vm1102, %v1530, %v1532
        %v1534 = vrot.slane %v563, 2
        %v1535 = vrot.slane %v564, 2
        %v1536 = vsel %vm1102, %v1534, %v1535
        %v1537 = vrot.slane %v1458, 2
        %v1538 = vsel %vm1102, %v1535, %v1537
        %v1539 = vrot.slane %v565, 2
        %v1540 = vrot.slane %v566, 2
        %v1541 = vsel %vm1102, %v1539, %v1540
        %v1542 = vrot.slane %v1459, 2
        %v1543 = vsel %vm1102, %v1540, %v1542
        %v1544 = vrot.slane %v567, 2
        %v1545 = vrot.slane %v568, 2
        %v1546 = vsel %vm1102, %v1544, %v1545
        %v1547 = vrot.slane %v1460, 2
        %v1548 = vsel %vm1102, %v1545, %v1547
        %v1549 = vrot.slane %v569, 2
        %v1550 = vrot.slane %v570, 2
        %v1551 = vsel %vm1102, %v1549, %v1550
        %v1552 = vrot.slane %v1461, 2
        %v1553 = vsel %vm1102, %v1550, %v1552
        %v1554 = vrot.slane %v571, 2
        %v1555 = vrot.slane %v572, 2
        %v1556 = vsel %vm1102, %v1554, %v1555
        %v1557 = vrot.slane %v1462, 2
        %v1558 = vsel %vm1102, %v1555, %v1557
        %v1559 = vrot.slane %v573, 2
        %v1560 = vrot.slane %v574, 2
        %v1561 = vsel %vm1102, %v1559, %v1560
        %v1562 = vrot.slane %v1463, 2
        %v1563 = vsel %vm1102, %v1560, %v1562
        %v1564 = vrot.slane %v575, 2
        %v1565 = vrot.slane %v576, 2
        %v1566 = vsel %vm1102, %v1564, %v1565
        %v1567 = vrot.slane %v1464, 2
        %v1568 = vsel %vm1102, %v1565, %v1567
        %v1569 = vrot.slane %v577, 2
        %v1570 = vrot.slane %v578, 2
        %v1571 = vsel %vm1102, %v1569, %v1570
        %v1572 = vrot.slane %v1465, 2
        %v1573 = vsel %vm1102, %v1570, %v1572
        %v1574 = vrot.slane %v579, 2
        %v1575 = vrot.slane %v580, 2
        %v1576 = vsel %vm1102, %v1574, %v1575
        %v1577 = vrot.slane %v1466, 2
        %v1578 = vsel %vm1102, %v1575, %v1577
        %v1579 = vrot.slane %v581, 2
        %v1580 = vrot.slane %v582, 2
        %v1581 = vsel %vm1102, %v1579, %v1580
        %v1582 = vrot.slane %v1467, 2
        %v1583 = vsel %vm1102, %v1580, %v1582
        %v1584 = vrot.slane %v583, 2
        %v1585 = vrot.slane %v584, 2
        %v1586 = vsel %vm1102, %v1584, %v1585
        %v1587 = vrot.slane %v1468, 2
        %v1588 = vsel %vm1102, %v1585, %v1587
        %v1589 = vrot.slane %v585, 2
        %v1590 = vrot.slane %v586, 2
        %v1591 = vsel %vm1102, %v1589, %v1590
        %v1592 = vrot.slane %v1469, 2
        %v1593 = vsel %vm1102, %v1590, %v1592
        %v1594 = vrot.slane %v587, 2
        %v1595 = vrot.slane %v588, 2
        %v1596 = vsel %vm1102, %v1594, %v1595
        %v1597 = vrot.slane %v1470, 2
        %v1598 = vsel %vm1102, %v1595, %v1597
        %v1631 = vadd.f32 %v1070, %v1521
        %v1632 = vadd.f32 %v1071, %v1523
        %v1633 = vadd.f32 %v1072, %v1526
        %v1634 = vadd.f32 %v1073, %v1528
        %v1635 = vadd.f32 %v1074, %v1531
        %v1636 = vadd.f32 %v1075, %v1533
        %v1637 = vadd.f32 %v1076, %v1536
        %v1638 = vadd.f32 %v1077, %v1538
        %v1639 = vadd.f32 %v1078, %v1541
        %v1640 = vadd.f32 %v1079, %v1543
        %v1641 = vadd.f32 %v1080, %v1546
        %v1642 = vadd.f32 %v1081, %v1548
        %v1643 = vadd.f32 %v1082, %v1551
        %v1644 = vadd.f32 %v1083, %v1553
        %v1645 = vadd.f32 %v1084, %v1556
        %v1646 = vadd.f32 %v1085, %v1558
        %v1647 = vadd.f32 %v1086, %v1561
        %v1648 = vadd.f32 %v1087, %v1563
        %v1649 = vadd.f32 %v1088, %v1566
        %v1650 = vadd.f32 %v1089, %v1568
        %v1651 = vadd.f32 %v1090, %v1571
        %v1652 = vadd.f32 %v1091, %v1573
        %v1653 = vadd.f32 %v1092, %v1576
        %v1654 = vadd.f32 %v1093, %v1578
        %v1655 = vadd.f32 %v1094, %v1581
        %v1656 = vadd.f32 %v1095, %v1583
        %v1657 = vadd.f32 %v1096, %v1586
        %v1658 = vadd.f32 %v1097, %v1588
        %v1659 = vadd.f32 %v1098, %v1591
        %v1660 = vadd.f32 %v1099, %v1593
        %v1661 = vadd.f32 %v1100, %v1596
        %v1662 = vadd.f32 %v1101, %v1598
        %v1663 = vmul.f32 %v482, -0.25
        %v1664 = vmul.f32 %v483, -0.25
        %v1665 = vadd.f32 %v1215, %v624
        %v1666 = vadd.f32 %v1216, %v625
        %v1667 = vadd.f32 %v1217, %v627
        %v1668 = vadd.f32 %v1218, %v628
        %v1669 = vadd.f32 %v1219, %v630
        %v1670 = vadd.f32 %v1220, %v631
        %v1671 = vadd.f32 %v1221, %v633
        %v1672 = vadd.f32 %v1222, %v634
        %v1673 = vadd.f32 %v1223, %v636
        %v1674 = vadd.f32 %v1224, %v637
        %v1675 = vadd.f32 %v1225, %v639
        %v1676 = vadd.f32 %v1226, %v640
        %v1677 = vadd.f32 %v1227, %v642
        %v1678 = vadd.f32 %v1228, %v643
        %v1679 = vadd.f32 %v1229, %v645
        %v1680 = vadd.f32 %v1230, %v646
        %v1681 = vadd.f32 %v1231, %v648
        %v1682 = vadd.f32 %v1232, %v649
        %v1683 = vadd.f32 %v1233, %v651
        %v1684 = vadd.f32 %v1234, %v652
        %v1685 = vadd.f32 %v1235, %v654
        %v1686 = vadd.f32 %v1236, %v655
        %v1687 = vadd.f32 %v1237, %v657
        %v1688 = vadd.f32 %v1238, %v658
        %v1689 = vadd.f32 %v1239, %v660
        %v1690 = vadd.f32 %v1240, %v661
        %v1691 = vadd.f32 %v1241, %v663
        %v1692 = vadd.f32 %v1242, %v664
        %v1693 = vadd.f32 %v1243, %v666
        %v1694 = vadd.f32 %v1244, %v667
        %v1695 = vadd.f32 %v1245, %v1663
        %v1696 = vadd.f32 %v1246, %v1664
        %v1697 = vmul.f32 %v482, 0.125
        %v1698 = vmul.f32 %v483, 0.125
        %v1699 = vadd.f32 %v1631, %v865
        %v1700 = vadd.f32 %v1632, %v866
        %v1701 = vadd.f32 %v1633, %v868
        %v1702 = vadd.f32 %v1634, %v869
        %v1703 = vadd.f32 %v1635, %v871
        %v1704 = vadd.f32 %v1636, %v872
        %v1705 = vadd.f32 %v1637, %v874
        %v1706 = vadd.f32 %v1638, %v875
        %v1707 = vadd.f32 %v1639, %v877
        %v1708 = vadd.f32 %v1640, %v878
        %v1709 = vadd.f32 %v1641, %v880
        %v1710 = vadd.f32 %v1642, %v881
        %v1711 = vadd.f32 %v1643, %v883
        %v1712 = vadd.f32 %v1644, %v884
        %v1713 = vadd.f32 %v1645, %v886
        %v1714 = vadd.f32 %v1646, %v887
        %v1715 = vadd.f32 %v1647, %v889
        %v1716 = vadd.f32 %v1648, %v890
        %v1717 = vadd.f32 %v1649, %v892
        %v1718 = vadd.f32 %v1650, %v893
        %v1719 = vadd.f32 %v1651, %v895
        %v1720 = vadd.f32 %v1652, %v896
        %v1721 = vadd.f32 %v1653, %v898
        %v1722 = vadd.f32 %v1654, %v899
        %v1723 = vadd.f32 %v1655, %v901
        %v1724 = vadd.f32 %v1656, %v902
        %v1725 = vadd.f32 %v1657, %v904
        %v1726 = vadd.f32 %v1658, %v905
        %v1727 = vadd.f32 %v1659, %v907
        %v1728 = vadd.f32 %v1660, %v908
        %v1729 = vadd.f32 %v1661, %v1697
        %v1730 = vadd.f32 %v1662, %v1698
        %v1731 = vmul.f32 %v437, -0.75
        %v1732 = vmul.f32 %v438, -0.75
        %v1733 = vmul.f32 %v439, -0.75
        %v1734 = vmul.f32 %v440, -0.75
        %v1735 = vmul.f32 %v441, -0.75
        %v1736 = vmul.f32 %v442, -0.75
        %v1737 = vmul.f32 %v443, -0.75
        %v1738 = vmul.f32 %v444, -0.75
        %v1739 = vmul.f32 %v445, -0.75
        %v1740 = vmul.f32 %v446, -0.75
        %v1741 = vmul.f32 %v447, -0.75
        %v1742 = vmul.f32 %v448, -0.75
        %v1743 = vmul.f32 %v449, -0.75
        %v1744 = vmul.f32 %v450, -0.75
        %v1745 = vmul.f32 %v451, -0.75
        %v1746 = vmul.f32 %v452, -0.75
        %v1747 = vmul.f32 %v453, -0.75
        %v1748 = vmul.f32 %v454, -0.75
        %v1749 = vmul.f32 %v455, -0.75
        %v1750 = vmul.f32 %v456, -0.75
        %v1751 = vmul.f32 %v457, -0.75
        %v1752 = vmul.f32 %v458, -0.75
        %v1753 = vmul.f32 %v459, -0.75
        %v1754 = vmul.f32 %v460, -0.75
        %v1755 = vmul.f32 %v461, -0.75
        %v1756 = vmul.f32 %v462, -0.75
        %v1757 = vmul.f32 %v463, -0.75
        %v1758 = vmul.f32 %v464, -0.75
        %v1759 = vmul.f32 %v465, -0.75
        %v1760 = vmul.f32 %v466, -0.75
        %v1761 = vmul.f32 %v467, -0.75
        %v1762 = vmul.f32 %v468, -0.75
        %v1763 = vmul.f32 %v469, -0.75
        %v1764 = vmul.f32 %v470, -0.75
        %v1765 = vmul.f32 %v471, -0.75
        %v1766 = vmul.f32 %v472, -0.75
        %v1767 = vmul.f32 %v473, -0.75
        %v1768 = vmul.f32 %v474, -0.75
        %v1769 = vmul.f32 %v475, -0.75
        %v1770 = vmul.f32 %v476, -0.75
        %v1771 = vmul.f32 %v477, -0.75
        %v1772 = vmul.f32 %v478, -0.75
        %v1773 = vmul.f32 %v479, -0.75
        %v1774 = vmul.f32 %v480, -0.75
        %v1775 = vmul.f32 %v481, -0.75
        %v1776 = vmul.f32 %v482, -0.75
        %v1777 = vmul.f32 %v483, -0.75
        %v1778 = vmul.f32 %v484, -0.75
        %v1827 = vrot.slane %v1731, 1
        %v1828 = vrot.slane %v1732, 1
        %v1829 = vsel %vm717, %v1827, %v1828
        %v1830 = vrot.slane %v1733, 1
        %v1831 = vsel %vm717, %v1828, %v1830
        %v1832 = vrot.slane %v1734, 1
        %v1833 = vrot.slane %v1735, 1
        %v1834 = vsel %vm717, %v1832, %v1833
        %v1835 = vrot.slane %v1736, 1
        %v1836 = vsel %vm717, %v1833, %v1835
        %v1837 = vrot.slane %v1737, 1
        %v1838 = vrot.slane %v1738, 1
        %v1839 = vsel %vm717, %v1837, %v1838
        %v1840 = vrot.slane %v1739, 1
        %v1841 = vsel %vm717, %v1838, %v1840
        %v1842 = vrot.slane %v1740, 1
        %v1843 = vrot.slane %v1741, 1
        %v1844 = vsel %vm717, %v1842, %v1843
        %v1845 = vrot.slane %v1742, 1
        %v1846 = vsel %vm717, %v1843, %v1845
        %v1847 = vrot.slane %v1743, 1
        %v1848 = vrot.slane %v1744, 1
        %v1849 = vsel %vm717, %v1847, %v1848
        %v1850 = vrot.slane %v1745, 1
        %v1851 = vsel %vm717, %v1848, %v1850
        %v1852 = vrot.slane %v1746, 1
        %v1853 = vrot.slane %v1747, 1
        %v1854 = vsel %vm717, %v1852, %v1853
        %v1855 = vrot.slane %v1748, 1
        %v1856 = vsel %vm717, %v1853, %v1855
        %v1857 = vrot.slane %v1749, 1
        %v1858 = vrot.slane %v1750, 1
        %v1859 = vsel %vm717, %v1857, %v1858
        %v1860 = vrot.slane %v1751, 1
        %v1861 = vsel %vm717, %v1858, %v1860
        %v1862 = vrot.slane %v1752, 1
        %v1863 = vrot.slane %v1753, 1
        %v1864 = vsel %vm717, %v1862, %v1863
        %v1865 = vrot.slane %v1754, 1
        %v1866 = vsel %vm717, %v1863, %v1865
        %v1867 = vrot.slane %v1755, 1
        %v1868 = vrot.slane %v1756, 1
        %v1869 = vsel %vm717, %v1867, %v1868
        %v1870 = vrot.slane %v1757, 1
        %v1871 = vsel %vm717, %v1868, %v1870
        %v1872 = vrot.slane %v1758, 1
        %v1873 = vrot.slane %v1759, 1
        %v1874 = vsel %vm717, %v1872, %v1873
        %v1875 = vrot.slane %v1760, 1
        %v1876 = vsel %vm717, %v1873, %v1875
        %v1877 = vrot.slane %v1761, 1
        %v1878 = vrot.slane %v1762, 1
        %v1879 = vsel %vm717, %v1877, %v1878
        %v1880 = vrot.slane %v1763, 1
        %v1881 = vsel %vm717, %v1878, %v1880
        %v1882 = vrot.slane %v1764, 1
        %v1883 = vrot.slane %v1765, 1
        %v1884 = vsel %vm717, %v1882, %v1883
        %v1885 = vrot.slane %v1766, 1
        %v1886 = vsel %vm717, %v1883, %v1885
        %v1887 = vrot.slane %v1767, 1
        %v1888 = vrot.slane %v1768, 1
        %v1889 = vsel %vm717, %v1887, %v1888
        %v1890 = vrot.slane %v1769, 1
        %v1891 = vsel %vm717, %v1888, %v1890
        %v1892 = vrot.slane %v1770, 1
        %v1893 = vrot.slane %v1771, 1
        %v1894 = vsel %vm717, %v1892, %v1893
        %v1895 = vrot.slane %v1772, 1
        %v1896 = vsel %vm717, %v1893, %v1895
        %v1897 = vrot.slane %v1773, 1
        %v1898 = vrot.slane %v1774, 1
        %v1899 = vsel %vm717, %v1897, %v1898
        %v1900 = vrot.slane %v1775, 1
        %v1901 = vsel %vm717, %v1898, %v1900
        %v1902 = vrot.slane %v1776, 1
        %v1903 = vrot.slane %v1777, 1
        %v1904 = vsel %vm717, %v1902, %v1903
        %v1905 = vrot.slane %v1778, 1
        %v1906 = vsel %vm717, %v1903, %v1905
        %v1939 = vadd.f32 %v1699, %v1829
        %v1940 = vadd.f32 %v1700, %v1831
        %v1941 = vadd.f32 %v1701, %v1834
        %v1942 = vadd.f32 %v1702, %v1836
        %v1943 = vadd.f32 %v1703, %v1839
        %v1944 = vadd.f32 %v1704, %v1841
        %v1945 = vadd.f32 %v1705, %v1844
        %v1946 = vadd.f32 %v1706, %v1846
        %v1947 = vadd.f32 %v1707, %v1849
        %v1948 = vadd.f32 %v1708, %v1851
        %v1949 = vadd.f32 %v1709, %v1854
        %v1950 = vadd.f32 %v1710, %v1856
        %v1951 = vadd.f32 %v1711, %v1859
        %v1952 = vadd.f32 %v1712, %v1861
        %v1953 = vadd.f32 %v1713, %v1864
        %v1954 = vadd.f32 %v1714, %v1866
        %v1955 = vadd.f32 %v1715, %v1869
        %v1956 = vadd.f32 %v1716, %v1871
        %v1957 = vadd.f32 %v1717, %v1874
        %v1958 = vadd.f32 %v1718, %v1876
        %v1959 = vadd.f32 %v1719, %v1879
        %v1960 = vadd.f32 %v1720, %v1881
        %v1961 = vadd.f32 %v1721, %v1884
        %v1962 = vadd.f32 %v1722, %v1886
        %v1963 = vadd.f32 %v1723, %v1889
        %v1964 = vadd.f32 %v1724, %v1891
        %v1965 = vadd.f32 %v1725, %v1894
        %v1966 = vadd.f32 %v1726, %v1896
        %v1967 = vadd.f32 %v1727, %v1899
        %v1968 = vadd.f32 %v1728, %v1901
        %v1969 = vadd.f32 %v1729, %v1904
        %v1970 = vadd.f32 %v1730, %v1906
        %v1971 = vmul.f32 %v437, 0.25
        %v1972 = vmul.f32 %v438, 0.25
        %v1973 = vmul.f32 %v439, 0.25
        %v1974 = vmul.f32 %v440, 0.25
        %v1975 = vmul.f32 %v441, 0.25
        %v1976 = vmul.f32 %v442, 0.25
        %v1977 = vmul.f32 %v443, 0.25
        %v1978 = vmul.f32 %v444, 0.25
        %v1979 = vmul.f32 %v445, 0.25
        %v1980 = vmul.f32 %v446, 0.25
        %v1981 = vmul.f32 %v447, 0.25
        %v1982 = vmul.f32 %v448, 0.25
        %v1983 = vmul.f32 %v449, 0.25
        %v1984 = vmul.f32 %v450, 0.25
        %v1985 = vmul.f32 %v451, 0.25
        %v1986 = vmul.f32 %v452, 0.25
        %v1987 = vmul.f32 %v453, 0.25
        %v1988 = vmul.f32 %v454, 0.25
        %v1989 = vmul.f32 %v455, 0.25
        %v1990 = vmul.f32 %v456, 0.25
        %v1991 = vmul.f32 %v457, 0.25
        %v1992 = vmul.f32 %v458, 0.25
        %v1993 = vmul.f32 %v459, 0.25
        %v1994 = vmul.f32 %v460, 0.25
        %v1995 = vmul.f32 %v461, 0.25
        %v1996 = vmul.f32 %v462, 0.25
        %v1997 = vmul.f32 %v463, 0.25
        %v1998 = vmul.f32 %v464, 0.25
        %v1999 = vmul.f32 %v465, 0.25
        %v2000 = vmul.f32 %v466, 0.25
        %v2001 = vmul.f32 %v467, 0.25
        %v2002 = vmul.f32 %v468, 0.25
        %v2003 = vmul.f32 %v469, 0.25
        %v2004 = vmul.f32 %v470, 0.25
        %v2005 = vmul.f32 %v471, 0.25
        %v2006 = vmul.f32 %v472, 0.25
        %v2007 = vmul.f32 %v473, 0.25
        %v2008 = vmul.f32 %v474, 0.25
        %v2009 = vmul.f32 %v475, 0.25
        %v2010 = vmul.f32 %v476, 0.25
        %v2011 = vmul.f32 %v477, 0.25
        %v2012 = vmul.f32 %v478, 0.25
        %v2013 = vmul.f32 %v479, 0.25
        %v2014 = vmul.f32 %v480, 0.25
        %v2015 = vmul.f32 %v481, 0.25
        %v2016 = vmul.f32 %v482, 0.25
        %v2017 = vmul.f32 %v483, 0.25
        %v2018 = vmul.f32 %v484, 0.25
        %v2067 = vrot.slane %v1971, 2
        %v2068 = vrot.slane %v1972, 2
        %v2069 = vsel %vm1102, %v2067, %v2068
        %v2070 = vrot.slane %v1973, 2
        %v2071 = vsel %vm1102, %v2068, %v2070
        %v2072 = vrot.slane %v1974, 2
        %v2073 = vrot.slane %v1975, 2
        %v2074 = vsel %vm1102, %v2072, %v2073
        %v2075 = vrot.slane %v1976, 2
        %v2076 = vsel %vm1102, %v2073, %v2075
        %v2077 = vrot.slane %v1977, 2
        %v2078 = vrot.slane %v1978, 2
        %v2079 = vsel %vm1102, %v2077, %v2078
        %v2080 = vrot.slane %v1979, 2
        %v2081 = vsel %vm1102, %v2078, %v2080
        %v2082 = vrot.slane %v1980, 2
        %v2083 = vrot.slane %v1981, 2
        %v2084 = vsel %vm1102, %v2082, %v2083
        %v2085 = vrot.slane %v1982, 2
        %v2086 = vsel %vm1102, %v2083, %v2085
        %v2087 = vrot.slane %v1983, 2
        %v2088 = vrot.slane %v1984, 2
        %v2089 = vsel %vm1102, %v2087, %v2088
        %v2090 = vrot.slane %v1985, 2
        %v2091 = vsel %vm1102, %v2088, %v2090
        %v2092 = vrot.slane %v1986, 2
        %v2093 = vrot.slane %v1987, 2
        %v2094 = vsel %vm1102, %v2092, %v2093
        %v2095 = vrot.slane %v1988, 2
        %v2096 = vsel %vm1102, %v2093, %v2095
        %v2097 = vrot.slane %v1989, 2
        %v2098 = vrot.slane %v1990, 2
        %v2099 = vsel %vm1102, %v2097, %v2098
        %v2100 = vrot.slane %v1991, 2
        %v2101 = vsel %vm1102, %v2098, %v2100
        %v2102 = vrot.slane %v1992, 2
        %v2103 = vrot.slane %v1993, 2
        %v2104 = vsel %vm1102, %v2102, %v2103
        %v2105 = vrot.slane %v1994, 2
        %v2106 = vsel %vm1102, %v2103, %v2105
        %v2107 = vrot.slane %v1995, 2
        %v2108 = vrot.slane %v1996, 2
        %v2109 = vsel %vm1102, %v2107, %v2108
        %v2110 = vrot.slane %v1997, 2
        %v2111 = vsel %vm1102, %v2108, %v2110
        %v2112 = vrot.slane %v1998, 2
        %v2113 = vrot.slane %v1999, 2
        %v2114 = vsel %vm1102, %v2112, %v2113
        %v2115 = vrot.slane %v2000, 2
        %v2116 = vsel %vm1102, %v2113, %v2115
        %v2117 = vrot.slane %v2001, 2
        %v2118 = vrot.slane %v2002, 2
        %v2119 = vsel %vm1102, %v2117, %v2118
        %v2120 = vrot.slane %v2003, 2
        %v2121 = vsel %vm1102, %v2118, %v2120
        %v2122 = vrot.slane %v2004, 2
        %v2123 = vrot.slane %v2005, 2
        %v2124 = vsel %vm1102, %v2122, %v2123
        %v2125 = vrot.slane %v2006, 2
        %v2126 = vsel %vm1102, %v2123, %v2125
        %v2127 = vrot.slane %v2007, 2
        %v2128 = vrot.slane %v2008, 2
        %v2129 = vsel %vm1102, %v2127, %v2128
        %v2130 = vrot.slane %v2009, 2
        %v2131 = vsel %vm1102, %v2128, %v2130
        %v2132 = vrot.slane %v2010, 2
        %v2133 = vrot.slane %v2011, 2
        %v2134 = vsel %vm1102, %v2132, %v2133
        %v2135 = vrot.slane %v2012, 2
        %v2136 = vsel %vm1102, %v2133, %v2135
        %v2137 = vrot.slane %v2013, 2
        %v2138 = vrot.slane %v2014, 2
        %v2139 = vsel %vm1102, %v2137, %v2138
        %v2140 = vrot.slane %v2015, 2
        %v2141 = vsel %vm1102, %v2138, %v2140
        %v2142 = vrot.slane %v2016, 2
        %v2143 = vrot.slane %v2017, 2
        %v2144 = vsel %vm1102, %v2142, %v2143
        %v2145 = vrot.slane %v2018, 2
        %v2146 = vsel %vm1102, %v2143, %v2145
        %v2179 = vadd.f32 %v1665, %v2069
        %v2180 = vadd.f32 %v1666, %v2071
        %v2181 = vadd.f32 %v1667, %v2074
        %v2182 = vadd.f32 %v1668, %v2076
        %v2183 = vadd.f32 %v1669, %v2079
        %v2184 = vadd.f32 %v1670, %v2081
        %v2185 = vadd.f32 %v1671, %v2084
        %v2186 = vadd.f32 %v1672, %v2086
        %v2187 = vadd.f32 %v1673, %v2089
        %v2188 = vadd.f32 %v1674, %v2091
        %v2189 = vadd.f32 %v1675, %v2094
        %v2190 = vadd.f32 %v1676, %v2096
        %v2191 = vadd.f32 %v1677, %v2099
        %v2192 = vadd.f32 %v1678, %v2101
        %v2193 = vadd.f32 %v1679, %v2104
        %v2194 = vadd.f32 %v1680, %v2106
        %v2195 = vadd.f32 %v1681, %v2109
        %v2196 = vadd.f32 %v1682, %v2111
        %v2197 = vadd.f32 %v1683, %v2114
        %v2198 = vadd.f32 %v1684, %v2116
        %v2199 = vadd.f32 %v1685, %v2119
        %v2200 = vadd.f32 %v1686, %v2121
        %v2201 = vadd.f32 %v1687, %v2124
        %v2202 = vadd.f32 %v1688, %v2126
        %v2203 = vadd.f32 %v1689, %v2129
        %v2204 = vadd.f32 %v1690, %v2131
        %v2205 = vadd.f32 %v1691, %v2134
        %v2206 = vadd.f32 %v1692, %v2136
        %v2207 = vadd.f32 %v1693, %v2139
        %v2208 = vadd.f32 %v1694, %v2141
        %v2209 = vadd.f32 %v1695, %v2144
        %v2210 = vadd.f32 %v1696, %v2146
        %v2211 = vmul.f32 %v484, 0.125
        %v2215 = vrot.slane %v1697, 2
        %v2216 = vrot.slane %v1698, 2
        %v2217 = vsel %vm1102, %v2215, %v2216
        %v2218 = vrot.slane %v2211, 2
        %v2219 = vsel %vm1102, %v2216, %v2218
        %v2222 = vadd.f32 %v1939, %v1110
        %v2223 = vadd.f32 %v1940, %v1112
        %v2224 = vadd.f32 %v1941, %v1115
        %v2225 = vadd.f32 %v1942, %v1117
        %v2226 = vadd.f32 %v1943, %v1120
        %v2227 = vadd.f32 %v1944, %v1122
        %v2228 = vadd.f32 %v1945, %v1125
        %v2229 = vadd.f32 %v1946, %v1127
        %v2230 = vadd.f32 %v1947, %v1130
        %v2231 = vadd.f32 %v1948, %v1132
        %v2232 = vadd.f32 %v1949, %v1135
        %v2233 = vadd.f32 %v1950, %v1137
        %v2234 = vadd.f32 %v1951, %v1140
        %v2235 = vadd.f32 %v1952, %v1142
        %v2236 = vadd.f32 %v1953, %v1145
        %v2237 = vadd.f32 %v1954, %v1147
        %v2238 = vadd.f32 %v1955, %v1150
        %v2239 = vadd.f32 %v1956, %v1152
        %v2240 = vadd.f32 %v1957, %v1155
        %v2241 = vadd.f32 %v1958, %v1157
        %v2242 = vadd.f32 %v1959, %v1160
        %v2243 = vadd.f32 %v1960, %v1162
        %v2244 = vadd.f32 %v1961, %v1165
        %v2245 = vadd.f32 %v1962, %v1167
        %v2246 = vadd.f32 %v1963, %v1170
        %v2247 = vadd.f32 %v1964, %v1172
        %v2248 = vadd.f32 %v1965, %v1175
        %v2249 = vadd.f32 %v1966, %v1177
        %v2250 = vadd.f32 %v1967, %v1180
        %v2251 = vadd.f32 %v1968, %v1182
        %v2252 = vadd.f32 %v1969, %v2217
        %v2253 = vadd.f32 %v1970, %v2219
        %v2254 = vmul.f32 %v482, -0.125
        %v2255 = vmul.f32 %v483, -0.125
        %v2256 = vmul.f32 %v485, -0.125
        %v2257 = vmul.f32 %v486, -0.125
        %v2258 = vadd.f32 %v2179, %v497
        %v2259 = vadd.f32 %v2180, %v498
        %v2260 = vadd.f32 %v2181, %v499
        %v2261 = vadd.f32 %v2182, %v500
        %v2262 = vadd.f32 %v2183, %v501
        %v2263 = vadd.f32 %v2184, %v502
        %v2264 = vadd.f32 %v2185, %v503
        %v2265 = vadd.f32 %v2186, %v504
        %v2266 = vadd.f32 %v2187, %v505
        %v2267 = vadd.f32 %v2188, %v506
        %v2268 = vadd.f32 %v2189, %v507
        %v2269 = vadd.f32 %v2190, %v508
        %v2270 = vadd.f32 %v2191, %v509
        %v2271 = vadd.f32 %v2192, %v510
        %v2272 = vadd.f32 %v2193, %v511
        %v2273 = vadd.f32 %v2194, %v512
        %v2274 = vadd.f32 %v2195, %v513
        %v2275 = vadd.f32 %v2196, %v514
        %v2276 = vadd.f32 %v2197, %v515
        %v2277 = vadd.f32 %v2198, %v516
        %v2278 = vadd.f32 %v2199, %v517
        %v2279 = vadd.f32 %v2200, %v518
        %v2280 = vadd.f32 %v2201, %v519
        %v2281 = vadd.f32 %v2202, %v520
        %v2282 = vadd.f32 %v2203, %v521
        %v2283 = vadd.f32 %v2204, %v522
        %v2284 = vadd.f32 %v2205, %v523
        %v2285 = vadd.f32 %v2206, %v524
        %v2286 = vadd.f32 %v2207, %v2254
        %v2287 = vadd.f32 %v2208, %v2255
        %v2288 = vadd.f32 %v2209, %v2256
        %v2289 = vadd.f32 %v2210, %v2257
        %v2290 = vmul.f32 %v485, 0.125
        %v2291 = vmul.f32 %v486, 0.125
        %v2292 = vadd.f32 %v1423, %v868
        %v2293 = vadd.f32 %v1424, %v869
        %v2294 = vadd.f32 %v1425, %v871
        %v2295 = vadd.f32 %v1426, %v872
        %v2296 = vadd.f32 %v1427, %v874
        %v2297 = vadd.f32 %v1428, %v875
        %v2298 = vadd.f32 %v1429, %v877
        %v2299 = vadd.f32 %v1430, %v878
        %v2300 = vadd.f32 %v1431, %v880
        %v2301 = vadd.f32 %v1432, %v881
        %v2302 = vadd.f32 %v1433, %v883
        %v2303 = vadd.f32 %v1434, %v884
        %v2304 = vadd.f32 %v1435, %v886
        %v2305 = vadd.f32 %v1436, %v887
        %v2306 = vadd.f32 %v1437, %v889
        %v2307 = vadd.f32 %v1438, %v890
        %v2308 = vadd.f32 %v1439, %v892
        %v2309 = vadd.f32 %v1440, %v893
        %v2310 = vadd.f32 %v1441, %v895
        %v2311 = vadd.f32 %v1442, %v896
        %v2312 = vadd.f32 %v1443, %v898
        %v2313 = vadd.f32 %v1444, %v899
        %v2314 = vadd.f32 %v1445, %v901
        %v2315 = vadd.f32 %v1446, %v902
        %v2316 = vadd.f32 %v1447, %v904
        %v2317 = vadd.f32 %v1448, %v905
        %v2318 = vadd.f32 %v1449, %v907
        %v2319 = vadd.f32 %v1450, %v908
        %v2320 = vadd.f32 %v1451, %v1697
        %v2321 = vadd.f32 %v1452, %v1698
        %v2322 = vadd.f32 %v1453, %v2290
        %v2323 = vadd.f32 %v1454, %v2291
        %v2324 = vmul.f32 %v482, 0.0625
        %v2325 = vmul.f32 %v483, 0.0625
        %v2326 = vmul.f32 %v485, 0.0625
        %v2327 = vmul.f32 %v486, 0.0625
        %v2328 = vadd.f32 %v2222, %v561
        %v2329 = vadd.f32 %v2223, %v562
        %v2330 = vadd.f32 %v2224, %v563
        %v2331 = vadd.f32 %v2225, %v564
        %v2332 = vadd.f32 %v2226, %v565
        %v2333 = vadd.f32 %v2227, %v566
        %v2334 = vadd.f32 %v2228, %v567
        %v2335 = vadd.f32 %v2229, %v568
        %v2336 = vadd.f32 %v2230, %v569
        %v2337 = vadd.f32 %v2231, %v570
        %v2338 = vadd.f32 %v2232, %v571
        %v2339 = vadd.f32 %v2233, %v572
        %v2340 = vadd.f32 %v2234, %v573
        %v2341 = vadd.f32 %v2235, %v574
        %v2342 = vadd.f32 %v2236, %v575
        %v2343 = vadd.f32 %v2237, %v576
        %v2344 = vadd.f32 %v2238, %v577
        %v2345 = vadd.f32 %v2239, %v578
        %v2346 = vadd.f32 %v2240, %v579
        %v2347 = vadd.f32 %v2241, %v580
        %v2348 = vadd.f32 %v2242, %v581
        %v2349 = vadd.f32 %v2243, %v582
        %v2350 = vadd.f32 %v2244, %v583
        %v2351 = vadd.f32 %v2245, %v584
        %v2352 = vadd.f32 %v2246, %v585
        %v2353 = vadd.f32 %v2247, %v586
        %v2354 = vadd.f32 %v2248, %v587
        %v2355 = vadd.f32 %v2249, %v588
        %v2356 = vadd.f32 %v2250, %v2324
        %v2357 = vadd.f32 %v2251, %v2325
        %v2358 = vadd.f32 %v2252, %v2326
        %v2359 = vadd.f32 %v2253, %v2327
        %v2360 = vmul.f32 %v485, 0.25
        %v2361 = vmul.f32 %v486, 0.25
        %v2362 = vmul.f32 %v487, 0.25
        %v2366 = vrot.slane %v1974, 1
        %v2367 = vrot.slane %v1975, 1
        %v2368 = vsel %vm717, %v2366, %v2367
        %v2369 = vrot.slane %v1976, 1
        %v2370 = vsel %vm717, %v2367, %v2369
        %v2371 = vrot.slane %v1977, 1
        %v2372 = vrot.slane %v1978, 1
        %v2373 = vsel %vm717, %v2371, %v2372
        %v2374 = vrot.slane %v1979, 1
        %v2375 = vsel %vm717, %v2372, %v2374
        %v2376 = vrot.slane %v1980, 1
        %v2377 = vrot.slane %v1981, 1
        %v2378 = vsel %vm717, %v2376, %v2377
        %v2379 = vrot.slane %v1982, 1
        %v2380 = vsel %vm717, %v2377, %v2379
        %v2381 = vrot.slane %v1983, 1
        %v2382 = vrot.slane %v1984, 1
        %v2383 = vsel %vm717, %v2381, %v2382
        %v2384 = vrot.slane %v1985, 1
        %v2385 = vsel %vm717, %v2382, %v2384
        %v2386 = vrot.slane %v1986, 1
        %v2387 = vrot.slane %v1987, 1
        %v2388 = vsel %vm717, %v2386, %v2387
        %v2389 = vrot.slane %v1988, 1
        %v2390 = vsel %vm717, %v2387, %v2389
        %v2391 = vrot.slane %v1989, 1
        %v2392 = vrot.slane %v1990, 1
        %v2393 = vsel %vm717, %v2391, %v2392
        %v2394 = vrot.slane %v1991, 1
        %v2395 = vsel %vm717, %v2392, %v2394
        %v2396 = vrot.slane %v1992, 1
        %v2397 = vrot.slane %v1993, 1
        %v2398 = vsel %vm717, %v2396, %v2397
        %v2399 = vrot.slane %v1994, 1
        %v2400 = vsel %vm717, %v2397, %v2399
        %v2401 = vrot.slane %v1995, 1
        %v2402 = vrot.slane %v1996, 1
        %v2403 = vsel %vm717, %v2401, %v2402
        %v2404 = vrot.slane %v1997, 1
        %v2405 = vsel %vm717, %v2402, %v2404
        %v2406 = vrot.slane %v1998, 1
        %v2407 = vrot.slane %v1999, 1
        %v2408 = vsel %vm717, %v2406, %v2407
        %v2409 = vrot.slane %v2000, 1
        %v2410 = vsel %vm717, %v2407, %v2409
        %v2411 = vrot.slane %v2001, 1
        %v2412 = vrot.slane %v2002, 1
        %v2413 = vsel %vm717, %v2411, %v2412
        %v2414 = vrot.slane %v2003, 1
        %v2415 = vsel %vm717, %v2412, %v2414
        %v2416 = vrot.slane %v2004, 1
        %v2417 = vrot.slane %v2005, 1
        %v2418 = vsel %vm717, %v2416, %v2417
        %v2419 = vrot.slane %v2006, 1
        %v2420 = vsel %vm717, %v2417, %v2419
        %v2421 = vrot.slane %v2007, 1
        %v2422 = vrot.slane %v2008, 1
        %v2423 = vsel %vm717, %v2421, %v2422
        %v2424 = vrot.slane %v2009, 1
        %v2425 = vsel %vm717, %v2422, %v2424
        %v2426 = vrot.slane %v2010, 1
        %v2427 = vrot.slane %v2011, 1
        %v2428 = vsel %vm717, %v2426, %v2427
        %v2429 = vrot.slane %v2012, 1
        %v2430 = vsel %vm717, %v2427, %v2429
        %v2431 = vrot.slane %v2013, 1
        %v2432 = vrot.slane %v2014, 1
        %v2433 = vsel %vm717, %v2431, %v2432
        %v2434 = vrot.slane %v2015, 1
        %v2435 = vsel %vm717, %v2432, %v2434
        %v2436 = vrot.slane %v2016, 1
        %v2437 = vrot.slane %v2017, 1
        %v2438 = vsel %vm717, %v2436, %v2437
        %v2439 = vrot.slane %v2018, 1
        %v2440 = vsel %vm717, %v2437, %v2439
        %v2441 = vrot.slane %v2360, 1
        %v2442 = vrot.slane %v2361, 1
        %v2443 = vsel %vm717, %v2441, %v2442
        %v2444 = vrot.slane %v2362, 1
        %v2445 = vsel %vm717, %v2442, %v2444
        %v2478 = vadd.f32 %v2292, %v2368
        %v2479 = vadd.f32 %v2293, %v2370
        %v2480 = vadd.f32 %v2294, %v2373
        %v2481 = vadd.f32 %v2295, %v2375
        %v2482 = vadd.f32 %v2296, %v2378
        %v2483 = vadd.f32 %v2297, %v2380
        %v2484 = vadd.f32 %v2298, %v2383
        %v2485 = vadd.f32 %v2299, %v2385
        %v2486 = vadd.f32 %v2300, %v2388
        %v2487 = vadd.f32 %v2301, %v2390
        %v2488 = vadd.f32 %v2302, %v2393
        %v2489 = vadd.f32 %v2303, %v2395
        %v2490 = vadd.f32 %v2304, %v2398
        %v2491 = vadd.f32 %v2305, %v2400
        %v2492 = vadd.f32 %v2306, %v2403
        %v2493 = vadd.f32 %v2307, %v2405
        %v2494 = vadd.f32 %v2308, %v2408
        %v2495 = vadd.f32 %v2309, %v2410
        %v2496 = vadd.f32 %v2310, %v2413
        %v2497 = vadd.f32 %v2311, %v2415
        %v2498 = vadd.f32 %v2312, %v2418
        %v2499 = vadd.f32 %v2313, %v2420
        %v2500 = vadd.f32 %v2314, %v2423
        %v2501 = vadd.f32 %v2315, %v2425
        %v2502 = vadd.f32 %v2316, %v2428
        %v2503 = vadd.f32 %v2317, %v2430
        %v2504 = vadd.f32 %v2318, %v2433
        %v2505 = vadd.f32 %v2319, %v2435
        %v2506 = vadd.f32 %v2320, %v2438
        %v2507 = vadd.f32 %v2321, %v2440
        %v2508 = vadd.f32 %v2322, %v2443
        %v2509 = vadd.f32 %v2323, %v2445
        %v2510 = vmul.f32 %v487, 0.125
        %v2514 = vrot.slane %v1697, 1
        %v2515 = vrot.slane %v1698, 1
        %v2516 = vsel %vm717, %v2514, %v2515
        %v2517 = vrot.slane %v2211, 1
        %v2518 = vsel %vm717, %v2515, %v2517
        %v2519 = vrot.slane %v2290, 1
        %v2520 = vrot.slane %v2291, 1
        %v2521 = vsel %vm717, %v2519, %v2520
        %v2522 = vrot.slane %v2510, 1
        %v2523 = vsel %vm717, %v2520, %v2522
        %v2528 = vadd.f32 %v2328, %v970
        %v2529 = vadd.f32 %v2329, %v972
        %v2530 = vadd.f32 %v2330, %v975
        %v2531 = vadd.f32 %v2331, %v977
        %v2532 = vadd.f32 %v2332, %v980
        %v2533 = vadd.f32 %v2333, %v982
        %v2534 = vadd.f32 %v2334, %v985
        %v2535 = vadd.f32 %v2335, %v987
        %v2536 = vadd.f32 %v2336, %v990
        %v2537 = vadd.f32 %v2337, %v992
        %v2538 = vadd.f32 %v2338, %v995
        %v2539 = vadd.f32 %v2339, %v997
        %v2540 = vadd.f32 %v2340, %v1000
        %v2541 = vadd.f32 %v2341, %v1002
        %v2542 = vadd.f32 %v2342, %v1005
        %v2543 = vadd.f32 %v2343, %v1007
        %v2544 = vadd.f32 %v2344, %v1010
        %v2545 = vadd.f32 %v2345, %v1012
        %v2546 = vadd.f32 %v2346, %v1015
        %v2547 = vadd.f32 %v2347, %v1017
        %v2548 = vadd.f32 %v2348, %v1020
        %v2549 = vadd.f32 %v2349, %v1022
        %v2550 = vadd.f32 %v2350, %v1025
        %v2551 = vadd.f32 %v2351, %v1027
        %v2552 = vadd.f32 %v2352, %v1030
        %v2553 = vadd.f32 %v2353, %v1032
        %v2554 = vadd.f32 %v2354, %v1035
        %v2555 = vadd.f32 %v2355, %v1037
        %v2556 = vadd.f32 %v2356, %v2516
        %v2557 = vadd.f32 %v2357, %v2518
        %v2558 = vadd.f32 %v2358, %v2521
        %v2559 = vadd.f32 %v2359, %v2523
        %v2560 = vrot.slane %v2290, 2
        %v2561 = vrot.slane %v2291, 2
        %v2562 = vsel %vm1102, %v2560, %v2561
        %v2563 = vrot.slane %v2510, 2
        %v2564 = vsel %vm1102, %v2561, %v2563
        %v2567 = vadd.f32 %v2258, %v1115
        %v2568 = vadd.f32 %v2259, %v1117
        %v2569 = vadd.f32 %v2260, %v1120
        %v2570 = vadd.f32 %v2261, %v1122
        %v2571 = vadd.f32 %v2262, %v1125
        %v2572 = vadd.f32 %v2263, %v1127
        %v2573 = vadd.f32 %v2264, %v1130
        %v2574 = vadd.f32 %v2265, %v1132
        %v2575 = vadd.f32 %v2266, %v1135
        %v2576 = vadd.f32 %v2267, %v1137
        %v2577 = vadd.f32 %v2268, %v1140
        %v2578 = vadd.f32 %v2269, %v1142
        %v2579 = vadd.f32 %v2270, %v1145
        %v2580 = vadd.f32 %v2271, %v1147
        %v2581 = vadd.f32 %v2272, %v1150
        %v2582 = vadd.f32 %v2273, %v1152
        %v2583 = vadd.f32 %v2274, %v1155
        %v2584 = vadd.f32 %v2275, %v1157
        %v2585 = vadd.f32 %v2276, %v1160
        %v2586 = vadd.f32 %v2277, %v1162
        %v2587 = vadd.f32 %v2278, %v1165
        %v2588 = vadd.f32 %v2279, %v1167
        %v2589 = vadd.f32 %v2280, %v1170
        %v2590 = vadd.f32 %v2281, %v1172
        %v2591 = vadd.f32 %v2282, %v1175
        %v2592 = vadd.f32 %v2283, %v1177
        %v2593 = vadd.f32 %v2284, %v1180
        %v2594 = vadd.f32 %v2285, %v1182
        %v2595 = vadd.f32 %v2286, %v2217
        %v2596 = vadd.f32 %v2287, %v2219
        %v2597 = vadd.f32 %v2288, %v2562
        %v2598 = vadd.f32 %v2289, %v2564
        %v2599 = vadd.f32 %v2478, %v1115
        %v2600 = vadd.f32 %v2479, %v1117
        %v2601 = vadd.f32 %v2480, %v1120
        %v2602 = vadd.f32 %v2481, %v1122
        %v2603 = vadd.f32 %v2482, %v1125
        %v2604 = vadd.f32 %v2483, %v1127
        %v2605 = vadd.f32 %v2484, %v1130
        %v2606 = vadd.f32 %v2485, %v1132
        %v2607 = vadd.f32 %v2486, %v1135
        %v2608 = vadd.f32 %v2487, %v1137
        %v2609 = vadd.f32 %v2488, %v1140
        %v2610 = vadd.f32 %v2489, %v1142
        %v2611 = vadd.f32 %v2490, %v1145
        %v2612 = vadd.f32 %v2491, %v1147
        %v2613 = vadd.f32 %v2492, %v1150
        %v2614 = vadd.f32 %v2493, %v1152
        %v2615 = vadd.f32 %v2494, %v1155
        %v2616 = vadd.f32 %v2495, %v1157
        %v2617 = vadd.f32 %v2496, %v1160
        %v2618 = vadd.f32 %v2497, %v1162
        %v2619 = vadd.f32 %v2498, %v1165
        %v2620 = vadd.f32 %v2499, %v1167
        %v2621 = vadd.f32 %v2500, %v1170
        %v2622 = vadd.f32 %v2501, %v1172
        %v2623 = vadd.f32 %v2502, %v1175
        %v2624 = vadd.f32 %v2503, %v1177
        %v2625 = vadd.f32 %v2504, %v1180
        %v2626 = vadd.f32 %v2505, %v1182
        %v2627 = vadd.f32 %v2506, %v2217
        %v2628 = vadd.f32 %v2507, %v2219
        %v2629 = vadd.f32 %v2508, %v2562
        %v2630 = vadd.f32 %v2509, %v2564
        %v2631 = vmul.f32 %v484, 0.0625
        %v2632 = vmul.f32 %v487, 0.0625
        %v2639 = vrot.slane %v2324, 2
        %v2640 = vrot.slane %v2325, 2
        %v2641 = vsel %vm1102, %v2639, %v2640
        %v2642 = vrot.slane %v2631, 2
        %v2643 = vsel %vm1102, %v2640, %v2642
        %v2644 = vrot.slane %v2326, 2
        %v2645 = vrot.slane %v2327, 2
        %v2646 = vsel %vm1102, %v2644, %v2645
        %v2647 = vrot.slane %v2632, 2
        %v2648 = vsel %vm1102, %v2645, %v2647
        %v2653 = vadd.f32 %v2528, %v1531
        %v2654 = vadd.f32 %v2529, %v1533
        %v2655 = vadd.f32 %v2530, %v1536
        %v2656 = vadd.f32 %v2531, %v1538
        %v2657 = vadd.f32 %v2532, %v1541
        %v2658 = vadd.f32 %v2533, %v1543
        %v2659 = vadd.f32 %v2534, %v1546
        %v2660 = vadd.f32 %v2535, %v1548
        %v2661 = vadd.f32 %v2536, %v1551
        %v2662 = vadd.f32 %v2537, %v1553
        %v2663 = vadd.f32 %v2538, %v1556
        %v2664 = vadd.f32 %v2539, %v1558
        %v2665 = vadd.f32 %v2540, %v1561
        %v2666 = vadd.f32 %v2541, %v1563
        %v2667 = vadd.f32 %v2542, %v1566
        %v2668 = vadd.f32 %v2543, %v1568
        %v2669 = vadd.f32 %v2544, %v1571
        %v2670 = vadd.f32 %v2545, %v1573
        %v2671 = vadd.f32 %v2546, %v1576
        %v2672 = vadd.f32 %v2547, %v1578
        %v2673 = vadd.f32 %v2548, %v1581
        %v2674 = vadd.f32 %v2549, %v1583
        %v2675 = vadd.f32 %v2550, %v1586
        %v2676 = vadd.f32 %v2551, %v1588
        %v2677 = vadd.f32 %v2552, %v1591
        %v2678 = vadd.f32 %v2553, %v1593
        %v2679 = vadd.f32 %v2554, %v1596
        %v2680 = vadd.f32 %v2555, %v1598
        %v2681 = vadd.f32 %v2556, %v2641
        %v2682 = vadd.f32 %v2557, %v2643
        %v2683 = vadd.f32 %v2558, %v2646
        %v2684 = vadd.f32 %v2559, %v2648
        %vm2717 = vcmask 1040384
        %v2718 = vrot.slane %v2567, 7
        %v2719 = vrot.slane %v2568, 7
        %v2720 = vsel %vm2717, %v2718, %v2719
        %v2721 = vrot.slane %v2569, 7
        %v2722 = vrot.slane %v2570, 7
        %v2723 = vsel %vm2717, %v2721, %v2722
        %v2724 = vrot.slane %v2571, 7
        %v2725 = vrot.slane %v2572, 7
        %v2726 = vsel %vm2717, %v2724, %v2725
        %v2727 = vrot.slane %v2573, 7
        %v2728 = vrot.slane %v2574, 7
        %v2729 = vsel %vm2717, %v2727, %v2728
        %v2730 = vrot.slane %v2575, 7
        %v2731 = vrot.slane %v2576, 7
        %v2732 = vsel %vm2717, %v2730, %v2731
        %v2733 = vrot.slane %v2577, 7
        %v2734 = vrot.slane %v2578, 7
        %v2735 = vsel %vm2717, %v2733, %v2734
        %v2736 = vrot.slane %v2579, 7
        %v2737 = vrot.slane %v2580, 7
        %v2738 = vsel %vm2717, %v2736, %v2737
        %v2739 = vrot.slane %v2581, 7
        %v2740 = vrot.slane %v2582, 7
        %v2741 = vsel %vm2717, %v2739, %v2740
        %v2742 = vrot.slane %v2583, 7
        %v2743 = vrot.slane %v2584, 7
        %v2744 = vsel %vm2717, %v2742, %v2743
        %v2745 = vrot.slane %v2585, 7
        %v2746 = vrot.slane %v2586, 7
        %v2747 = vsel %vm2717, %v2745, %v2746
        %v2748 = vrot.slane %v2587, 7
        %v2749 = vrot.slane %v2588, 7
        %v2750 = vsel %vm2717, %v2748, %v2749
        %v2751 = vrot.slane %v2589, 7
        %v2752 = vrot.slane %v2590, 7
        %v2753 = vsel %vm2717, %v2751, %v2752
        %v2754 = vrot.slane %v2591, 7
        %v2755 = vrot.slane %v2592, 7
        %v2756 = vsel %vm2717, %v2754, %v2755
        %v2757 = vrot.slane %v2593, 7
        %v2758 = vrot.slane %v2594, 7
        %v2759 = vsel %vm2717, %v2757, %v2758
        %v2760 = vrot.slane %v2595, 7
        %v2761 = vrot.slane %v2596, 7
        %v2762 = vsel %vm2717, %v2760, %v2761
        %v2763 = vrot.slane %v2597, 7
        %v2764 = vrot.slane %v2598, 7
        %v2765 = vsel %vm2717, %v2763, %v2764
        %2766 = vrot.lane.b32.xlu0 %v2718, 16
        %v2767 = vpop.permute.xlu0 %2766
        %2768 = vrot.lane.b32.xlu0 %v2720, 16
        %v2769 = vpop.permute.xlu0 %2768
        %2770 = vrot.lane.b32.xlu0 %v2719, 16
        %v2771 = vpop.permute.xlu0 %2770
        %2772 = vrot.lane.b32.xlu0 %v2721, 16
        %v2773 = vpop.permute.xlu0 %2772
        %2774 = vrot.lane.b32.xlu0 %v2723, 16
        %v2775 = vpop.permute.xlu0 %2774
        %2776 = vrot.lane.b32.xlu0 %v2722, 16
        %v2777 = vpop.permute.xlu0 %2776
        %2778 = vrot.lane.b32.xlu0 %v2724, 16
        %v2779 = vpop.permute.xlu0 %2778
        %2780 = vrot.lane.b32.xlu0 %v2726, 16
        %v2781 = vpop.permute.xlu0 %2780
        %2782 = vrot.lane.b32.xlu0 %v2725, 16
        %v2783 = vpop.permute.xlu0 %2782
        %2784 = vrot.lane.b32.xlu0 %v2727, 16
        %v2785 = vpop.permute.xlu0 %2784
        %2786 = vrot.lane.b32.xlu0 %v2729, 16
        %v2787 = vpop.permute.xlu0 %2786
        %2788 = vrot.lane.b32.xlu0 %v2728, 16
        %v2789 = vpop.permute.xlu0 %2788
        %2790 = vrot.lane.b32.xlu0 %v2730, 16
        %v2791 = vpop.permute.xlu0 %2790
        %2792 = vrot.lane.b32.xlu0 %v2732, 16
        %v2793 = vpop.permute.xlu0 %2792
        %2794 = vrot.lane.b32.xlu0 %v2731, 16
        %v2795 = vpop.permute.xlu0 %2794
        %2796 = vrot.lane.b32.xlu0 %v2733, 16
        %v2797 = vpop.permute.xlu0 %2796
        %2798 = vrot.lane.b32.xlu0 %v2735, 16
        %v2799 = vpop.permute.xlu0 %2798
        %2800 = vrot.lane.b32.xlu0 %v2734, 16
        %v2801 = vpop.permute.xlu0 %2800
        %2802 = vrot.lane.b32.xlu0 %v2736, 16
        %v2803 = vpop.permute.xlu0 %2802
        %2804 = vrot.lane.b32.xlu0 %v2738, 16
        %v2805 = vpop.permute.xlu0 %2804
        %2806 = vrot.lane.b32.xlu0 %v2737, 16
        %v2807 = vpop.permute.xlu0 %2806
        %2808 = vrot.lane.b32.xlu0 %v2739, 16
        %v2809 = vpop.permute.xlu0 %2808
        %2810 = vrot.lane.b32.xlu0 %v2741, 16
        %v2811 = vpop.permute.xlu0 %2810
        %2812 = vrot.lane.b32.xlu0 %v2740, 16
        %v2813 = vpop.permute.xlu0 %2812
        %2814 = vrot.lane.b32.xlu0 %v2742, 16
        %v2815 = vpop.permute.xlu0 %2814
        %2816 = vrot.lane.b32.xlu0 %v2744, 16
        %v2817 = vpop.permute.xlu0 %2816
        %2818 = vrot.lane.b32.xlu0 %v2743, 16
        %v2819 = vpop.permute.xlu0 %2818
        %2820 = vrot.lane.b32.xlu0 %v2745, 16
        %v2821 = vpop.permute.xlu0 %2820
        %2822 = vrot.lane.b32.xlu0 %v2747, 16
        %v2823 = vpop.permute.xlu0 %2822
        %2824 = vrot.lane.b32.xlu0 %v2746, 16
        %v2825 = vpop.permute.xlu0 %2824
        %2826 = vrot.lane.b32.xlu0 %v2748, 16
        %v2827 = vpop.permute.xlu0 %2826
        %2828 = vrot.lane.b32.xlu0 %v2750, 16
        %v2829 = vpop.permute.xlu0 %2828
        %2830 = vrot.lane.b32.xlu0 %v2749, 16
        %v2831 = vpop.permute.xlu0 %2830
        %2832 = vrot.lane.b32.xlu0 %v2751, 16
        %v2833 = vpop.permute.xlu0 %2832
        %2834 = vrot.lane.b32.xlu0 %v2753, 16
        %v2835 = vpop.permute.xlu0 %2834
        %2836 = vrot.lane.b32.xlu0 %v2752, 16
        %v2837 = vpop.permute.xlu0 %2836
        %2838 = vrot.lane.b32.xlu0 %v2754, 16
        %v2839 = vpop.permute.xlu0 %2838
        %2840 = vrot.lane.b32.xlu0 %v2756, 16
        %v2841 = vpop.permute.xlu0 %2840
        %2842 = vrot.lane.b32.xlu0 %v2755, 16
        %v2843 = vpop.permute.xlu0 %2842
        %2844 = vrot.lane.b32.xlu0 %v2757, 16
        %v2845 = vpop.permute.xlu0 %2844
        %2846 = vrot.lane.b32.xlu0 %v2759, 16
        %v2847 = vpop.permute.xlu0 %2846
        %2848 = vrot.lane.b32.xlu0 %v2758, 16
        %v2849 = vpop.permute.xlu0 %2848
        %2850 = vrot.lane.b32.xlu0 %v2760, 16
        %v2851 = vpop.permute.xlu0 %2850
        %2852 = vrot.lane.b32.xlu0 %v2762, 16
        %v2853 = vpop.permute.xlu0 %2852
        %2854 = vrot.lane.b32.xlu0 %v2761, 16
        %v2855 = vpop.permute.xlu0 %2854
        %2856 = vrot.lane.b32.xlu0 %v2763, 16
        %v2857 = vpop.permute.xlu0 %2856
        %2858 = vrot.lane.b32.xlu0 %v2765, 16
        %v2859 = vpop.permute.xlu0 %2858
        %2860 = vrot.lane.b32.xlu0 %v2764, 16
        %v2861 = vpop.permute.xlu0 %2860
        %v2942 = vrot.slane %v2599, 7
        %v2943 = vrot.slane %v2600, 7
        %v2944 = vsel %vm2717, %v2942, %v2943
        %v2945 = vrot.slane %v2601, 7
        %v2946 = vrot.slane %v2602, 7
        %v2947 = vsel %vm2717, %v2945, %v2946
        %v2948 = vrot.slane %v2603, 7
        %v2949 = vrot.slane %v2604, 7
        %v2950 = vsel %vm2717, %v2948, %v2949
        %v2951 = vrot.slane %v2605, 7
        %v2952 = vrot.slane %v2606, 7
        %v2953 = vsel %vm2717, %v2951, %v2952
        %v2954 = vrot.slane %v2607, 7
        %v2955 = vrot.slane %v2608, 7
        %v2956 = vsel %vm2717, %v2954, %v2955
        %v2957 = vrot.slane %v2609, 7
        %v2958 = vrot.slane %v2610, 7
        %v2959 = vsel %vm2717, %v2957, %v2958
        %v2960 = vrot.slane %v2611, 7
        %v2961 = vrot.slane %v2612, 7
        %v2962 = vsel %vm2717, %v2960, %v2961
        %v2963 = vrot.slane %v2613, 7
        %v2964 = vrot.slane %v2614, 7
        %v2965 = vsel %vm2717, %v2963, %v2964
        %v2966 = vrot.slane %v2615, 7
        %v2967 = vrot.slane %v2616, 7
        %v2968 = vsel %vm2717, %v2966, %v2967
        %v2969 = vrot.slane %v2617, 7
        %v2970 = vrot.slane %v2618, 7
        %v2971 = vsel %vm2717, %v2969, %v2970
        %v2972 = vrot.slane %v2619, 7
        %v2973 = vrot.slane %v2620, 7
        %v2974 = vsel %vm2717, %v2972, %v2973
        %v2975 = vrot.slane %v2621, 7
        %v2976 = vrot.slane %v2622, 7
        %v2977 = vsel %vm2717, %v2975, %v2976
        %v2978 = vrot.slane %v2623, 7
        %v2979 = vrot.slane %v2624, 7
        %v2980 = vsel %vm2717, %v2978, %v2979
        %v2981 = vrot.slane %v2625, 7
        %v2982 = vrot.slane %v2626, 7
        %v2983 = vsel %vm2717, %v2981, %v2982
        %v2984 = vrot.slane %v2627, 7
        %v2985 = vrot.slane %v2628, 7
        %v2986 = vsel %vm2717, %v2984, %v2985
        %v2987 = vrot.slane %v2629, 7
        %v2988 = vrot.slane %v2630, 7
        %v2989 = vsel %vm2717, %v2987, %v2988
        %2990 = vrot.lane.b32.xlu0 %v2942, 32
        %v2991 = vpop.permute.xlu0 %2990
        %2992 = vrot.lane.b32.xlu0 %v2944, 32
        %v2993 = vpop.permute.xlu0 %2992
        %2994 = vrot.lane.b32.xlu0 %v2943, 32
        %v2995 = vpop.permute.xlu0 %2994
        %2996 = vrot.lane.b32.xlu0 %v2945, 32
        %v2997 = vpop.permute.xlu0 %2996
        %2998 = vrot.lane.b32.xlu0 %v2947, 32
        %v2999 = vpop.permute.xlu0 %2998
        %3000 = vrot.lane.b32.xlu0 %v2946, 32
        %v3001 = vpop.permute.xlu0 %3000
        %3002 = vrot.lane.b32.xlu0 %v2948, 32
        %v3003 = vpop.permute.xlu0 %3002
        %3004 = vrot.lane.b32.xlu0 %v2950, 32
        %v3005 = vpop.permute.xlu0 %3004
        %3006 = vrot.lane.b32.xlu0 %v2949, 32
        %v3007 = vpop.permute.xlu0 %3006
        %3008 = vrot.lane.b32.xlu0 %v2951, 32
        %v3009 = vpop.permute.xlu0 %3008
        %3010 = vrot.lane.b32.xlu0 %v2953, 32
        %v3011 = vpop.permute.xlu0 %3010
        %3012 = vrot.lane.b32.xlu0 %v2952, 32
        %v3013 = vpop.permute.xlu0 %3012
        %3014 = vrot.lane.b32.xlu0 %v2954, 32
        %v3015 = vpop.permute.xlu0 %3014
        %3016 = vrot.lane.b32.xlu0 %v2956, 32
        %v3017 = vpop.permute.xlu0 %3016
        %3018 = vrot.lane.b32.xlu0 %v2955, 32
        %v3019 = vpop.permute.xlu0 %3018
        %3020 = vrot.lane.b32.xlu0 %v2957, 32
        %v3021 = vpop.permute.xlu0 %3020
        %3022 = vrot.lane.b32.xlu0 %v2959, 32
        %v3023 = vpop.permute.xlu0 %3022
        %3024 = vrot.lane.b32.xlu0 %v2958, 32
        %v3025 = vpop.permute.xlu0 %3024
        %3026 = vrot.lane.b32.xlu0 %v2960, 32
        %v3027 = vpop.permute.xlu0 %3026
        %3028 = vrot.lane.b32.xlu0 %v2962, 32
        %v3029 = vpop.permute.xlu0 %3028
        %3030 = vrot.lane.b32.xlu0 %v2961, 32
        %v3031 = vpop.permute.xlu0 %3030
        %3032 = vrot.lane.b32.xlu0 %v2963, 32
        %v3033 = vpop.permute.xlu0 %3032
        %3034 = vrot.lane.b32.xlu0 %v2965, 32
        %v3035 = vpop.permute.xlu0 %3034
        %3036 = vrot.lane.b32.xlu0 %v2964, 32
        %v3037 = vpop.permute.xlu0 %3036
        %3038 = vrot.lane.b32.xlu0 %v2966, 32
        %v3039 = vpop.permute.xlu0 %3038
        %3040 = vrot.lane.b32.xlu0 %v2968, 32
        %v3041 = vpop.permute.xlu0 %3040
        %3042 = vrot.lane.b32.xlu0 %v2967, 32
        %v3043 = vpop.permute.xlu0 %3042
        %3044 = vrot.lane.b32.xlu0 %v2969, 32
        %v3045 = vpop.permute.xlu0 %3044
        %3046 = vrot.lane.b32.xlu0 %v2971, 32
        %v3047 = vpop.permute.xlu0 %3046
        %3048 = vrot.lane.b32.xlu0 %v2970, 32
        %v3049 = vpop.permute.xlu0 %3048
        %3050 = vrot.lane.b32.xlu0 %v2972, 32
        %v3051 = vpop.permute.xlu0 %3050
        %3052 = vrot.lane.b32.xlu0 %v2974, 32
        %v3053 = vpop.permute.xlu0 %3052
        %3054 = vrot.lane.b32.xlu0 %v2973, 32
        %v3055 = vpop.permute.xlu0 %3054
        %3056 = vrot.lane.b32.xlu0 %v2975, 32
        %v3057 = vpop.permute.xlu0 %3056
        %3058 = vrot.lane.b32.xlu0 %v2977, 32
        %v3059 = vpop.permute.xlu0 %3058
        %3060 = vrot.lane.b32.xlu0 %v2976, 32
        %v3061 = vpop.permute.xlu0 %3060
        %3062 = vrot.lane.b32.xlu0 %v2978, 32
        %v3063 = vpop.permute.xlu0 %3062
        %3064 = vrot.lane.b32.xlu0 %v2980, 32
        %v3065 = vpop.permute.xlu0 %3064
        %3066 = vrot.lane.b32.xlu0 %v2979, 32
        %v3067 = vpop.permute.xlu0 %3066
        %3068 = vrot.lane.b32.xlu0 %v2981, 32
        %v3069 = vpop.permute.xlu0 %3068
        %3070 = vrot.lane.b32.xlu0 %v2983, 32
        %v3071 = vpop.permute.xlu0 %3070
        %3072 = vrot.lane.b32.xlu0 %v2982, 32
        %v3073 = vpop.permute.xlu0 %3072
        %3074 = vrot.lane.b32.xlu0 %v2984, 32
        %v3075 = vpop.permute.xlu0 %3074
        %3076 = vrot.lane.b32.xlu0 %v2986, 32
        %v3077 = vpop.permute.xlu0 %3076
        %3078 = vrot.lane.b32.xlu0 %v2985, 32
        %v3079 = vpop.permute.xlu0 %3078
        %3080 = vrot.lane.b32.xlu0 %v2987, 32
        %v3081 = vpop.permute.xlu0 %3080
        %3082 = vrot.lane.b32.xlu0 %v2989, 32
        %v3083 = vpop.permute.xlu0 %3082
        %3084 = vrot.lane.b32.xlu0 %v2988, 32
        %v3085 = vpop.permute.xlu0 %3084
        %v3166 = vrot.slane %v2653, 7
        %v3167 = vrot.slane %v2654, 7
        %v3168 = vsel %vm2717, %v3166, %v3167
        %v3169 = vrot.slane %v2655, 7
        %v3170 = vrot.slane %v2656, 7
        %v3171 = vsel %vm2717, %v3169, %v3170
        %v3172 = vrot.slane %v2657, 7
        %v3173 = vrot.slane %v2658, 7
        %v3174 = vsel %vm2717, %v3172, %v3173
        %v3175 = vrot.slane %v2659, 7
        %v3176 = vrot.slane %v2660, 7
        %v3177 = vsel %vm2717, %v3175, %v3176
        %v3178 = vrot.slane %v2661, 7
        %v3179 = vrot.slane %v2662, 7
        %v3180 = vsel %vm2717, %v3178, %v3179
        %v3181 = vrot.slane %v2663, 7
        %v3182 = vrot.slane %v2664, 7
        %v3183 = vsel %vm2717, %v3181, %v3182
        %v3184 = vrot.slane %v2665, 7
        %v3185 = vrot.slane %v2666, 7
        %v3186 = vsel %vm2717, %v3184, %v3185
        %v3187 = vrot.slane %v2667, 7
        %v3188 = vrot.slane %v2668, 7
        %v3189 = vsel %vm2717, %v3187, %v3188
        %v3190 = vrot.slane %v2669, 7
        %v3191 = vrot.slane %v2670, 7
        %v3192 = vsel %vm2717, %v3190, %v3191
        %v3193 = vrot.slane %v2671, 7
        %v3194 = vrot.slane %v2672, 7
        %v3195 = vsel %vm2717, %v3193, %v3194
        %v3196 = vrot.slane %v2673, 7
        %v3197 = vrot.slane %v2674, 7
        %v3198 = vsel %vm2717, %v3196, %v3197
        %v3199 = vrot.slane %v2675, 7
        %v3200 = vrot.slane %v2676, 7
        %v3201 = vsel %vm2717, %v3199, %v3200
        %v3202 = vrot.slane %v2677, 7
        %v3203 = vrot.slane %v2678, 7
        %v3204 = vsel %vm2717, %v3202, %v3203
        %v3205 = vrot.slane %v2679, 7
        %v3206 = vrot.slane %v2680, 7
        %v3207 = vsel %vm2717, %v3205, %v3206
        %v3208 = vrot.slane %v2681, 7
        %v3209 = vrot.slane %v2682, 7
        %v3210 = vsel %vm2717, %v3208, %v3209
        %v3211 = vrot.slane %v2683, 7
        %v3212 = vrot.slane %v2684, 7
        %v3213 = vsel %vm2717, %v3211, %v3212
        %3214 = vrot.lane.b32.xlu0 %v3166, 48
        %v3215 = vpop.permute.xlu0 %3214
        %3216 = vrot.lane.b32.xlu0 %v3168, 48
        %v3217 = vpop.permute.xlu0 %3216
        %3218 = vrot.lane.b32.xlu0 %v3167, 48
        %v3219 = vpop.permute.xlu0 %3218
        %3220 = vrot.lane.b32.xlu0 %v3169, 48
        %v3221 = vpop.permute.xlu0 %3220
        %3222 = vrot.lane.b32.xlu0 %v3171, 48
        %v3223 = vpop.permute.xlu0 %3222
        %3224 = vrot.lane.b32.xlu0 %v3170, 48
        %v3225 = vpop.permute.xlu0 %3224
        %3226 = vrot.lane.b32.xlu0 %v3172, 48
        %v3227 = vpop.permute.xlu0 %3226
        %3228 = vrot.lane.b32.xlu0 %v3174, 48
        %v3229 = vpop.permute.xlu0 %3228
        %3230 = vrot.lane.b32.xlu0 %v3173, 48
        %v3231 = vpop.permute.xlu0 %3230
        %3232 = vrot.lane.b32.xlu0 %v3175, 48
        %v3233 = vpop.permute.xlu0 %3232
        %3234 = vrot.lane.b32.xlu0 %v3177, 48
        %v3235 = vpop.permute.xlu0 %3234
        %3236 = vrot.lane.b32.xlu0 %v3176, 48
        %v3237 = vpop.permute.xlu0 %3236
        %3238 = vrot.lane.b32.xlu0 %v3178, 48
        %v3239 = vpop.permute.xlu0 %3238
        %3240 = vrot.lane.b32.xlu0 %v3180, 48
        %v3241 = vpop.permute.xlu0 %3240
        %3242 = vrot.lane.b32.xlu0 %v3179, 48
        %v3243 = vpop.permute.xlu0 %3242
        %3244 = vrot.lane.b32.xlu0 %v3181, 48
        %v3245 = vpop.permute.xlu0 %3244
        %3246 = vrot.lane.b32.xlu0 %v3183, 48
        %v3247 = vpop.permute.xlu0 %3246
        %3248 = vrot.lane.b32.xlu0 %v3182, 48
        %v3249 = vpop.permute.xlu0 %3248
        %3250 = vrot.lane.b32.xlu0 %v3184, 48
        %v3251 = vpop.permute.xlu0 %3250
        %3252 = vrot.lane.b32.xlu0 %v3186, 48
        %v3253 = vpop.permute.xlu0 %3252
        %3254 = vrot.lane.b32.xlu0 %v3185, 48
        %v3255 = vpop.permute.xlu0 %3254
        %3256 = vrot.lane.b32.xlu0 %v3187, 48
        %v3257 = vpop.permute.xlu0 %3256
        %3258 = vrot.lane.b32.xlu0 %v3189, 48
        %v3259 = vpop.permute.xlu0 %3258
        %3260 = vrot.lane.b32.xlu0 %v3188, 48
        %v3261 = vpop.permute.xlu0 %3260
        %3262 = vrot.lane.b32.xlu0 %v3190, 48
        %v3263 = vpop.permute.xlu0 %3262
        %3264 = vrot.lane.b32.xlu0 %v3192, 48
        %v3265 = vpop.permute.xlu0 %3264
        %3266 = vrot.lane.b32.xlu0 %v3191, 48
        %v3267 = vpop.permute.xlu0 %3266
        %3268 = vrot.lane.b32.xlu0 %v3193, 48
        %v3269 = vpop.permute.xlu0 %3268
        %3270 = vrot.lane.b32.xlu0 %v3195, 48
        %v3271 = vpop.permute.xlu0 %3270
        %3272 = vrot.lane.b32.xlu0 %v3194, 48
        %v3273 = vpop.permute.xlu0 %3272
        %3274 = vrot.lane.b32.xlu0 %v3196, 48
        %v3275 = vpop.permute.xlu0 %3274
        %3276 = vrot.lane.b32.xlu0 %v3198, 48
        %v3277 = vpop.permute.xlu0 %3276
        %3278 = vrot.lane.b32.xlu0 %v3197, 48
        %v3279 = vpop.permute.xlu0 %3278
        %3280 = vrot.lane.b32.xlu0 %v3199, 48
        %v3281 = vpop.permute.xlu0 %3280
        %3282 = vrot.lane.b32.xlu0 %v3201, 48
        %v3283 = vpop.permute.xlu0 %3282
        %3284 = vrot.lane.b32.xlu0 %v3200, 48
        %v3285 = vpop.permute.xlu0 %3284
        %3286 = vrot.lane.b32.xlu0 %v3202, 48
        %v3287 = vpop.permute.xlu0 %3286
        %3288 = vrot.lane.b32.xlu0 %v3204, 48
        %v3289 = vpop.permute.xlu0 %3288
        %3290 = vrot.lane.b32.xlu0 %v3203, 48
        %v3291 = vpop.permute.xlu0 %3290
        %3292 = vrot.lane.b32.xlu0 %v3205, 48
        %v3293 = vpop.permute.xlu0 %3292
        %3294 = vrot.lane.b32.xlu0 %v3207, 48
        %v3295 = vpop.permute.xlu0 %3294
        %3296 = vrot.lane.b32.xlu0 %v3206, 48
        %v3297 = vpop.permute.xlu0 %3296
        %3298 = vrot.lane.b32.xlu0 %v3208, 48
        %v3299 = vpop.permute.xlu0 %3298
        %3300 = vrot.lane.b32.xlu0 %v3210, 48
        %v3301 = vpop.permute.xlu0 %3300
        %3302 = vrot.lane.b32.xlu0 %v3209, 48
        %v3303 = vpop.permute.xlu0 %3302
        %3304 = vrot.lane.b32.xlu0 %v3211, 48
        %v3305 = vpop.permute.xlu0 %3304
        %3306 = vrot.lane.b32.xlu0 %v3213, 48
        %v3307 = vpop.permute.xlu0 %3306
        %3308 = vrot.lane.b32.xlu0 %v3212, 48
        %v3309 = vpop.permute.xlu0 %3308
        %vm3358 = vcmask 130048
        %v3359 = vsel %vm3358, %v437, %v2767
        %v3360 = vsel %vm3358, %v438, %v2769
        %v3361 = vsel %vm3358, %v439, %v2771
        %v3362 = vsel %vm3358, %v440, %v2773
        %v3363 = vsel %vm3358, %v441, %v2775
        %v3364 = vsel %vm3358, %v442, %v2777
        %v3365 = vsel %vm3358, %v443, %v2779
        %v3366 = vsel %vm3358, %v444, %v2781
        %v3367 = vsel %vm3358, %v445, %v2783
        %v3368 = vsel %vm3358, %v446, %v2785
        %v3369 = vsel %vm3358, %v447, %v2787
        %v3370 = vsel %vm3358, %v448, %v2789
        %v3371 = vsel %vm3358, %v449, %v2791
        %v3372 = vsel %vm3358, %v450, %v2793
        %v3373 = vsel %vm3358, %v451, %v2795
        %v3374 = vsel %vm3358, %v452, %v2797
        %v3375 = vsel %vm3358, %v453, %v2799
        %v3376 = vsel %vm3358, %v454, %v2801
        %v3377 = vsel %vm3358, %v455, %v2803
        %v3378 = vsel %vm3358, %v456, %v2805
        %v3379 = vsel %vm3358, %v457, %v2807
        %v3380 = vsel %vm3358, %v458, %v2809
        %v3381 = vsel %vm3358, %v459, %v2811
        %v3382 = vsel %vm3358, %v460, %v2813
        %v3383 = vsel %vm3358, %v461, %v2815
        %v3384 = vsel %vm3358, %v462, %v2817
        %v3385 = vsel %vm3358, %v463, %v2819
        %v3386 = vsel %vm3358, %v464, %v2821
        %v3387 = vsel %vm3358, %v465, %v2823
        %v3388 = vsel %vm3358, %v466, %v2825
        %v3389 = vsel %vm3358, %v467, %v2827
        %v3390 = vsel %vm3358, %v468, %v2829
        %v3391 = vsel %vm3358, %v469, %v2831
        %v3392 = vsel %vm3358, %v470, %v2833
        %v3393 = vsel %vm3358, %v471, %v2835
        %v3394 = vsel %vm3358, %v472, %v2837
        %v3395 = vsel %vm3358, %v473, %v2839
        %v3396 = vsel %vm3358, %v474, %v2841
        %v3397 = vsel %vm3358, %v475, %v2843
        %v3398 = vsel %vm3358, %v476, %v2845
        %v3399 = vsel %vm3358, %v477, %v2847
        %v3400 = vsel %vm3358, %v478, %v2849
        %v3401 = vsel %vm3358, %v479, %v2851
        %v3402 = vsel %vm3358, %v480, %v2853
        %v3403 = vsel %vm3358, %v481, %v2855
        %v3404 = vsel %vm3358, %v482, %v2857
        %v3405 = vsel %vm3358, %v483, %v2859
        %v3406 = vsel %vm3358, %v484, %v2861
        %vm3407 = vcmask 261120
        %v3408 = vsel %vm3407, %v3359, %v2991
        %v3409 = vsel %vm3407, %v3360, %v2993
        %v3410 = vsel %vm3407, %v3361, %v2995
        %v3411 = vsel %vm3407, %v3362, %v2997
        %v3412 = vsel %vm3407, %v3363, %v2999
        %v3413 = vsel %vm3407, %v3364, %v3001
        %v3414 = vsel %vm3407, %v3365, %v3003
        %v3415 = vsel %vm3407, %v3366, %v3005
        %v3416 = vsel %vm3407, %v3367, %v3007
        %v3417 = vsel %vm3407, %v3368, %v3009
        %v3418 = vsel %vm3407, %v3369, %v3011
        %v3419 = vsel %vm3407, %v3370, %v3013
        %v3420 = vsel %vm3407, %v3371, %v3015
        %v3421 = vsel %vm3407, %v3372, %v3017
        %v3422 = vsel %vm3407, %v3373, %v3019
        %v3423 = vsel %vm3407, %v3374, %v3021
        %v3424 = vsel %vm3407, %v3375, %v3023
        %v3425 = vsel %vm3407, %v3376, %v3025
        %v3426 = vsel %vm3407, %v3377, %v3027
        %v3427 = vsel %vm3407, %v3378, %v3029
        %v3428 = vsel %vm3407, %v3379, %v3031
        %v3429 = vsel %vm3407, %v3380, %v3033
        %v3430 = vsel %vm3407, %v3381, %v3035
        %v3431 = vsel %vm3407, %v3382, %v3037
        %v3432 = vsel %vm3407, %v3383, %v3039
        %v3433 = vsel %vm3407, %v3384, %v3041
        %v3434 = vsel %vm3407, %v3385, %v3043
        %v3435 = vsel %vm3407, %v3386, %v3045
        %v3436 = vsel %vm3407, %v3387, %v3047
        %v3437 = vsel %vm3407, %v3388, %v3049
        %v3438 = vsel %vm3407, %v3389, %v3051
        %v3439 = vsel %vm3407, %v3390, %v3053
        %v3440 = vsel %vm3407, %v3391, %v3055
        %v3441 = vsel %vm3407, %v3392, %v3057
        %v3442 = vsel %vm3407, %v3393, %v3059
        %v3443 = vsel %vm3407, %v3394, %v3061
        %v3444 = vsel %vm3407, %v3395, %v3063
        %v3445 = vsel %vm3407, %v3396, %v3065
        %v3446 = vsel %vm3407, %v3397, %v3067
        %v3447 = vsel %vm3407, %v3398, %v3069
        %v3448 = vsel %vm3407, %v3399, %v3071
        %v3449 = vsel %vm3407, %v3400, %v3073
        %v3450 = vsel %vm3407, %v3401, %v3075
        %v3451 = vsel %vm3407, %v3402, %v3077
        %v3452 = vsel %vm3407, %v3403, %v3079
        %v3453 = vsel %vm3407, %v3404, %v3081
        %v3454 = vsel %vm3407, %v3405, %v3083
        %v3455 = vsel %vm3407, %v3406, %v3085
        %vm3456 = vcmask 392192
        %v3457 = vsel %vm3456, %v3408, %v3215
        %v3458 = vsel %vm3456, %v3409, %v3217
        %v3459 = vsel %vm3456, %v3410, %v3219
        %v3460 = vsel %vm3456, %v3411, %v3221
        %v3461 = vsel %vm3456, %v3412, %v3223
        %v3462 = vsel %vm3456, %v3413, %v3225
        %v3463 = vsel %vm3456, %v3414, %v3227
        %v3464 = vsel %vm3456, %v3415, %v3229
        %v3465 = vsel %vm3456, %v3416, %v3231
        %v3466 = vsel %vm3456, %v3417, %v3233
        %v3467 = vsel %vm3456, %v3418, %v3235
        %v3468 = vsel %vm3456, %v3419, %v3237
        %v3469 = vsel %vm3456, %v3420, %v3239
        %v3470 = vsel %vm3456, %v3421, %v3241
        %v3471 = vsel %vm3456, %v3422, %v3243
        %v3472 = vsel %vm3456, %v3423, %v3245
        %v3473 = vsel %vm3456, %v3424, %v3247
        %v3474 = vsel %vm3456, %v3425, %v3249
        %v3475 = vsel %vm3456, %v3426, %v3251
        %v3476 = vsel %vm3456, %v3427, %v3253
        %v3477 = vsel %vm3456, %v3428, %v3255
        %v3478 = vsel %vm3456, %v3429, %v3257
        %v3479 = vsel %vm3456, %v3430, %v3259
        %v3480 = vsel %vm3456, %v3431, %v3261
        %v3481 = vsel %vm3456, %v3432, %v3263
        %v3482 = vsel %vm3456, %v3433, %v3265
        %v3483 = vsel %vm3456, %v3434, %v3267
        %v3484 = vsel %vm3456, %v3435, %v3269
        %v3485 = vsel %vm3456, %v3436, %v3271
        %v3486 = vsel %vm3456, %v3437, %v3273
        %v3487 = vsel %vm3456, %v3438, %v3275
        %v3488 = vsel %vm3456, %v3439, %v3277
        %v3489 = vsel %vm3456, %v3440, %v3279
        %v3490 = vsel %vm3456, %v3441, %v3281
        %v3491 = vsel %vm3456, %v3442, %v3283
        %v3492 = vsel %vm3456, %v3443, %v3285
        %v3493 = vsel %vm3456, %v3444, %v3287
        %v3494 = vsel %vm3456, %v3445, %v3289
        %v3495 = vsel %vm3456, %v3446, %v3291
        %v3496 = vsel %vm3456, %v3447, %v3293
        %v3497 = vsel %vm3456, %v3448, %v3295
        %v3498 = vsel %vm3456, %v3449, %v3297
        %v3499 = vsel %vm3456, %v3450, %v3299
        %v3500 = vsel %vm3456, %v3451, %v3301
        %v3501 = vsel %vm3456, %v3452, %v3303
        %v3502 = vsel %vm3456, %v3453, %v3305
        %v3503 = vsel %vm3456, %v3454, %v3307
        %v3504 = vsel %vm3456, %v3455, %v3309
        %v3505 = vpack.c.bf16 %v3458, %v3457
        %v3506 = vpack.c.bf16 %v3459, %v3459
        %v3507 = vpack.c.bf16 %v3461, %v3460
        %v3508 = vpack.c.bf16 %v3462, %v3462
        %v3509 = vpack.c.bf16 %v3464, %v3463
        %v3510 = vpack.c.bf16 %v3465, %v3465
        %v3511 = vpack.c.bf16 %v3467, %v3466
        %v3512 = vpack.c.bf16 %v3468, %v3468
        %v3513 = vpack.c.bf16 %v3470, %v3469
        %v3514 = vpack.c.bf16 %v3471, %v3471
        %v3515 = vpack.c.bf16 %v3473, %v3472
        %v3516 = vpack.c.bf16 %v3474, %v3474
        %v3517 = vpack.c.bf16 %v3476, %v3475
        %v3518 = vpack.c.bf16 %v3477, %v3477
        %v3519 = vpack.c.bf16 %v3479, %v3478
        %v3520 = vpack.c.bf16 %v3480, %v3480
        %v3521 = vpack.c.bf16 %v3482, %v3481
        %v3522 = vpack.c.bf16 %v3483, %v3483
        %v3523 = vpack.c.bf16 %v3485, %v3484
        %v3524 = vpack.c.bf16 %v3486, %v3486
        %v3525 = vpack.c.bf16 %v3488, %v3487
        %v3526 = vpack.c.bf16 %v3489, %v3489
        %v3527 = vpack.c.bf16 %v3491, %v3490
        %v3528 = vpack.c.bf16 %v3492, %v3492
        %v3529 = vpack.c.bf16 %v3494, %v3493
        %v3530 = vpack.c.bf16 %v3495, %v3495
        %v3531 = vpack.c.bf16 %v3497, %v3496
        %v3532 = vpack.c.bf16 %v3498, %v3498
        %v3533 = vpack.c.bf16 %v3500, %v3499
        %v3534 = vpack.c.bf16 %v3501, %v3501
        %v3535 = vpack.c.bf16 %v3503, %v3502
        %v3536 = vpack.c.bf16 %v3504, %v3504
        %vm3537 = vsmask.f32 7424
        %v3539 = vshrl.u32 %v3505, 16
        %v3541 = vshll.u32 %v3505, 16
        %v3543 = vrot.slane %v3541, 1
        %v3544 = vor.u32 %v3539, %v3543
        %v3546 = vshll.u32 %v3506, 16
        %v3548 = vrot.slane %v3546, 1
        %v3549 = vsel %vm3537, %v3544, %v3548
        %v3551 = vshrl.u32 %v3507, 16
        %v3553 = vshll.u32 %v3507, 16
        %v3555 = vrot.slane %v3553, 1
        %v3556 = vor.u32 %v3551, %v3555
        %v3558 = vshll.u32 %v3508, 16
        %v3560 = vrot.slane %v3558, 1
        %v3561 = vsel %vm3537, %v3556, %v3560
        %v3563 = vshrl.u32 %v3509, 16
        %v3565 = vshll.u32 %v3509, 16
        %v3567 = vrot.slane %v3565, 1
        %v3568 = vor.u32 %v3563, %v3567
        %v3570 = vshll.u32 %v3510, 16
        %v3572 = vrot.slane %v3570, 1
        %v3573 = vsel %vm3537, %v3568, %v3572
        %v3575 = vshrl.u32 %v3511, 16
        %v3577 = vshll.u32 %v3511, 16
        %v3579 = vrot.slane %v3577, 1
        %v3580 = vor.u32 %v3575, %v3579
        %v3582 = vshll.u32 %v3512, 16
        %v3584 = vrot.slane %v3582, 1
        %v3585 = vsel %vm3537, %v3580, %v3584
        %v3587 = vshrl.u32 %v3513, 16
        %v3589 = vshll.u32 %v3513, 16
        %v3591 = vrot.slane %v3589, 1
        %v3592 = vor.u32 %v3587, %v3591
        %v3594 = vshll.u32 %v3514, 16
        %v3596 = vrot.slane %v3594, 1
        %v3597 = vsel %vm3537, %v3592, %v3596
        %v3599 = vshrl.u32 %v3515, 16
        %v3601 = vshll.u32 %v3515, 16
        %v3603 = vrot.slane %v3601, 1
        %v3604 = vor.u32 %v3599, %v3603
        %v3606 = vshll.u32 %v3516, 16
        %v3608 = vrot.slane %v3606, 1
        %v3609 = vsel %vm3537, %v3604, %v3608
        %v3611 = vshrl.u32 %v3517, 16
        %v3613 = vshll.u32 %v3517, 16
        %v3615 = vrot.slane %v3613, 1
        %v3616 = vor.u32 %v3611, %v3615
        %v3618 = vshll.u32 %v3518, 16
        %v3620 = vrot.slane %v3618, 1
        %v3621 = vsel %vm3537, %v3616, %v3620
        %v3623 = vshrl.u32 %v3519, 16
        %v3625 = vshll.u32 %v3519, 16
        %v3627 = vrot.slane %v3625, 1
        %v3628 = vor.u32 %v3623, %v3627
        %v3630 = vshll.u32 %v3520, 16
        %v3632 = vrot.slane %v3630, 1
        %v3633 = vsel %vm3537, %v3628, %v3632
        %v3635 = vshrl.u32 %v3521, 16
        %v3637 = vshll.u32 %v3521, 16
        %v3639 = vrot.slane %v3637, 1
        %v3640 = vor.u32 %v3635, %v3639
        %v3642 = vshll.u32 %v3522, 16
        %v3644 = vrot.slane %v3642, 1
        %v3645 = vsel %vm3537, %v3640, %v3644
        %v3647 = vshrl.u32 %v3523, 16
        %v3649 = vshll.u32 %v3523, 16
        %v3651 = vrot.slane %v3649, 1
        %v3652 = vor.u32 %v3647, %v3651
        %v3654 = vshll.u32 %v3524, 16
        %v3656 = vrot.slane %v3654, 1
        %v3657 = vsel %vm3537, %v3652, %v3656
        %v3659 = vshrl.u32 %v3525, 16
        %v3661 = vshll.u32 %v3525, 16
        %v3663 = vrot.slane %v3661, 1
        %v3664 = vor.u32 %v3659, %v3663
        %v3666 = vshll.u32 %v3526, 16
        %v3668 = vrot.slane %v3666, 1
        %v3669 = vsel %vm3537, %v3664, %v3668
        %v3671 = vshrl.u32 %v3527, 16
        %v3673 = vshll.u32 %v3527, 16
        %v3675 = vrot.slane %v3673, 1
        %v3676 = vor.u32 %v3671, %v3675
        %v3678 = vshll.u32 %v3528, 16
        %v3680 = vrot.slane %v3678, 1
        %v3681 = vsel %vm3537, %v3676, %v3680
        %v3683 = vshrl.u32 %v3529, 16
        %v3685 = vshll.u32 %v3529, 16
        %v3687 = vrot.slane %v3685, 1
        %v3688 = vor.u32 %v3683, %v3687
        %v3690 = vshll.u32 %v3530, 16
        %v3692 = vrot.slane %v3690, 1
        %v3693 = vsel %vm3537, %v3688, %v3692
        %v3695 = vshrl.u32 %v3531, 16
        %v3697 = vshll.u32 %v3531, 16
        %v3699 = vrot.slane %v3697, 1
        %v3700 = vor.u32 %v3695, %v3699
        %v3702 = vshll.u32 %v3532, 16
        %v3704 = vrot.slane %v3702, 1
        %v3705 = vsel %vm3537, %v3700, %v3704
        %v3707 = vshrl.u32 %v3533, 16
        %v3709 = vshll.u32 %v3533, 16
        %v3711 = vrot.slane %v3709, 1
        %v3712 = vor.u32 %v3707, %v3711
        %v3714 = vshll.u32 %v3534, 16
        %v3716 = vrot.slane %v3714, 1
        %v3717 = vsel %vm3537, %v3712, %v3716
        %v3719 = vshrl.u32 %v3535, 16
        %v3721 = vshll.u32 %v3535, 16
        %v3723 = vrot.slane %v3721, 1
        %v3724 = vor.u32 %v3719, %v3723
        %v3726 = vshll.u32 %v3536, 16
        %v3728 = vrot.slane %v3726, 1
        %v3729 = vsel %vm3537, %v3724, %v3728
        %v3731 = vshrl.u32 0, 16
        %v3733 = vrot.slane %v3731, 7
        %v3734 = vshll.u32 0, 16
        %v3736 = vor.u32 %v3733, %v3734
        %v3738 = vshrl.u32 %v3549, 16
        %v3740 = vrot.slane %v3738, 7
        %v3741 = vshll.u32 %v3549, 16
        %v3743 = vor.u32 %v3740, %v3741
        %v3745 = vshrl.u32 %v3561, 16
        %v3747 = vrot.slane %v3745, 7
        %v3748 = vshll.u32 %v3561, 16
        %v3750 = vor.u32 %v3747, %v3748
        %v3752 = vshrl.u32 %v3573, 16
        %v3754 = vrot.slane %v3752, 7
        %v3755 = vshll.u32 %v3573, 16
        %v3757 = vor.u32 %v3754, %v3755
        %v3759 = vshrl.u32 %v3585, 16
        %v3761 = vrot.slane %v3759, 7
        %v3762 = vshll.u32 %v3585, 16
        %v3764 = vor.u32 %v3761, %v3762
        %v3766 = vshrl.u32 %v3597, 16
        %v3768 = vrot.slane %v3766, 7
        %v3769 = vshll.u32 %v3597, 16
        %v3771 = vor.u32 %v3768, %v3769
        %v3773 = vshrl.u32 %v3609, 16
        %v3775 = vrot.slane %v3773, 7
        %v3776 = vshll.u32 %v3609, 16
        %v3778 = vor.u32 %v3775, %v3776
        %v3780 = vshrl.u32 %v3621, 16
        %v3782 = vrot.slane %v3780, 7
        %v3783 = vshll.u32 %v3621, 16
        %v3785 = vor.u32 %v3782, %v3783
        %v3787 = vshrl.u32 %v3633, 16
        %v3789 = vrot.slane %v3787, 7
        %v3790 = vshll.u32 %v3633, 16
        %v3792 = vor.u32 %v3789, %v3790
        %v3794 = vshrl.u32 %v3645, 16
        %v3796 = vrot.slane %v3794, 7
        %v3797 = vshll.u32 %v3645, 16
        %v3799 = vor.u32 %v3796, %v3797
        %v3801 = vshrl.u32 %v3657, 16
        %v3803 = vrot.slane %v3801, 7
        %v3804 = vshll.u32 %v3657, 16
        %v3806 = vor.u32 %v3803, %v3804
        %v3808 = vshrl.u32 %v3669, 16
        %v3810 = vrot.slane %v3808, 7
        %v3811 = vshll.u32 %v3669, 16
        %v3813 = vor.u32 %v3810, %v3811
        %v3815 = vshrl.u32 %v3681, 16
        %v3817 = vrot.slane %v3815, 7
        %v3818 = vshll.u32 %v3681, 16
        %v3820 = vor.u32 %v3817, %v3818
        %v3822 = vshrl.u32 %v3693, 16
        %v3824 = vrot.slane %v3822, 7
        %v3825 = vshll.u32 %v3693, 16
        %v3827 = vor.u32 %v3824, %v3825
        %v3829 = vshrl.u32 %v3705, 16
        %v3831 = vrot.slane %v3829, 7
        %v3832 = vshll.u32 %v3705, 16
        %v3834 = vor.u32 %v3831, %v3832
        %v3836 = vshrl.u32 %v3717, 16
        %v3838 = vrot.slane %v3836, 7
        %v3839 = vshll.u32 %v3717, 16
        %v3841 = vor.u32 %v3838, %v3839
        %v3843 = vshrl.u32 %v3729, 16
        %v3845 = vrot.slane %v3843, 7
        %v3846 = vshll.u32 %v3729, 16
        %v3848 = vor.u32 %v3845, %v3846
        %vm3883 = vcmask 1040384
        %vm3884 = vsmask.f32 256
        %vm3885 = vmand %vm3883, %vm3884
        %v3886 = vsel %vm3885, 0, %v3736
        %v3887 = vsel %vm3885, 0, %v3743
        %v3888 = vsel %vm3885, 0, %v3750
        %v3889 = vsel %vm3885, 0, %v3757
        %v3890 = vsel %vm3885, 0, %v3764
        %v3891 = vsel %vm3885, 0, %v3771
        %v3892 = vsel %vm3885, 0, %v3778
        %v3893 = vsel %vm3885, 0, %v3785
        %v3894 = vsel %vm3885, 0, %v3792
        %v3895 = vsel %vm3885, 0, %v3799
        %v3896 = vsel %vm3885, 0, %v3806
        %v3897 = vsel %vm3885, 0, %v3813
        %v3898 = vsel %vm3885, 0, %v3820
        %v3899 = vsel %vm3885, 0, %v3827
        %v3900 = vsel %vm3885, 0, %v3834
        %v3901 = vsel %vm3885, 0, %v3841
        %v3902 = vsel %vm3885, 0, %v3848
        %v3903 = vsel %vm3885, %v3733, 0
        %v3904 = vsel %vm3885, %v3740, 0
        %v3905 = vsel %vm3885, %v3747, 0
        %v3906 = vsel %vm3885, %v3754, 0
        %v3907 = vsel %vm3885, %v3761, 0
        %v3908 = vsel %vm3885, %v3768, 0
        %v3909 = vsel %vm3885, %v3775, 0
        %v3910 = vsel %vm3885, %v3782, 0
        %v3911 = vsel %vm3885, %v3789, 0
        %v3912 = vsel %vm3885, %v3796, 0
        %v3913 = vsel %vm3885, %v3803, 0
        %v3914 = vsel %vm3885, %v3810, 0
        %v3915 = vsel %vm3885, %v3817, 0
        %v3916 = vsel %vm3885, %v3824, 0
        %v3917 = vsel %vm3885, %v3831, 0
        %v3918 = vsel %vm3885, %v3838, 0
        %v3919 = vsel %vm3885, %v3845, 0
        %v3921 = vshrl.u32 %v3886, 16
        %v3923 = vshll.u32 %v3886, 16
        %v3925 = vrot.slane %v3923, 1
        %v3926 = vor.u32 %v3921, %v3925
        %v3928 = vshll.u32 %v3903, 16
        %v3930 = vrot.slane %v3928, 1
        %v3931 = vsel %vm3537, %v3926, %v3930
        %v3933 = vshrl.u32 %v3887, 16
        %v3935 = vshll.u32 %v3887, 16
        %v3937 = vrot.slane %v3935, 1
        %v3938 = vor.u32 %v3933, %v3937
        %v3940 = vshll.u32 %v3904, 16
        %v3942 = vrot.slane %v3940, 1
        %v3943 = vsel %vm3537, %v3938, %v3942
        %v3945 = vshrl.u32 %v3888, 16
        %v3947 = vshll.u32 %v3888, 16
        %v3949 = vrot.slane %v3947, 1
        %v3950 = vor.u32 %v3945, %v3949
        %v3952 = vshll.u32 %v3905, 16
        %v3954 = vrot.slane %v3952, 1
        %v3955 = vsel %vm3537, %v3950, %v3954
        %v3957 = vshrl.u32 %v3889, 16
        %v3959 = vshll.u32 %v3889, 16
        %v3961 = vrot.slane %v3959, 1
        %v3962 = vor.u32 %v3957, %v3961
        %v3964 = vshll.u32 %v3906, 16
        %v3966 = vrot.slane %v3964, 1
        %v3967 = vsel %vm3537, %v3962, %v3966
        %v3969 = vshrl.u32 %v3890, 16
        %v3971 = vshll.u32 %v3890, 16
        %v3973 = vrot.slane %v3971, 1
        %v3974 = vor.u32 %v3969, %v3973
        %v3976 = vshll.u32 %v3907, 16
        %v3978 = vrot.slane %v3976, 1
        %v3979 = vsel %vm3537, %v3974, %v3978
        %v3981 = vshrl.u32 %v3891, 16
        %v3983 = vshll.u32 %v3891, 16
        %v3985 = vrot.slane %v3983, 1
        %v3986 = vor.u32 %v3981, %v3985
        %v3988 = vshll.u32 %v3908, 16
        %v3990 = vrot.slane %v3988, 1
        %v3991 = vsel %vm3537, %v3986, %v3990
        %v3993 = vshrl.u32 %v3892, 16
        %v3995 = vshll.u32 %v3892, 16
        %v3997 = vrot.slane %v3995, 1
        %v3998 = vor.u32 %v3993, %v3997
        %v4000 = vshll.u32 %v3909, 16
        %v4002 = vrot.slane %v4000, 1
        %v4003 = vsel %vm3537, %v3998, %v4002
        %v4005 = vshrl.u32 %v3893, 16
        %v4007 = vshll.u32 %v3893, 16
        %v4009 = vrot.slane %v4007, 1
        %v4010 = vor.u32 %v4005, %v4009
        %v4012 = vshll.u32 %v3910, 16
        %v4014 = vrot.slane %v4012, 1
        %v4015 = vsel %vm3537, %v4010, %v4014
        %v4017 = vshrl.u32 %v3894, 16
        %v4019 = vshll.u32 %v3894, 16
        %v4021 = vrot.slane %v4019, 1
        %v4022 = vor.u32 %v4017, %v4021
        %v4024 = vshll.u32 %v3911, 16
        %v4026 = vrot.slane %v4024, 1
        %v4027 = vsel %vm3537, %v4022, %v4026
        %v4029 = vshrl.u32 %v3895, 16
        %v4031 = vshll.u32 %v3895, 16
        %v4033 = vrot.slane %v4031, 1
        %v4034 = vor.u32 %v4029, %v4033
        %v4036 = vshll.u32 %v3912, 16
        %v4038 = vrot.slane %v4036, 1
        %v4039 = vsel %vm3537, %v4034, %v4038
        %v4041 = vshrl.u32 %v3896, 16
        %v4043 = vshll.u32 %v3896, 16
        %v4045 = vrot.slane %v4043, 1
        %v4046 = vor.u32 %v4041, %v4045
        %v4048 = vshll.u32 %v3913, 16
        %v4050 = vrot.slane %v4048, 1
        %v4051 = vsel %vm3537, %v4046, %v4050
        %v4053 = vshrl.u32 %v3897, 16
        %v4055 = vshll.u32 %v3897, 16
        %v4057 = vrot.slane %v4055, 1
        %v4058 = vor.u32 %v4053, %v4057
        %v4060 = vshll.u32 %v3914, 16
        %v4062 = vrot.slane %v4060, 1
        %v4063 = vsel %vm3537, %v4058, %v4062
        %v4065 = vshrl.u32 %v3898, 16
        %v4067 = vshll.u32 %v3898, 16
        %v4069 = vrot.slane %v4067, 1
        %v4070 = vor.u32 %v4065, %v4069
        %v4072 = vshll.u32 %v3915, 16
        %v4074 = vrot.slane %v4072, 1
        %v4075 = vsel %vm3537, %v4070, %v4074
        %v4077 = vshrl.u32 %v3899, 16
        %v4079 = vshll.u32 %v3899, 16
        %v4081 = vrot.slane %v4079, 1
        %v4082 = vor.u32 %v4077, %v4081
        %v4084 = vshll.u32 %v3916, 16
        %v4086 = vrot.slane %v4084, 1
        %v4087 = vsel %vm3537, %v4082, %v4086
        %v4089 = vshrl.u32 %v3900, 16
        %v4091 = vshll.u32 %v3900, 16
        %v4093 = vrot.slane %v4091, 1
        %v4094 = vor.u32 %v4089, %v4093
        %v4096 = vshll.u32 %v3917, 16
        %v4098 = vrot.slane %v4096, 1
        %v4099 = vsel %vm3537, %v4094, %v4098
        %v4101 = vshrl.u32 %v3901, 16
        %v4103 = vshll.u32 %v3901, 16
        %v4105 = vrot.slane %v4103, 1
        %v4106 = vor.u32 %v4101, %v4105
        %v4108 = vshll.u32 %v3918, 16
        %v4110 = vrot.slane %v4108, 1
        %v4111 = vsel %vm3537, %v4106, %v4110
        %4112 = vrot.lane.b32.xlu0 %v3931, 64
        %v4113 = vpop.permute.xlu0 %4112
        %4114 = vrot.lane.b32.xlu0 %v3943, 64
        %v4115 = vpop.permute.xlu0 %4114
        %4116 = vrot.lane.b32.xlu0 %v3955, 64
        %v4117 = vpop.permute.xlu0 %4116
        %4118 = vrot.lane.b32.xlu0 %v3967, 64
        %v4119 = vpop.permute.xlu0 %4118
        %4120 = vrot.lane.b32.xlu0 %v3979, 64
        %v4121 = vpop.permute.xlu0 %4120
        %4122 = vrot.lane.b32.xlu0 %v3991, 64
        %v4123 = vpop.permute.xlu0 %4122
        %4124 = vrot.lane.b32.xlu0 %v4003, 64
        %v4125 = vpop.permute.xlu0 %4124
        %4126 = vrot.lane.b32.xlu0 %v4015, 64
        %v4127 = vpop.permute.xlu0 %4126
        %4128 = vrot.lane.b32.xlu0 %v4027, 64
        %v4129 = vpop.permute.xlu0 %4128
        %4130 = vrot.lane.b32.xlu0 %v4039, 64
        %v4131 = vpop.permute.xlu0 %4130
        %4132 = vrot.lane.b32.xlu0 %v4051, 64
        %v4133 = vpop.permute.xlu0 %4132
        %4134 = vrot.lane.b32.xlu0 %v4063, 64
        %v4135 = vpop.permute.xlu0 %4134
        %4136 = vrot.lane.b32.xlu0 %v4075, 64
        %v4137 = vpop.permute.xlu0 %4136
        %4138 = vrot.lane.b32.xlu0 %v4087, 64
        %v4139 = vpop.permute.xlu0 %4138
        %4140 = vrot.lane.b32.xlu0 %v4099, 64
        %v4141 = vpop.permute.xlu0 %4140
        %4142 = vrot.lane.b32.xlu0 %v4111, 64
        %v4143 = vpop.permute.xlu0 %4142
        %vm4176 = vcmask 1046528
        %v4177 = vrot.slane %v3886, 1
        %v4178 = vrot.slane %v3903, 1
        %v4179 = vsel %vm4176, %v4177, %v4178
        %v4180 = vrot.slane %v3887, 1
        %v4181 = vrot.slane %v3904, 1
        %v4182 = vsel %vm4176, %v4180, %v4181
        %v4183 = vrot.slane %v3888, 1
        %v4184 = vrot.slane %v3905, 1
        %v4185 = vsel %vm4176, %v4183, %v4184
        %v4186 = vrot.slane %v3889, 1
        %v4187 = vrot.slane %v3906, 1
        %v4188 = vsel %vm4176, %v4186, %v4187
        %v4189 = vrot.slane %v3890, 1
        %v4190 = vrot.slane %v3907, 1
        %v4191 = vsel %vm4176, %v4189, %v4190
        %v4192 = vrot.slane %v3891, 1
        %v4193 = vrot.slane %v3908, 1
        %v4194 = vsel %vm4176, %v4192, %v4193
        %v4195 = vrot.slane %v3892, 1
        %v4196 = vrot.slane %v3909, 1
        %v4197 = vsel %vm4176, %v4195, %v4196
        %v4198 = vrot.slane %v3893, 1
        %v4199 = vrot.slane %v3910, 1
        %v4200 = vsel %vm4176, %v4198, %v4199
        %v4201 = vrot.slane %v3894, 1
        %v4202 = vrot.slane %v3911, 1
        %v4203 = vsel %vm4176, %v4201, %v4202
        %v4204 = vrot.slane %v3895, 1
        %v4205 = vrot.slane %v3912, 1
        %v4206 = vsel %vm4176, %v4204, %v4205
        %v4207 = vrot.slane %v3896, 1
        %v4208 = vrot.slane %v3913, 1
        %v4209 = vsel %vm4176, %v4207, %v4208
        %v4210 = vrot.slane %v3897, 1
        %v4211 = vrot.slane %v3914, 1
        %v4212 = vsel %vm4176, %v4210, %v4211
        %v4213 = vrot.slane %v3898, 1
        %v4214 = vrot.slane %v3915, 1
        %v4215 = vsel %vm4176, %v4213, %v4214
        %v4216 = vrot.slane %v3899, 1
        %v4217 = vrot.slane %v3916, 1
        %v4218 = vsel %vm4176, %v4216, %v4217
        %v4219 = vrot.slane %v3900, 1
        %v4220 = vrot.slane %v3917, 1
        %v4221 = vsel %vm4176, %v4219, %v4220
        %v4222 = vrot.slane %v3901, 1
        %v4223 = vrot.slane %v3918, 1
        %v4224 = vsel %vm4176, %v4222, %v4223
        %4226 = vrot.lane.b32.xlu0 %v3887, 64
        %v4227 = vpop.permute.xlu0 %4226
        %4228 = vrot.lane.b32.xlu0 %v3888, 64
        %v4229 = vpop.permute.xlu0 %4228
        %4230 = vrot.lane.b32.xlu0 %v3889, 64
        %v4231 = vpop.permute.xlu0 %4230
        %4232 = vrot.lane.b32.xlu0 %v3890, 64
        %v4233 = vpop.permute.xlu0 %4232
        %4234 = vrot.lane.b32.xlu0 %v3891, 64
        %v4235 = vpop.permute.xlu0 %4234
        %4236 = vrot.lane.b32.xlu0 %v3892, 64
        %v4237 = vpop.permute.xlu0 %4236
        %4238 = vrot.lane.b32.xlu0 %v3893, 64
        %v4239 = vpop.permute.xlu0 %4238
        %4240 = vrot.lane.b32.xlu0 %v3894, 64
        %v4241 = vpop.permute.xlu0 %4240
        %4242 = vrot.lane.b32.xlu0 %v3895, 64
        %v4243 = vpop.permute.xlu0 %4242
        %4244 = vrot.lane.b32.xlu0 %v3896, 64
        %v4245 = vpop.permute.xlu0 %4244
        %4246 = vrot.lane.b32.xlu0 %v3897, 64
        %v4247 = vpop.permute.xlu0 %4246
        %4248 = vrot.lane.b32.xlu0 %v3898, 64
        %v4249 = vpop.permute.xlu0 %4248
        %4250 = vrot.lane.b32.xlu0 %v3899, 64
        %v4251 = vpop.permute.xlu0 %4250
        %4252 = vrot.lane.b32.xlu0 %v3900, 64
        %v4253 = vpop.permute.xlu0 %4252
        %4254 = vrot.lane.b32.xlu0 %v3901, 64
        %v4255 = vpop.permute.xlu0 %4254
        %4256 = vrot.lane.b32.xlu0 %v3902, 64
        %v4257 = vpop.permute.xlu0 %4256
        %v4259 = vshrl.u32 %v3902, 16
        %v4261 = vshll.u32 %v3902, 16
        %v4263 = vrot.slane %v4261, 1
        %v4264 = vor.u32 %v4259, %v4263
        %v4266 = vshll.u32 %v3919, 16
        %v4268 = vrot.slane %v4266, 1
        %v4269 = vsel %vm3537, %v4264, %v4268
        %v4271 = vrot.slane %v3902, 1
        %v4272 = vrot.slane %v3919, 1
        %v4273 = vsel %vm4176, %v4271, %v4272
        %4274 = vrot.lane.b32.xlu0 %v4182, 64
        %v4275 = vpop.permute.xlu0 %4274
        %4276 = vrot.lane.b32.xlu0 %v4185, 64
        %v4277 = vpop.permute.xlu0 %4276
        %4278 = vrot.lane.b32.xlu0 %v4188, 64
        %v4279 = vpop.permute.xlu0 %4278
        %4280 = vrot.lane.b32.xlu0 %v4191, 64
        %v4281 = vpop.permute.xlu0 %4280
        %4282 = vrot.lane.b32.xlu0 %v4194, 64
        %v4283 = vpop.permute.xlu0 %4282
        %4284 = vrot.lane.b32.xlu0 %v4197, 64
        %v4285 = vpop.permute.xlu0 %4284
        %4286 = vrot.lane.b32.xlu0 %v4200, 64
        %v4287 = vpop.permute.xlu0 %4286
        %4288 = vrot.lane.b32.xlu0 %v4203, 64
        %v4289 = vpop.permute.xlu0 %4288
        %4290 = vrot.lane.b32.xlu0 %v4206, 64
        %v4291 = vpop.permute.xlu0 %4290
        %4292 = vrot.lane.b32.xlu0 %v4209, 64
        %v4293 = vpop.permute.xlu0 %4292
        %4294 = vrot.lane.b32.xlu0 %v4212, 64
        %v4295 = vpop.permute.xlu0 %4294
        %4296 = vrot.lane.b32.xlu0 %v4215, 64
        %v4297 = vpop.permute.xlu0 %4296
        %4298 = vrot.lane.b32.xlu0 %v4218, 64
        %v4299 = vpop.permute.xlu0 %4298
        %4300 = vrot.lane.b32.xlu0 %v4221, 64
        %v4301 = vpop.permute.xlu0 %4300
        %4302 = vrot.lane.b32.xlu0 %v4224, 64
        %v4303 = vpop.permute.xlu0 %4302
        %4304 = vrot.lane.b32.xlu0 %v4273, 64
        %v4305 = vpop.permute.xlu0 %4304
        %4306 = vrot.lane.b32.xlu0 %v4269, 64
        %v4307 = vpop.permute.xlu0 %4306
        %vm4308 = vcmask 523264
        %v4310 = vsel %vm4308, %v3886, %v4113
        %v4313 = vsel %vm4308, %v3887, %v4115
        %v4316 = vsel %vm4308, %v3888, %v4117
        %v4319 = vsel %vm4308, %v3889, %v4119
        %v4322 = vsel %vm4308, %v3890, %v4121
        %v4325 = vsel %vm4308, %v3891, %v4123
        %v4328 = vsel %vm4308, %v3892, %v4125
        %v4331 = vsel %vm4308, %v3893, %v4127
        %v4334 = vsel %vm4308, %v3894, %v4129
        %v4337 = vsel %vm4308, %v3895, %v4131
        %v4340 = vsel %vm4308, %v3896, %v4133
        %v4343 = vsel %vm4308, %v3897, %v4135
        %v4346 = vsel %vm4308, %v3898, %v4137
        %v4349 = vsel %vm4308, %v3899, %v4139
        %v4352 = vsel %vm4308, %v3900, %v4141
        %v4355 = vsel %vm4308, %v3901, %v4143
        %v4359 = vsel %vm4308, %v4179, %v4227
        %v4363 = vsel %vm4308, %v4182, %v4229
        %v4367 = vsel %vm4308, %v4185, %v4231
        %v4371 = vsel %vm4308, %v4188, %v4233
        %v4375 = vsel %vm4308, %v4191, %v4235
        %v4379 = vsel %vm4308, %v4194, %v4237
        %v4383 = vsel %vm4308, %v4197, %v4239
        %v4387 = vsel %vm4308, %v4200, %v4241
        %v4391 = vsel %vm4308, %v4203, %v4243
        %v4395 = vsel %vm4308, %v4206, %v4245
        %v4399 = vsel %vm4308, %v4209, %v4247
        %v4403 = vsel %vm4308, %v4212, %v4249
        %v4407 = vsel %vm4308, %v4215, %v4251
        %v4411 = vsel %vm4308, %v4218, %v4253
        %v4415 = vsel %vm4308, %v4221, %v4255
        %v4419 = vsel %vm4308, %v4224, %v4257
        %v4423 = vsel %vm4308, %v3943, %v4275
        %v4427 = vsel %vm4308, %v3955, %v4277
        %v4431 = vsel %vm4308, %v3967, %v4279
        %v4435 = vsel %vm4308, %v3979, %v4281
        %v4439 = vsel %vm4308, %v3991, %v4283
        %v4443 = vsel %vm4308, %v4003, %v4285
        %v4447 = vsel %vm4308, %v4015, %v4287
        %v4451 = vsel %vm4308, %v4027, %v4289
        %v4455 = vsel %vm4308, %v4039, %v4291
        %v4459 = vsel %vm4308, %v4051, %v4293
        %v4463 = vsel %vm4308, %v4063, %v4295
        %v4467 = vsel %vm4308, %v4075, %v4297
        %v4471 = vsel %vm4308, %v4087, %v4299
        %v4475 = vsel %vm4308, %v4099, %v4301
        %v4479 = vsel %vm4308, %v4111, %v4303
        %v4483 = vsel %vm4308, %v4269, %v4305
        %v4486 = vsel %vm4308, %v3902, %v4307
        %v4488 = vld [vmem:[%s4] sm:$0xff]
        %v4489 = vld [vmem:[%s4 + $0x8] sm:$0xff]
        %v4490 = vld [vmem:[%s4 + $0x10] sm:$0xff]
        %v4491 = vld [vmem:[%s4 + $0x18] sm:$0xff]
        %v4492 = vld [vmem:[%s4 + $0x20] sm:$0xff]
        %v4493 = vld [vmem:[%s4 + $0x28] sm:$0xff]
        %v4494 = vld [vmem:[%s4 + $0x30] sm:$0xff]
        %v4495 = vld [vmem:[%s4 + $0x38] sm:$0xff]
        %v4496 = vld [vmem:[%s4 + $0x40] sm:$0xff]
        %v4497 = vld [vmem:[%s4 + $0x48] sm:$0xff]
        %v4498 = vld [vmem:[%s4 + $0x50] sm:$0xff]
        %v4499 = vld [vmem:[%s4 + $0x58] sm:$0xff]
        %v4500 = vld [vmem:[%s4 + $0x60] sm:$0xff]
        %v4501 = vld [vmem:[%s4 + $0x68] sm:$0xff]
        %v4502 = vld [vmem:[%s4 + $0x70] sm:$0xff]
        %v4503 = vld [vmem:[%s4 + $0x78] sm:$0xff]
        %v4504 = vld [vmem:[%s4 + $0x80] sm:$0xff]
        %v4505 = vld [vmem:[%s4 + $0x88] sm:$0xff]
        %v4506 = vld [vmem:[%s4 + $0x90] sm:$0xff]
        %v4507 = vld [vmem:[%s4 + $0x98] sm:$0xff]
        %v4508 = vld [vmem:[%s4 + $0xa0] sm:$0xff]
        %v4509 = vld [vmem:[%s4 + $0xa8] sm:$0xff]
        %v4510 = vld [vmem:[%s4 + $0xb0] sm:$0xff]
        %v4511 = vld [vmem:[%s4 + $0xb8] sm:$0xff]
        %v4512 = vld [vmem:[%s4 + $0xc0] sm:$0xff]
        %v4513 = vld [vmem:[%s4 + $0xc8] sm:$0xff]
        %v4514 = vld [vmem:[%s4 + $0xd0] sm:$0xff]
        %v4515 = vld [vmem:[%s4 + $0xd8] sm:$0xff]
        %v4516 = vld [vmem:[%s4 + $0xe0] sm:$0xff]
        %v4517 = vld [vmem:[%s4 + $0xe8] sm:$0xff]
        %v4518 = vld [vmem:[%s4 + $0xf0] sm:$0xff]
        %v4519 = vld [vmem:[%s4 + $0xf8] sm:$0xff]
        %v4520 = vld [vmem:[%s4 + $0x100] sm:$0xff]
        %v4521 = vld [vmem:[%s4 + $0x108] sm:$0xff]
        %v4522 = vld [vmem:[%s4 + $0x110] sm:$0xff]
        %v4523 = vld [vmem:[%s4 + $0x118] sm:$0xff]
        %v4524 = vld [vmem:[%s4 + $0x120] sm:$0xff]
        %v4525 = vld [vmem:[%s4 + $0x128] sm:$0xff]
        %v4526 = vld [vmem:[%s4 + $0x130] sm:$0xff]
        %v4527 = vld [vmem:[%s4 + $0x138] sm:$0xff]
        %v4528 = vld [vmem:[%s4 + $0x140] sm:$0xff]
        %v4529 = vld [vmem:[%s4 + $0x148] sm:$0xff]
        %v4530 = vld [vmem:[%s4 + $0x150] sm:$0xff]
        %v4531 = vld [vmem:[%s4 + $0x158] sm:$0xff]
        %v4532 = vld [vmem:[%s4 + $0x160] sm:$0xff]
        %v4533 = vld [vmem:[%s4 + $0x168] sm:$0xff]
        %v4534 = vld [vmem:[%s4 + $0x170] sm:$0xff]
        %v4535 = vld [vmem:[%s4 + $0x178] sm:$0xff]
        %v4536 = vld [vmem:[%s4 + $0x180] sm:$0xff]
        %v4537 = vld [vmem:[%s4 + $0x188] sm:$0xff]
        %v4538 = vld [vmem:[%s4 + $0x190] sm:$0xff]
        %v4539 = vld [vmem:[%s4 + $0x198] sm:$0xff]
        %v4540 = vld [vmem:[%s4 + $0x1a0] sm:$0xff]
        %v4541 = vld [vmem:[%s4 + $0x1a8] sm:$0xff]
        %v4542 = vld [vmem:[%s4 + $0x1b0] sm:$0xff]
        %v4543 = vld [vmem:[%s4 + $0x1b8] sm:$0xff]
        %v4544 = vld [vmem:[%s4 + $0x1c0] sm:$0xff]
        %v4545 = vld [vmem:[%s4 + $0x1c8] sm:$0xff]
        %v4546 = vld [vmem:[%s4 + $0x1d0] sm:$0xff]
        %v4547 = vld [vmem:[%s4 + $0x1d8] sm:$0xff]
        %v4548 = vld [vmem:[%s4 + $0x1e0] sm:$0xff]
        %v4549 = vld [vmem:[%s4 + $0x1e8] sm:$0xff]
        %v4550 = vld [vmem:[%s4 + $0x1f0] sm:$0xff]
        %v4551 = vld [vmem:[%s4 + $0x1f8] sm:$0xff]
        %v4552 = vld [vmem:[%s4 + $0x200] sm:$0xff]
        %v4553 = vld [vmem:[%s4 + $0x208] sm:$0xff]
        %v4554 = vld [vmem:[%s4 + $0x210] sm:$0xff]
        %v4555 = vld [vmem:[%s4 + $0x218] sm:$0xff]
        %v4556 = vld [vmem:[%s4 + $0x220] sm:$0xff]
        %v4557 = vld [vmem:[%s4 + $0x228] sm:$0xff]
        %v4558 = vld [vmem:[%s4 + $0x230] sm:$0xff]
        %v4559 = vld [vmem:[%s4 + $0x238] sm:$0xff]
        %v4560 = vld [vmem:[%s5] sm:$0x3]
        %v4562 = vlaneseq
        %v4563 = vshrl.u32 %v4562, 7
        %v4564 = vsub.s32 0, %v4563
        %v4565 = vrot.slane %v4560, %v4564
        %v4566 = vlaneseq
        %v4567 = vshrl.u32 %v4566, 7
        %v4568 = vsub.s32 1, %v4567
        %v4569 = vrot.slane %v4560, %v4568
        %v4644 = vunpack.c.l.b16 %v4488
        %v4645 = vunpack.c.h.b16 %v4488
        %v4646 = vunpack.c.l.b16 %v4489
        %v4647 = vunpack.c.h.b16 %v4489
        %v4648 = vunpack.c.l.b16 %v4490
        %v4649 = vunpack.c.h.b16 %v4490
        %v4650 = vunpack.c.l.b16 %v4491
        %v4651 = vunpack.c.h.b16 %v4491
        %v4652 = vunpack.c.l.b16 %v4492
        %v4653 = vunpack.c.h.b16 %v4492
        %v4654 = vunpack.c.l.b16 %v4493
        %v4655 = vunpack.c.h.b16 %v4493
        %v4656 = vunpack.c.l.b16 %v4494
        %v4657 = vunpack.c.h.b16 %v4494
        %v4658 = vunpack.c.l.b16 %v4495
        %v4659 = vunpack.c.h.b16 %v4495
        %v4660 = vunpack.c.l.b16 %v4496
        %v4661 = vunpack.c.h.b16 %v4496
        %v4662 = vunpack.c.l.b16 %v4497
        %v4663 = vunpack.c.h.b16 %v4497
        %v4664 = vunpack.c.l.b16 %v4498
        %v4665 = vunpack.c.h.b16 %v4498
        %v4666 = vunpack.c.l.b16 %v4499
        %v4667 = vunpack.c.h.b16 %v4499
        %v4668 = vunpack.c.l.b16 %v4500
        %v4669 = vunpack.c.h.b16 %v4500
        %v4670 = vunpack.c.l.b16 %v4501
        %v4671 = vunpack.c.h.b16 %v4501
        %v4672 = vunpack.c.l.b16 %v4502
        %v4673 = vunpack.c.h.b16 %v4502
        %v4674 = vunpack.c.l.b16 %v4503
        %v4675 = vunpack.c.h.b16 %v4503
        %v4676 = vunpack.c.l.b16 %v4504
        %v4677 = vunpack.c.h.b16 %v4504
        %v4678 = vunpack.c.l.b16 %v4505
        %v4679 = vunpack.c.h.b16 %v4505
        %v4680 = vunpack.c.l.b16 %v4506
        %v4681 = vunpack.c.h.b16 %v4506
        %v4682 = vunpack.c.l.b16 %v4507
        %v4683 = vunpack.c.h.b16 %v4507
        %v4684 = vunpack.c.l.b16 %v4508
        %v4685 = vunpack.c.h.b16 %v4508
        %v4686 = vunpack.c.l.b16 %v4509
        %v4687 = vunpack.c.h.b16 %v4509
        %v4688 = vunpack.c.l.b16 %v4510
        %v4689 = vunpack.c.h.b16 %v4510
        %v4690 = vunpack.c.l.b16 %v4511
        %v4691 = vunpack.c.h.b16 %v4511
        %v4692 = vunpack.c.l.b16 %v4512
        %v4693 = vunpack.c.h.b16 %v4512
        %v4694 = vunpack.c.l.b16 %v4513
        %v4695 = vunpack.c.h.b16 %v4513
        %v4696 = vunpack.c.l.b16 %v4514
        %v4697 = vunpack.c.h.b16 %v4514
        %v4698 = vunpack.c.l.b16 %v4515
        %v4699 = vunpack.c.h.b16 %v4515
        %v4700 = vunpack.c.l.b16 %v4516
        %v4701 = vunpack.c.h.b16 %v4516
        %v4702 = vunpack.c.l.b16 %v4517
        %v4703 = vunpack.c.h.b16 %v4517
        %v4704 = vunpack.c.l.b16 %v4518
        %v4705 = vunpack.c.h.b16 %v4518
        %v4706 = vunpack.c.l.b16 %v4519
        %v4707 = vunpack.c.h.b16 %v4519
        %v4708 = vunpack.c.l.b16 %v4520
        %v4709 = vunpack.c.h.b16 %v4520
        %v4710 = vunpack.c.l.b16 %v4521
        %v4711 = vunpack.c.h.b16 %v4521
        %v4712 = vunpack.c.l.b16 %v4522
        %v4713 = vunpack.c.h.b16 %v4522
        %v4714 = vunpack.c.l.b16 %v4523
        %v4715 = vunpack.c.h.b16 %v4523
        %v4716 = vunpack.c.l.b16 %v4524
        %v4717 = vunpack.c.h.b16 %v4524
        %v4718 = vunpack.c.l.b16 %v4525
        %v4719 = vunpack.c.h.b16 %v4525
        %v4720 = vunpack.c.l.b16 %v4526
        %v4721 = vunpack.c.h.b16 %v4526
        %v4722 = vunpack.c.l.b16 %v4527
        %v4723 = vunpack.c.h.b16 %v4527
        %v4724 = vunpack.c.l.b16 %v4528
        %v4725 = vunpack.c.h.b16 %v4528
        %v4726 = vunpack.c.l.b16 %v4529
        %v4727 = vunpack.c.h.b16 %v4529
        %v4728 = vunpack.c.l.b16 %v4530
        %v4729 = vunpack.c.h.b16 %v4530
        %v4730 = vunpack.c.l.b16 %v4531
        %v4731 = vunpack.c.h.b16 %v4531
        %v4732 = vunpack.c.l.b16 %v4532
        %v4733 = vunpack.c.h.b16 %v4532
        %v4734 = vunpack.c.l.b16 %v4533
        %v4735 = vunpack.c.h.b16 %v4533
        %v4736 = vunpack.c.l.b16 %v4534
        %v4737 = vunpack.c.h.b16 %v4534
        %v4738 = vunpack.c.l.b16 %v4535
        %v4739 = vunpack.c.h.b16 %v4535
        %v4740 = vunpack.c.l.b16 %v4536
        %v4741 = vunpack.c.h.b16 %v4536
        %v4742 = vunpack.c.l.b16 %v4537
        %v4743 = vunpack.c.h.b16 %v4537
        %v4744 = vunpack.c.l.b16 %v4538
        %v4745 = vunpack.c.h.b16 %v4538
        %v4746 = vunpack.c.l.b16 %v4539
        %v4747 = vunpack.c.h.b16 %v4539
        %v4748 = vunpack.c.l.b16 %v4540
        %v4749 = vunpack.c.h.b16 %v4540
        %v4750 = vunpack.c.l.b16 %v4541
        %v4751 = vunpack.c.h.b16 %v4541
        %v4752 = vunpack.c.l.b16 %v4542
        %v4753 = vunpack.c.h.b16 %v4542
        %v4754 = vunpack.c.l.b16 %v4543
        %v4755 = vunpack.c.h.b16 %v4543
        %v4756 = vunpack.c.l.b16 %v4544
        %v4757 = vunpack.c.h.b16 %v4544
        %v4758 = vunpack.c.l.b16 %v4545
        %v4759 = vunpack.c.h.b16 %v4545
        %v4760 = vunpack.c.l.b16 %v4546
        %v4761 = vunpack.c.h.b16 %v4546
        %v4762 = vunpack.c.l.b16 %v4547
        %v4763 = vunpack.c.h.b16 %v4547
        %v4764 = vunpack.c.l.b16 %v4548
        %v4765 = vunpack.c.h.b16 %v4548
        %v4766 = vunpack.c.l.b16 %v4549
        %v4767 = vunpack.c.h.b16 %v4549
        %v4768 = vunpack.c.l.b16 %v4550
        %v4769 = vunpack.c.h.b16 %v4550
        %v4770 = vunpack.c.l.b16 %v4551
        %v4771 = vunpack.c.h.b16 %v4551
        %v4772 = vunpack.c.l.b16 %v4552
        %v4773 = vunpack.c.h.b16 %v4552
        %v4774 = vunpack.c.l.b16 %v4553
        %v4775 = vunpack.c.h.b16 %v4553
        %v4776 = vunpack.c.l.b16 %v4554
        %v4777 = vunpack.c.h.b16 %v4554
        %v4778 = vunpack.c.l.b16 %v4555
        %v4779 = vunpack.c.h.b16 %v4555
        %v4780 = vunpack.c.l.b16 %v4556
        %v4781 = vunpack.c.h.b16 %v4556
        %v4782 = vunpack.c.l.b16 %v4557
        %v4783 = vunpack.c.h.b16 %v4557
        %v4784 = vunpack.c.l.b16 %v4558
        %v4785 = vunpack.c.h.b16 %v4558
        %v4786 = vunpack.c.l.b16 %v4559
        %v4787 = vunpack.c.h.b16 %v4559
        %v4788 = vpack.c.b16 %v4646, %v4644
        %v4789 = vpack.c.b16 %v4647, %v4645
        %v4790 = vpack.c.b16 %v4650, %v4648
        %v4791 = vpack.c.b16 %v4651, %v4649
        %v4792 = vpack.c.b16 %v4654, %v4652
        %v4793 = vpack.c.b16 %v4655, %v4653
        %v4794 = vpack.c.b16 %v4658, %v4656
        %v4795 = vpack.c.b16 %v4659, %v4657
        %v4796 = vpack.c.b16 %v4662, %v4660
        %v4797 = vpack.c.b16 %v4663, %v4661
        %v4798 = vpack.c.b16 %v4666, %v4664
        %v4799 = vpack.c.b16 %v4667, %v4665
        %v4800 = vpack.c.b16 %v4670, %v4668
        %v4801 = vpack.c.b16 %v4671, %v4669
        %v4802 = vpack.c.b16 %v4674, %v4672
        %v4803 = vpack.c.b16 %v4675, %v4673
        %v4804 = vpack.c.b16 %v4678, %v4676
        %v4805 = vpack.c.b16 %v4679, %v4677
        %v4806 = vpack.c.b16 %v4682, %v4680
        %v4807 = vpack.c.b16 %v4683, %v4681
        %v4808 = vpack.c.b16 %v4686, %v4684
        %v4809 = vpack.c.b16 %v4687, %v4685
        %v4810 = vpack.c.b16 %v4690, %v4688
        %v4811 = vpack.c.b16 %v4691, %v4689
        %v4812 = vpack.c.b16 %v4694, %v4692
        %v4813 = vpack.c.b16 %v4695, %v4693
        %v4814 = vpack.c.b16 %v4698, %v4696
        %v4815 = vpack.c.b16 %v4699, %v4697
        %v4816 = vpack.c.b16 %v4702, %v4700
        %v4817 = vpack.c.b16 %v4703, %v4701
        %v4818 = vpack.c.b16 %v4706, %v4704
        %v4819 = vpack.c.b16 %v4707, %v4705
        %v4820 = vpack.c.b16 %v4710, %v4708
        %v4821 = vpack.c.b16 %v4711, %v4709
        %v4822 = vpack.c.b16 %v4714, %v4712
        %v4823 = vpack.c.b16 %v4715, %v4713
        %v4824 = vpack.c.b16 %v4718, %v4716
        %v4825 = vpack.c.b16 %v4719, %v4717
        %v4826 = vpack.c.b16 %v4722, %v4720
        %v4827 = vpack.c.b16 %v4723, %v4721
        %v4828 = vpack.c.b16 %v4726, %v4724
        %v4829 = vpack.c.b16 %v4727, %v4725
        %v4830 = vpack.c.b16 %v4730, %v4728
        %v4831 = vpack.c.b16 %v4731, %v4729
        %v4832 = vpack.c.b16 %v4734, %v4732
        %v4833 = vpack.c.b16 %v4735, %v4733
        %v4834 = vpack.c.b16 %v4738, %v4736
        %v4835 = vpack.c.b16 %v4739, %v4737
        %v4836 = vpack.c.b16 %v4742, %v4740
        %v4837 = vpack.c.b16 %v4743, %v4741
        %v4838 = vpack.c.b16 %v4746, %v4744
        %v4839 = vpack.c.b16 %v4747, %v4745
        %v4840 = vpack.c.b16 %v4750, %v4748
        %v4841 = vpack.c.b16 %v4751, %v4749
        %v4842 = vpack.c.b16 %v4754, %v4752
        %v4843 = vpack.c.b16 %v4755, %v4753
        %v4844 = vpack.c.b16 %v4758, %v4756
        %v4845 = vpack.c.b16 %v4759, %v4757
        %v4846 = vpack.c.b16 %v4762, %v4760
        %v4847 = vpack.c.b16 %v4763, %v4761
        %v4848 = vpack.c.b16 %v4766, %v4764
        %v4849 = vpack.c.b16 %v4767, %v4765
        %v4850 = vpack.c.b16 %v4770, %v4768
        %v4851 = vpack.c.b16 %v4771, %v4769
        %v4852 = vpack.c.b16 %v4774, %v4772
        %v4853 = vpack.c.b16 %v4775, %v4773
        %v4854 = vpack.c.b16 %v4778, %v4776
        %v4855 = vpack.c.b16 %v4779, %v4777
        %v4856 = vpack.c.b16 %v4782, %v4780
        %v4857 = vpack.c.b16 %v4783, %v4781
        %v4858 = vpack.c.b16 %v4786, %v4784
        %v4859 = vpack.c.b16 %v4787, %v4785
        %v4932 = vsel %vm4308, %v4185, 0
        %v4934 = vsel %vm4308, %v4188, 0
        %v4936 = vsel %vm4308, %v4191, 0
        %v4938 = vsel %vm4308, %v4194, 0
        %v4940 = vsel %vm4308, %v4197, 0
        %v4942 = vsel %vm4308, %v4200, 0
        %v4944 = vsel %vm4308, %v4203, 0
        %v4946 = vsel %vm4308, %v4206, 0
        %v4948 = vsel %vm4308, %v4209, 0
        %v4950 = vsel %vm4308, %v4212, 0
        %v4952 = vsel %vm4308, %v4215, 0
        %v4954 = vsel %vm4308, %v4218, 0
        %v4956 = vsel %vm4308, %v4221, 0
        %v4958 = vsel %vm4308, %v4224, 0
        %v4961 = vsel %vm4308, %v4273, 0
        %v4963 = vsel %vm4308, %v4179, 0
        %4965 = vmatprep.subr.bf16.mxu0 %v4789
        %4966 = vmatpush1.bf16.msra.mxu0 %v4788
        %4967 = vmatprep.subr.bf16.mxu0 %v4791
        %4968 = vmatpush1.bf16.msra.mxu0 %v4790
        %4969 = vmatprep.subr.bf16.mxu0 %v4793
        %4970 = vmatpush1.bf16.msra.mxu0 %v4792
        %4971 = vmatprep.subr.bf16.mxu0 %v4795
        %4972 = vmatpush1.bf16.msra.mxu0 %v4794
        %4973 = vmatprep.subr.bf16.mxu0 %v4797
        %4974 = vmatpush1.bf16.msra.mxu0 %v4796
        %4975 = vmatprep.subr.bf16.mxu0 %v4799
        %4976 = vmatpush1.bf16.msra.mxu0 %v4798
        %4977 = vmatprep.subr.bf16.mxu0 %v4801
        %4978 = vmatpush1.bf16.msra.mxu0 %v4800
        %4979 = vmatprep.subr.bf16.mxu0 %v4803
        %4980 = vmatpush1.bf16.msra.mxu0 %v4802
        %4981 = vmatprep.subr.bf16.mxu0 %v4805
        %4982 = vmatpush1.bf16.msra.mxu0 %v4804
        %4983 = vmatprep.subr.bf16.mxu0 %v4807
        %4984 = vmatpush1.bf16.msra.mxu0 %v4806
        %4985 = vmatprep.subr.bf16.mxu0 %v4809
        %4986 = vmatpush1.bf16.msra.mxu0 %v4808
        %4987 = vmatprep.subr.bf16.mxu0 %v4811
        %4988 = vmatpush1.bf16.msra.mxu0 %v4810
        %4989 = vmatprep.subr.bf16.mxu0 %v4813
        %4990 = vmatpush1.bf16.msra.mxu0 %v4812
        %4991 = vmatprep.subr.bf16.mxu0 %v4815
        %4992 = vmatpush1.bf16.msra.mxu0 %v4814
        %4993 = vmatprep.subr.bf16.mxu0 %v4817
        %4994 = vmatpush1.bf16.msra.mxu0 %v4816
        %4995 = vmatprep.subr.bf16.mxu0 %v4819
        %4996 = vmatpush1.bf16.msra.mxu0 %v4818
        %4997 = vmatprep.mubr.bf16.mxu0 %v4359
        %4998 = vmatmul.mubr.bf16.gmra.mrb[0].mxu0 %v4310
        %v4999 = vpop.f32.mrb[0].mxu0
        %v5000 = vadd.f32 %v4565, %v4999
        %v5001 = vpop.f32.mrb[0].mxu0
        %v5002 = vadd.f32 %v4569, %v5001
        %v5003 = vpop.f32.mrb[0].mxu0
        %v5004 = vadd.f32 %v4565, %v5003
        %v5005 = vpop.f32.mrb[0].mxu0
        %v5006 = vadd.f32 %v4569, %v5005
        %5007 = vmatprep.mubr.bf16.mxu0 %v4363
        %5008 = vmatmul.mubr.bf16.gmra.mrb[0].mxu0 %v4313
        %v5009 = vpop.f32.mrb[0].mxu0
        %v5010 = vadd.f32 %v4565, %v5009
        %v5011 = vpop.f32.mrb[0].mxu0
        %v5012 = vadd.f32 %v4569, %v5011
        %v5013 = vpop.f32.mrb[0].mxu0
        %v5014 = vadd.f32 %v4565, %v5013
        %v5015 = vpop.f32.mrb[0].mxu0
        %v5016 = vadd.f32 %v4569, %v5015
        %5017 = vmatprep.mubr.bf16.mxu0 %v4367
        %5018 = vmatmul.mubr.bf16.gmra.mrb[0].mxu0 %v4316
        %v5019 = vpop.f32.mrb[0].mxu0
        %v5020 = vadd.f32 %v4565, %v5019
        %v5021 = vpop.f32.mrb[0].mxu0
        %v5022 = vadd.f32 %v4569, %v5021
        %v5023 = vpop.f32.mrb[0].mxu0
        %v5024 = vadd.f32 %v4565, %v5023
        %v5025 = vpop.f32.mrb[0].mxu0
        %v5026 = vadd.f32 %v4569, %v5025
        %5027 = vmatprep.mubr.bf16.mxu0 %v4371
        %5028 = vmatmul.mubr.bf16.gmra.mrb[0].mxu0 %v4319
        %v5029 = vpop.f32.mrb[0].mxu0
        %v5030 = vadd.f32 %v4565, %v5029
        %v5031 = vpop.f32.mrb[0].mxu0
        %v5032 = vadd.f32 %v4569, %v5031
        %v5033 = vpop.f32.mrb[0].mxu0
        %v5034 = vadd.f32 %v4565, %v5033
        %v5035 = vpop.f32.mrb[0].mxu0
        %v5036 = vadd.f32 %v4569, %v5035
        %5037 = vmatprep.mubr.bf16.mxu0 %v4375
        %5038 = vmatmul.mubr.bf16.gmra.mrb[0].mxu0 %v4322
        %v5039 = vpop.f32.mrb[0].mxu0
        %v5040 = vadd.f32 %v4565, %v5039
        %v5041 = vpop.f32.mrb[0].mxu0
        %v5042 = vadd.f32 %v4569, %v5041
        %v5043 = vpop.f32.mrb[0].mxu0
        %v5044 = vadd.f32 %v4565, %v5043
        %v5045 = vpop.f32.mrb[0].mxu0
        %v5046 = vadd.f32 %v4569, %v5045
        %5047 = vmatprep.mubr.bf16.mxu0 %v4379
        %5048 = vmatmul.mubr.bf16.gmra.mrb[0].mxu0 %v4325
        %v5049 = vpop.f32.mrb[0].mxu0
        %v5050 = vadd.f32 %v4565, %v5049
        %v5051 = vpop.f32.mrb[0].mxu0
        %v5052 = vadd.f32 %v4569, %v5051
        %v5053 = vpop.f32.mrb[0].mxu0
        %v5054 = vadd.f32 %v4565, %v5053
        %v5055 = vpop.f32.mrb[0].mxu0
        %v5056 = vadd.f32 %v4569, %v5055
        %5057 = vmatprep.mubr.bf16.mxu0 %v4383
        %5058 = vmatmul.mubr.bf16.gmra.mrb[0].mxu0 %v4328
        %v5059 = vpop.f32.mrb[0].mxu0
        %v5060 = vadd.f32 %v4565, %v5059
        %v5061 = vpop.f32.mrb[0].mxu0
        %v5062 = vadd.f32 %v4569, %v5061
        %v5063 = vpop.f32.mrb[0].mxu0
        %v5064 = vadd.f32 %v4565, %v5063
        %v5065 = vpop.f32.mrb[0].mxu0
        %v5066 = vadd.f32 %v4569, %v5065
        %5067 = vmatprep.mubr.bf16.mxu0 %v4387
        %5068 = vmatmul.mubr.bf16.gmra.mrb[0].mxu0 %v4331
        %v5069 = vpop.f32.mrb[0].mxu0
        %v5070 = vadd.f32 %v4565, %v5069
        %v5071 = vpop.f32.mrb[0].mxu0
        %v5072 = vadd.f32 %v4569, %v5071
        %v5073 = vpop.f32.mrb[0].mxu0
        %v5074 = vadd.f32 %v4565, %v5073
        %v5075 = vpop.f32.mrb[0].mxu0
        %v5076 = vadd.f32 %v4569, %v5075
        %5077 = vmatprep.mubr.bf16.mxu0 %v4391
        %5078 = vmatmul.mubr.bf16.gmra.mrb[0].mxu0 %v4334
        %v5079 = vpop.f32.mrb[0].mxu0
        %v5080 = vadd.f32 %v4565, %v5079
        %v5081 = vpop.f32.mrb[0].mxu0
        %v5082 = vadd.f32 %v4569, %v5081
        %v5083 = vpop.f32.mrb[0].mxu0
        %v5084 = vadd.f32 %v4565, %v5083
        %v5085 = vpop.f32.mrb[0].mxu0
        %v5086 = vadd.f32 %v4569, %v5085
        %5087 = vmatprep.mubr.bf16.mxu0 %v4395
        %5088 = vmatmul.mubr.bf16.gmra.mrb[0].mxu0 %v4337
        %v5089 = vpop.f32.mrb[0].mxu0
        %v5090 = vadd.f32 %v4565, %v5089
        %v5091 = vpop.f32.mrb[0].mxu0
        %v5092 = vadd.f32 %v4569, %v5091
        %v5093 = vpop.f32.mrb[0].mxu0
        %v5094 = vadd.f32 %v4565, %v5093
        %v5095 = vpop.f32.mrb[0].mxu0
        %v5096 = vadd.f32 %v4569, %v5095
        %5097 = vmatprep.mubr.bf16.mxu0 %v4399
        %5098 = vmatmul.mubr.bf16.gmra.mrb[0].mxu0 %v4340
        %v5099 = vpop.f32.mrb[0].mxu0
        %v5100 = vadd.f32 %v4565, %v5099
        %v5101 = vpop.f32.mrb[0].mxu0
        %v5102 = vadd.f32 %v4569, %v5101
        %v5103 = vpop.f32.mrb[0].mxu0
        %v5104 = vadd.f32 %v4565, %v5103
        %v5105 = vpop.f32.mrb[0].mxu0
        %v5106 = vadd.f32 %v4569, %v5105
        %5107 = vmatprep.mubr.bf16.mxu0 %v4403
        %5108 = vmatmul.mubr.bf16.gmra.mrb[0].mxu0 %v4343
        %v5109 = vpop.f32.mrb[0].mxu0
        %v5110 = vadd.f32 %v4565, %v5109
        %v5111 = vpop.f32.mrb[0].mxu0
        %v5112 = vadd.f32 %v4569, %v5111
        %v5113 = vpop.f32.mrb[0].mxu0
        %v5114 = vadd.f32 %v4565, %v5113
        %v5115 = vpop.f32.mrb[0].mxu0
        %v5116 = vadd.f32 %v4569, %v5115
        %5117 = vmatprep.mubr.bf16.mxu0 %v4407
        %5118 = vmatmul.mubr.bf16.gmra.mrb[0].mxu0 %v4346
        %v5119 = vpop.f32.mrb[0].mxu0
        %v5120 = vadd.f32 %v4565, %v5119
        %v5121 = vpop.f32.mrb[0].mxu0
        %v5122 = vadd.f32 %v4569, %v5121
        %v5123 = vpop.f32.mrb[0].mxu0
        %v5124 = vadd.f32 %v4565, %v5123
        %v5125 = vpop.f32.mrb[0].mxu0
        %v5126 = vadd.f32 %v4569, %v5125
        %5127 = vmatprep.mubr.bf16.mxu0 %v4411
        %5128 = vmatmul.mubr.bf16.gmra.mrb[0].mxu0 %v4349
        %v5129 = vpop.f32.mrb[0].mxu0
        %v5130 = vadd.f32 %v4565, %v5129
        %v5131 = vpop.f32.mrb[0].mxu0
        %v5132 = vadd.f32 %v4569, %v5131
        %v5133 = vpop.f32.mrb[0].mxu0
        %v5134 = vadd.f32 %v4565, %v5133
        %v5135 = vpop.f32.mrb[0].mxu0
        %v5136 = vadd.f32 %v4569, %v5135
        %5137 = vmatprep.mubr.bf16.mxu0 %v4415
        %5138 = vmatmul.mubr.bf16.gmra.mrb[0].mxu0 %v4352
        %v5139 = vpop.f32.mrb[0].mxu0
        %v5140 = vadd.f32 %v4565, %v5139
        %v5141 = vpop.f32.mrb[0].mxu0
        %v5142 = vadd.f32 %v4569, %v5141
        %v5143 = vpop.f32.mrb[0].mxu0
        %v5144 = vadd.f32 %v4565, %v5143
        %v5145 = vpop.f32.mrb[0].mxu0
        %v5146 = vadd.f32 %v4569, %v5145
        %5147 = vmatprep.mubr.bf16.mxu0 %v4419
        %5148 = vmatmul.mubr.bf16.gmra.mrb[0].mxu0 %v4355
        %v5149 = vpop.f32.mrb[0].mxu0
        %v5150 = vadd.f32 %v4565, %v5149
        %v5151 = vpop.f32.mrb[0].mxu0
        %v5152 = vadd.f32 %v4569, %v5151
        %v5153 = vpop.f32.mrb[0].mxu0
        %v5154 = vadd.f32 %v4565, %v5153
        %v5155 = vpop.f32.mrb[0].mxu0
        %v5156 = vadd.f32 %v4569, %v5155
        %5157 = vdwg.mxu0
        %5158 = vmatprep.subr.bf16.mxu0 %v4821
        %5159 = vmatpush1.bf16.msra.mxu0 %v4820
        %5160 = vmatprep.subr.bf16.mxu0 %v4823
        %5161 = vmatpush1.bf16.msra.mxu0 %v4822
        %5162 = vmatprep.subr.bf16.mxu0 %v4825
        %5163 = vmatpush1.bf16.msra.mxu0 %v4824
        %5164 = vmatprep.subr.bf16.mxu0 %v4827
        %5165 = vmatpush1.bf16.msra.mxu0 %v4826
        %5166 = vmatprep.subr.bf16.mxu0 %v4829
        %5167 = vmatpush1.bf16.msra.mxu0 %v4828
        %5168 = vmatprep.subr.bf16.mxu0 %v4831
        %5169 = vmatpush1.bf16.msra.mxu0 %v4830
        %5170 = vmatprep.subr.bf16.mxu0 %v4833
        %5171 = vmatpush1.bf16.msra.mxu0 %v4832
        %5172 = vmatprep.subr.bf16.mxu0 %v4835
        %5173 = vmatpush1.bf16.msra.mxu0 %v4834
        %5174 = vmatprep.subr.bf16.mxu0 %v4837
        %5175 = vmatpush1.bf16.msra.mxu0 %v4836
        %5176 = vmatprep.subr.bf16.mxu0 %v4839
        %5177 = vmatpush1.bf16.msra.mxu0 %v4838
        %5178 = vmatprep.subr.bf16.mxu0 %v4841
        %5179 = vmatpush1.bf16.msra.mxu0 %v4840
        %5180 = vmatprep.subr.bf16.mxu0 %v4843
        %5181 = vmatpush1.bf16.msra.mxu0 %v4842
        %5182 = vmatprep.subr.bf16.mxu0 %v4845
        %5183 = vmatpush1.bf16.msra.mxu0 %v4844
        %5184 = vmatprep.subr.bf16.mxu0 %v4847
        %5185 = vmatpush1.bf16.msra.mxu0 %v4846
        %5186 = vmatprep.subr.bf16.mxu0 %v4849
        %5187 = vmatpush1.bf16.msra.mxu0 %v4848
        %5188 = vmatprep.subr.bf16.mxu0 %v4851
        %5189 = vmatpush1.bf16.msra.mxu0 %v4850
        %5190 = vmatprep.mubr.bf16.mxu0 %v4316
        %5191 = vmatmul.mubr.bf16.gmra.mrb[0].mxu0 %v4423
        %v5192 = vpop.f32.mrb[0].mxu0
        %v5193 = vadd.f32 %v5000, %v5192
        %v5194 = vpop.f32.mrb[0].mxu0
        %v5195 = vadd.f32 %v5002, %v5194
        %v5196 = vpop.f32.mrb[0].mxu0
        %v5197 = vadd.f32 %v5004, %v5196
        %v5198 = vpop.f32.mrb[0].mxu0
        %v5199 = vadd.f32 %v5006, %v5198
        %5200 = vmatprep.mubr.bf16.mxu0 %v4319
        %5201 = vmatmul.mubr.bf16.gmra.mrb[0].mxu0 %v4427
        %v5202 = vpop.f32.mrb[0].mxu0
        %v5203 = vadd.f32 %v5010, %v5202
        %v5204 = vpop.f32.mrb[0].mxu0
        %v5205 = vadd.f32 %v5012, %v5204
        %v5206 = vpop.f32.mrb[0].mxu0
        %v5207 = vadd.f32 %v5014, %v5206
        %v5208 = vpop.f32.mrb[0].mxu0
        %v5209 = vadd.f32 %v5016, %v5208
        %5210 = vmatprep.mubr.bf16.mxu0 %v4322
        %5211 = vmatmul.mubr.bf16.gmra.mrb[0].mxu0 %v4431
        %v5212 = vpop.f32.mrb[0].mxu0
        %v5213 = vadd.f32 %v5020, %v5212
        %v5214 = vpop.f32.mrb[0].mxu0
        %v5215 = vadd.f32 %v5022, %v5214
        %v5216 = vpop.f32.mrb[0].mxu0
        %v5217 = vadd.f32 %v5024, %v5216
        %v5218 = vpop.f32.mrb[0].mxu0
        %v5219 = vadd.f32 %v5026, %v5218
        %5220 = vmatprep.mubr.bf16.mxu0 %v4325
        %5221 = vmatmul.mubr.bf16.gmra.mrb[0].mxu0 %v4435
        %v5222 = vpop.f32.mrb[0].mxu0
        %v5223 = vadd.f32 %v5030, %v5222
        %v5224 = vpop.f32.mrb[0].mxu0
        %v5225 = vadd.f32 %v5032, %v5224
        %v5226 = vpop.f32.mrb[0].mxu0
        %v5227 = vadd.f32 %v5034, %v5226
        %v5228 = vpop.f32.mrb[0].mxu0
        %v5229 = vadd.f32 %v5036, %v5228
        %5230 = vmatprep.mubr.bf16.mxu0 %v4328
        %5231 = vmatmul.mubr.bf16.gmra.mrb[0].mxu0 %v4439
        %v5232 = vpop.f32.mrb[0].mxu0
        %v5233 = vadd.f32 %v5040, %v5232
        %v5234 = vpop.f32.mrb[0].mxu0
        %v5235 = vadd.f32 %v5042, %v5234
        %v5236 = vpop.f32.mrb[0].mxu0
        %v5237 = vadd.f32 %v5044, %v5236
        %v5238 = vpop.f32.mrb[0].mxu0
        %v5239 = vadd.f32 %v5046, %v5238
        %5240 = vmatprep.mubr.bf16.mxu0 %v4331
        %5241 = vmatmul.mubr.bf16.gmra.mrb[0].mxu0 %v4443
        %v5242 = vpop.f32.mrb[0].mxu0
        %v5243 = vadd.f32 %v5050, %v5242
        %v5244 = vpop.f32.mrb[0].mxu0
        %v5245 = vadd.f32 %v5052, %v5244
        %v5246 = vpop.f32.mrb[0].mxu0
        %v5247 = vadd.f32 %v5054, %v5246
        %v5248 = vpop.f32.mrb[0].mxu0
        %v5249 = vadd.f32 %v5056, %v5248
        %5250 = vmatprep.mubr.bf16.mxu0 %v4334
        %5251 = vmatmul.mubr.bf16.gmra.mrb[0].mxu0 %v4447
        %v5252 = vpop.f32.mrb[0].mxu0
        %v5253 = vadd.f32 %v5060, %v5252
        %v5254 = vpop.f32.mrb[0].mxu0
        %v5255 = vadd.f32 %v5062, %v5254
        %v5256 = vpop.f32.mrb[0].mxu0
        %v5257 = vadd.f32 %v5064, %v5256
        %v5258 = vpop.f32.mrb[0].mxu0
        %v5259 = vadd.f32 %v5066, %v5258
        %5260 = vmatprep.mubr.bf16.mxu0 %v4337
        %5261 = vmatmul.mubr.bf16.gmra.mrb[0].mxu0 %v4451
        %v5262 = vpop.f32.mrb[0].mxu0
        %v5263 = vadd.f32 %v5070, %v5262
        %v5264 = vpop.f32.mrb[0].mxu0
        %v5265 = vadd.f32 %v5072, %v5264
        %v5266 = vpop.f32.mrb[0].mxu0
        %v5267 = vadd.f32 %v5074, %v5266
        %v5268 = vpop.f32.mrb[0].mxu0
        %v5269 = vadd.f32 %v5076, %v5268
        %5270 = vmatprep.mubr.bf16.mxu0 %v4340
        %5271 = vmatmul.mubr.bf16.gmra.mrb[0].mxu0 %v4455
        %v5272 = vpop.f32.mrb[0].mxu0
        %v5273 = vadd.f32 %v5080, %v5272
        %v5274 = vpop.f32.mrb[0].mxu0
        %v5275 = vadd.f32 %v5082, %v5274
        %v5276 = vpop.f32.mrb[0].mxu0
        %v5277 = vadd.f32 %v5084, %v5276
        %v5278 = vpop.f32.mrb[0].mxu0
        %v5279 = vadd.f32 %v5086, %v5278
        %5280 = vmatprep.mubr.bf16.mxu0 %v4343
        %5281 = vmatmul.mubr.bf16.gmra.mrb[0].mxu0 %v4459
        %v5282 = vpop.f32.mrb[0].mxu0
        %v5283 = vadd.f32 %v5090, %v5282
        %v5284 = vpop.f32.mrb[0].mxu0
        %v5285 = vadd.f32 %v5092, %v5284
        %v5286 = vpop.f32.mrb[0].mxu0
        %v5287 = vadd.f32 %v5094, %v5286
        %v5288 = vpop.f32.mrb[0].mxu0
        %v5289 = vadd.f32 %v5096, %v5288
        %5290 = vmatprep.mubr.bf16.mxu0 %v4346
        %5291 = vmatmul.mubr.bf16.gmra.mrb[0].mxu0 %v4463
        %v5292 = vpop.f32.mrb[0].mxu0
        %v5293 = vadd.f32 %v5100, %v5292
        %v5294 = vpop.f32.mrb[0].mxu0
        %v5295 = vadd.f32 %v5102, %v5294
        %v5296 = vpop.f32.mrb[0].mxu0
        %v5297 = vadd.f32 %v5104, %v5296
        %v5298 = vpop.f32.mrb[0].mxu0
        %v5299 = vadd.f32 %v5106, %v5298
        %5300 = vmatprep.mubr.bf16.mxu0 %v4349
        %5301 = vmatmul.mubr.bf16.gmra.mrb[0].mxu0 %v4467
        %v5302 = vpop.f32.mrb[0].mxu0
        %v5303 = vadd.f32 %v5110, %v5302
        %v5304 = vpop.f32.mrb[0].mxu0
        %v5305 = vadd.f32 %v5112, %v5304
        %v5306 = vpop.f32.mrb[0].mxu0
        %v5307 = vadd.f32 %v5114, %v5306
        %v5308 = vpop.f32.mrb[0].mxu0
        %v5309 = vadd.f32 %v5116, %v5308
        %5310 = vmatprep.mubr.bf16.mxu0 %v4352
        %5311 = vmatmul.mubr.bf16.gmra.mrb[0].mxu0 %v4471
        %v5312 = vpop.f32.mrb[0].mxu0
        %v5313 = vadd.f32 %v5120, %v5312
        %v5314 = vpop.f32.mrb[0].mxu0
        %v5315 = vadd.f32 %v5122, %v5314
        %v5316 = vpop.f32.mrb[0].mxu0
        %v5317 = vadd.f32 %v5124, %v5316
        %v5318 = vpop.f32.mrb[0].mxu0
        %v5319 = vadd.f32 %v5126, %v5318
        %5320 = vmatprep.mubr.bf16.mxu0 %v4355
        %5321 = vmatmul.mubr.bf16.gmra.mrb[0].mxu0 %v4475
        %v5322 = vpop.f32.mrb[0].mxu0
        %v5323 = vadd.f32 %v5130, %v5322
        %v5324 = vpop.f32.mrb[0].mxu0
        %v5325 = vadd.f32 %v5132, %v5324
        %v5326 = vpop.f32.mrb[0].mxu0
        %v5327 = vadd.f32 %v5134, %v5326
        %v5328 = vpop.f32.mrb[0].mxu0
        %v5329 = vadd.f32 %v5136, %v5328
        %5330 = vmatprep.mubr.bf16.mxu0 %v4486
        %5331 = vmatmul.mubr.bf16.gmra.mrb[0].mxu0 %v4479
        %v5332 = vpop.f32.mrb[0].mxu0
        %v5333 = vadd.f32 %v5140, %v5332
        %v5334 = vpop.f32.mrb[0].mxu0
        %v5335 = vadd.f32 %v5142, %v5334
        %v5336 = vpop.f32.mrb[0].mxu0
        %v5337 = vadd.f32 %v5144, %v5336
        %v5338 = vpop.f32.mrb[0].mxu0
        %v5339 = vadd.f32 %v5146, %v5338
        %5340 = vmatprep.mubr.bf16.mxu0 %v4310
        %5341 = vmatmul.mubr.bf16.gmra.mrb[0].mxu0 %v4483
        %v5342 = vpop.f32.mrb[0].mxu0
        %v5343 = vadd.f32 %v5150, %v5342
        %v5344 = vpop.f32.mrb[0].mxu0
        %v5345 = vadd.f32 %v5152, %v5344
        %v5346 = vpop.f32.mrb[0].mxu0
        %v5347 = vadd.f32 %v5154, %v5346
        %v5348 = vpop.f32.mrb[0].mxu0
        %v5349 = vadd.f32 %v5156, %v5348
        %5350 = vdwg.mxu0
        %5351 = vmatprep.subr.bf16.mxu0 %v4853
        %5352 = vmatpush1.bf16.msra.mxu0 %v4852
        %5353 = vmatprep.subr.bf16.mxu0 %v4855
        %5354 = vmatpush1.bf16.msra.mxu0 %v4854
        %5355 = vmatprep.subr.bf16.mxu0 %v4857
        %5356 = vmatpush1.bf16.msra.mxu0 %v4856
        %5357 = vmatprep.subr.bf16.mxu0 %v4859
        %5358 = vmatpush1.bf16.msra.mxu0 %v4858
        %5359 = vmatprep.subr.bf16.mxu0 0
        %5360 = vmatpush1.bf16.msra.mxu0 0
        %5361 = vmatprep.subr.bf16.mxu0 0
        %5362 = vmatpush1.bf16.msra.mxu0 0
        %5363 = vmatprep.subr.bf16.mxu0 0
        %5364 = vmatpush1.bf16.msra.mxu0 0
        %5365 = vmatprep.subr.bf16.mxu0 0
        %5366 = vmatpush1.bf16.msra.mxu0 0
        %5367 = vmatprep.subr.bf16.mxu0 0
        %5368 = vmatpush1.bf16.msra.mxu0 0
        %5369 = vmatprep.subr.bf16.mxu0 0
        %5370 = vmatpush1.bf16.msra.mxu0 0
        %5371 = vmatprep.subr.bf16.mxu0 0
        %5372 = vmatpush1.bf16.msra.mxu0 0
        %5373 = vmatprep.subr.bf16.mxu0 0
        %5374 = vmatpush1.bf16.msra.mxu0 0
        %5375 = vmatprep.subr.bf16.mxu0 0
        %5376 = vmatpush1.bf16.msra.mxu0 0
        %5377 = vmatprep.subr.bf16.mxu0 0
        %5378 = vmatpush1.bf16.msra.mxu0 0
        %5379 = vmatprep.subr.bf16.mxu0 0
        %5380 = vmatpush1.bf16.msra.mxu0 0
        %5381 = vmatprep.subr.bf16.mxu0 0
        %5382 = vmatpush1.bf16.msra.mxu0 0
        %5383 = vmatprep.mubr.bf16.mxu0 0
        %5384 = vmatmul.mubr.bf16.gmra.mrb[0].mxu0 %v4932
        %v5385 = vpop.f32.mrb[0].mxu0
        %v5386 = vadd.f32 %v5193, %v5385
        %v5387 = vpop.f32.mrb[0].mxu0
        %v5388 = vadd.f32 %v5195, %v5387
        %v5389 = vpop.f32.mrb[0].mxu0
        %v5390 = vadd.f32 %v5197, %v5389
        %v5391 = vpop.f32.mrb[0].mxu0
        %v5392 = vadd.f32 %v5199, %v5391
        %5393 = vmatprep.mubr.bf16.mxu0 0
        %5394 = vmatmul.mubr.bf16.gmra.mrb[0].mxu0 %v4934
        %v5395 = vpop.f32.mrb[0].mxu0
        %v5396 = vadd.f32 %v5203, %v5395
        %v5397 = vpop.f32.mrb[0].mxu0
        %v5398 = vadd.f32 %v5205, %v5397
        %v5399 = vpop.f32.mrb[0].mxu0
        %v5400 = vadd.f32 %v5207, %v5399
        %v5401 = vpop.f32.mrb[0].mxu0
        %v5402 = vadd.f32 %v5209, %v5401
        %5403 = vmatprep.mubr.bf16.mxu0 0
        %5404 = vmatmul.mubr.bf16.gmra.mrb[0].mxu0 %v4936
        %v5405 = vpop.f32.mrb[0].mxu0
        %v5406 = vadd.f32 %v5213, %v5405
        %v5407 = vpop.f32.mrb[0].mxu0
        %v5408 = vadd.f32 %v5215, %v5407
        %v5409 = vpop.f32.mrb[0].mxu0
        %v5410 = vadd.f32 %v5217, %v5409
        %v5411 = vpop.f32.mrb[0].mxu0
        %v5412 = vadd.f32 %v5219, %v5411
        %5413 = vmatprep.mubr.bf16.mxu0 0
        %5414 = vmatmul.mubr.bf16.gmra.mrb[0].mxu0 %v4938
        %v5415 = vpop.f32.mrb[0].mxu0
        %v5416 = vadd.f32 %v5223, %v5415
        %v5417 = vpop.f32.mrb[0].mxu0
        %v5418 = vadd.f32 %v5225, %v5417
        %v5419 = vpop.f32.mrb[0].mxu0
        %v5420 = vadd.f32 %v5227, %v5419
        %v5421 = vpop.f32.mrb[0].mxu0
        %v5422 = vadd.f32 %v5229, %v5421
        %5423 = vmatprep.mubr.bf16.mxu0 0
        %5424 = vmatmul.mubr.bf16.gmra.mrb[0].mxu0 %v4940
        %v5425 = vpop.f32.mrb[0].mxu0
        %v5426 = vadd.f32 %v5233, %v5425
        %v5427 = vpop.f32.mrb[0].mxu0
        %v5428 = vadd.f32 %v5235, %v5427
        %v5429 = vpop.f32.mrb[0].mxu0
        %v5430 = vadd.f32 %v5237, %v5429
        %v5431 = vpop.f32.mrb[0].mxu0
        %v5432 = vadd.f32 %v5239, %v5431
        %5433 = vmatprep.mubr.bf16.mxu0 0
        %5434 = vmatmul.mubr.bf16.gmra.mrb[0].mxu0 %v4942
        %v5435 = vpop.f32.mrb[0].mxu0
        %v5436 = vadd.f32 %v5243, %v5435
        %v5437 = vpop.f32.mrb[0].mxu0
        %v5438 = vadd.f32 %v5245, %v5437
        %v5439 = vpop.f32.mrb[0].mxu0
        %v5440 = vadd.f32 %v5247, %v5439
        %v5441 = vpop.f32.mrb[0].mxu0
        %v5442 = vadd.f32 %v5249, %v5441
        %5443 = vmatprep.mubr.bf16.mxu0 0
        %5444 = vmatmul.mubr.bf16.gmra.mrb[0].mxu0 %v4944
        %v5445 = vpop.f32.mrb[0].mxu0
        %v5446 = vadd.f32 %v5253, %v5445
        %v5447 = vpop.f32.mrb[0].mxu0
        %v5448 = vadd.f32 %v5255, %v5447
        %v5449 = vpop.f32.mrb[0].mxu0
        %v5450 = vadd.f32 %v5257, %v5449
        %v5451 = vpop.f32.mrb[0].mxu0
        %v5452 = vadd.f32 %v5259, %v5451
        %5453 = vmatprep.mubr.bf16.mxu0 0
        %5454 = vmatmul.mubr.bf16.gmra.mrb[0].mxu0 %v4946
        %v5455 = vpop.f32.mrb[0].mxu0
        %v5456 = vadd.f32 %v5263, %v5455
        %v5457 = vpop.f32.mrb[0].mxu0
        %v5458 = vadd.f32 %v5265, %v5457
        %v5459 = vpop.f32.mrb[0].mxu0
        %v5460 = vadd.f32 %v5267, %v5459
        %v5461 = vpop.f32.mrb[0].mxu0
        %v5462 = vadd.f32 %v5269, %v5461
        %5463 = vmatprep.mubr.bf16.mxu0 0
        %5464 = vmatmul.mubr.bf16.gmra.mrb[0].mxu0 %v4948
        %v5465 = vpop.f32.mrb[0].mxu0
        %v5466 = vadd.f32 %v5273, %v5465
        %v5467 = vpop.f32.mrb[0].mxu0
        %v5468 = vadd.f32 %v5275, %v5467
        %v5469 = vpop.f32.mrb[0].mxu0
        %v5470 = vadd.f32 %v5277, %v5469
        %v5471 = vpop.f32.mrb[0].mxu0
        %v5472 = vadd.f32 %v5279, %v5471
        %5473 = vmatprep.mubr.bf16.mxu0 0
        %5474 = vmatmul.mubr.bf16.gmra.mrb[0].mxu0 %v4950
        %v5475 = vpop.f32.mrb[0].mxu0
        %v5476 = vadd.f32 %v5283, %v5475
        %v5477 = vpop.f32.mrb[0].mxu0
        %v5478 = vadd.f32 %v5285, %v5477
        %v5479 = vpop.f32.mrb[0].mxu0
        %v5480 = vadd.f32 %v5287, %v5479
        %v5481 = vpop.f32.mrb[0].mxu0
        %v5482 = vadd.f32 %v5289, %v5481
        %5483 = vmatprep.mubr.bf16.mxu0 0
        %5484 = vmatmul.mubr.bf16.gmra.mrb[0].mxu0 %v4952
        %v5485 = vpop.f32.mrb[0].mxu0
        %v5486 = vadd.f32 %v5293, %v5485
        %v5487 = vpop.f32.mrb[0].mxu0
        %v5488 = vadd.f32 %v5295, %v5487
        %v5489 = vpop.f32.mrb[0].mxu0
        %v5490 = vadd.f32 %v5297, %v5489
        %v5491 = vpop.f32.mrb[0].mxu0
        %v5492 = vadd.f32 %v5299, %v5491
        %5493 = vmatprep.mubr.bf16.mxu0 0
        %5494 = vmatmul.mubr.bf16.gmra.mrb[0].mxu0 %v4954
        %v5495 = vpop.f32.mrb[0].mxu0
        %v5496 = vadd.f32 %v5303, %v5495
        %v5497 = vpop.f32.mrb[0].mxu0
        %v5498 = vadd.f32 %v5305, %v5497
        %v5499 = vpop.f32.mrb[0].mxu0
        %v5500 = vadd.f32 %v5307, %v5499
        %v5501 = vpop.f32.mrb[0].mxu0
        %v5502 = vadd.f32 %v5309, %v5501
        %5503 = vmatprep.mubr.bf16.mxu0 0
        %5504 = vmatmul.mubr.bf16.gmra.mrb[0].mxu0 %v4956
        %v5505 = vpop.f32.mrb[0].mxu0
        %v5506 = vadd.f32 %v5313, %v5505
        %v5507 = vpop.f32.mrb[0].mxu0
        %v5508 = vadd.f32 %v5315, %v5507
        %v5509 = vpop.f32.mrb[0].mxu0
        %v5510 = vadd.f32 %v5317, %v5509
        %v5511 = vpop.f32.mrb[0].mxu0
        %v5512 = vadd.f32 %v5319, %v5511
        %5513 = vmatprep.mubr.bf16.mxu0 0
        %5514 = vmatmul.mubr.bf16.gmra.mrb[0].mxu0 %v4958
        %v5515 = vpop.f32.mrb[0].mxu0
        %v5516 = vadd.f32 %v5323, %v5515
        %v5517 = vpop.f32.mrb[0].mxu0
        %v5518 = vadd.f32 %v5325, %v5517
        %v5519 = vpop.f32.mrb[0].mxu0
        %v5520 = vadd.f32 %v5327, %v5519
        %v5521 = vpop.f32.mrb[0].mxu0
        %v5522 = vadd.f32 %v5329, %v5521
        %5523 = vmatprep.mubr.bf16.mxu0 0
        %5524 = vmatmul.mubr.bf16.gmra.mrb[0].mxu0 %v4961
        %v5525 = vpop.f32.mrb[0].mxu0
        %v5526 = vadd.f32 %v5333, %v5525
        %v5527 = vpop.f32.mrb[0].mxu0
        %v5528 = vadd.f32 %v5335, %v5527
        %v5529 = vpop.f32.mrb[0].mxu0
        %v5530 = vadd.f32 %v5337, %v5529
        %v5531 = vpop.f32.mrb[0].mxu0
        %v5532 = vadd.f32 %v5339, %v5531
        %5533 = vmatprep.mubr.bf16.mxu0 0
        %5534 = vmatmul.mubr.bf16.gmra.mrb[0].mxu0 %v4963
        %v5535 = vpop.f32.mrb[0].mxu0
        %v5536 = vadd.f32 %v5343, %v5535
        %v5537 = vpop.f32.mrb[0].mxu0
        %v5538 = vadd.f32 %v5345, %v5537
        %v5539 = vpop.f32.mrb[0].mxu0
        %v5540 = vadd.f32 %v5347, %v5539
        %v5541 = vpop.f32.mrb[0].mxu0
        %v5542 = vadd.f32 %v5349, %v5541
        %5543 = vdwg.mxu0
        %v5544 = vmax.f32 %v5386, 0.0
        %v5545 = vmax.f32 %v5388, 0.0
        %v5546 = vmax.f32 %v5390, 0.0
        %v5547 = vmax.f32 %v5392, 0.0
        %v5548 = vmax.f32 %v5396, 0.0
        %v5549 = vmax.f32 %v5398, 0.0
        %v5550 = vmax.f32 %v5400, 0.0
        %v5551 = vmax.f32 %v5402, 0.0
        %v5552 = vmax.f32 %v5406, 0.0
        %v5553 = vmax.f32 %v5408, 0.0
        %v5554 = vmax.f32 %v5410, 0.0
        %v5555 = vmax.f32 %v5412, 0.0
        %v5556 = vmax.f32 %v5416, 0.0
        %v5557 = vmax.f32 %v5418, 0.0
        %v5558 = vmax.f32 %v5420, 0.0
        %v5559 = vmax.f32 %v5422, 0.0
        %v5560 = vmax.f32 %v5426, 0.0
        %v5561 = vmax.f32 %v5428, 0.0
        %v5562 = vmax.f32 %v5430, 0.0
        %v5563 = vmax.f32 %v5432, 0.0
        %v5564 = vmax.f32 %v5436, 0.0
        %v5565 = vmax.f32 %v5438, 0.0
        %v5566 = vmax.f32 %v5440, 0.0
        %v5567 = vmax.f32 %v5442, 0.0
        %v5568 = vmax.f32 %v5446, 0.0
        %v5569 = vmax.f32 %v5448, 0.0
        %v5570 = vmax.f32 %v5450, 0.0
        %v5571 = vmax.f32 %v5452, 0.0
        %v5572 = vmax.f32 %v5456, 0.0
        %v5573 = vmax.f32 %v5458, 0.0
        %v5574 = vmax.f32 %v5460, 0.0
        %v5575 = vmax.f32 %v5462, 0.0
        %v5576 = vmax.f32 %v5466, 0.0
        %v5577 = vmax.f32 %v5468, 0.0
        %v5578 = vmax.f32 %v5470, 0.0
        %v5579 = vmax.f32 %v5472, 0.0
        %v5580 = vmax.f32 %v5476, 0.0
        %v5581 = vmax.f32 %v5478, 0.0
        %v5582 = vmax.f32 %v5480, 0.0
        %v5583 = vmax.f32 %v5482, 0.0
        %v5584 = vmax.f32 %v5486, 0.0
        %v5585 = vmax.f32 %v5488, 0.0
        %v5586 = vmax.f32 %v5490, 0.0
        %v5587 = vmax.f32 %v5492, 0.0
        %v5588 = vmax.f32 %v5496, 0.0
        %v5589 = vmax.f32 %v5498, 0.0
        %v5590 = vmax.f32 %v5500, 0.0
        %v5591 = vmax.f32 %v5502, 0.0
        %v5592 = vmax.f32 %v5506, 0.0
        %v5593 = vmax.f32 %v5508, 0.0
        %v5594 = vmax.f32 %v5510, 0.0
        %v5595 = vmax.f32 %v5512, 0.0
        %v5596 = vmax.f32 %v5516, 0.0
        %v5597 = vmax.f32 %v5518, 0.0
        %v5598 = vmax.f32 %v5520, 0.0
        %v5599 = vmax.f32 %v5522, 0.0
        %v5600 = vmax.f32 %v5526, 0.0
        %v5601 = vmax.f32 %v5528, 0.0
        %v5602 = vmax.f32 %v5530, 0.0
        %v5603 = vmax.f32 %v5532, 0.0
        %v5604 = vmax.f32 %v5536, 0.0
        %v5605 = vmax.f32 %v5538, 0.0
        %v5606 = vmax.f32 %v5540, 0.0
        %v5607 = vmax.f32 %v5542, 0.0
        %v5608 = vld [vmem:[%s6] sm:$0xff]
        %v5609 = vld [vmem:[%s6 + $0x8] sm:$0xff]
        %v5610 = vpack.c.bf16 %v5546, %v5544
        %v5611 = vpack.c.bf16 %v5547, %v5545
        %v5612 = vpack.c.bf16 %v5550, %v5548
        %v5613 = vpack.c.bf16 %v5551, %v5549
        %v5614 = vpack.c.bf16 %v5554, %v5552
        %v5615 = vpack.c.bf16 %v5555, %v5553
        %v5616 = vpack.c.bf16 %v5558, %v5556
        %v5617 = vpack.c.bf16 %v5559, %v5557
        %v5618 = vpack.c.bf16 %v5562, %v5560
        %v5619 = vpack.c.bf16 %v5563, %v5561
        %v5620 = vpack.c.bf16 %v5566, %v5564
        %v5621 = vpack.c.bf16 %v5567, %v5565
        %v5622 = vpack.c.bf16 %v5570, %v5568
        %v5623 = vpack.c.bf16 %v5571, %v5569
        %v5624 = vpack.c.bf16 %v5574, %v5572
        %v5625 = vpack.c.bf16 %v5575, %v5573
        %v5626 = vpack.c.bf16 %v5578, %v5576
        %v5627 = vpack.c.bf16 %v5579, %v5577
        %v5628 = vpack.c.bf16 %v5582, %v5580
        %v5629 = vpack.c.bf16 %v5583, %v5581
        %v5630 = vpack.c.bf16 %v5586, %v5584
        %v5631 = vpack.c.bf16 %v5587, %v5585
        %v5632 = vpack.c.bf16 %v5590, %v5588
        %v5633 = vpack.c.bf16 %v5591, %v5589
        %v5634 = vpack.c.bf16 %v5594, %v5592
        %v5635 = vpack.c.bf16 %v5595, %v5593
        %v5636 = vpack.c.bf16 %v5598, %v5596
        %v5637 = vpack.c.bf16 %v5599, %v5597
        %v5638 = vpack.c.bf16 %v5602, %v5600
        %v5639 = vpack.c.bf16 %v5603, %v5601
        %v5640 = vpack.c.bf16 %v5606, %v5604
        %v5641 = vpack.c.bf16 %v5607, %v5605
        %v5642 = vld [vmem:[%s7] sm:$0xff]
        %v5643 = vld [vmem:[%s7 + $0x8] sm:$0xff]
        %5645 = vset.pattern.permute.xlu0 0
        %5646 = vperm.xlu0 %5645, %v5642
        %v5647 = vpop.permute.xlu0 %5646
        %5650 = vset.pattern.permute.xlu0 0
        %5651 = vperm.xlu0 %5650, %v5643
        %v5652 = vpop.permute.xlu0 %5651
        %v5656 = vunpack.c.l.b16 %v5608
        %v5657 = vunpack.c.h.b16 %v5608
        %v5658 = vunpack.c.l.b16 %v5609
        %v5659 = vunpack.c.h.b16 %v5609
        %v5660 = vpack.c.b16 %v5658, %v5656
        %v5661 = vpack.c.b16 %v5659, %v5657
        %5664 = vmatprep.subr.bf16.mxu0 %v5611
        %5665 = vmatpush1.bf16.xpose.msra.mxu0 %v5610
        %5666 = vmatprep.subr.bf16.mxu0 %v5613
        %5667 = vmatpush1.bf16.xpose.msra.mxu0 %v5612
        %5668 = vmatprep.subr.bf16.mxu0 %v5615
        %5669 = vmatpush1.bf16.xpose.msra.mxu0 %v5614
        %5670 = vmatprep.subr.bf16.mxu0 %v5617
        %5671 = vmatpush1.bf16.xpose.msra.mxu0 %v5616
        %5672 = vmatprep.subr.bf16.mxu0 %v5619
        %5673 = vmatpush1.bf16.xpose.msra.mxu0 %v5618
        %5674 = vmatprep.subr.bf16.mxu0 %v5621
        %5675 = vmatpush1.bf16.xpose.msra.mxu0 %v5620
        %5676 = vmatprep.subr.bf16.mxu0 %v5623
        %5677 = vmatpush1.bf16.xpose.msra.mxu0 %v5622
        %5678 = vmatprep.subr.bf16.mxu0 %v5625
        %5679 = vmatpush1.bf16.xpose.msra.mxu0 %v5624
        %5680 = vmatprep.subr.bf16.mxu0 %v5627
        %5681 = vmatpush1.bf16.xpose.msra.mxu0 %v5626
        %5682 = vmatprep.subr.bf16.mxu0 %v5629
        %5683 = vmatpush1.bf16.xpose.msra.mxu0 %v5628
        %5684 = vmatprep.subr.bf16.mxu0 %v5631
        %5685 = vmatpush1.bf16.xpose.msra.mxu0 %v5630
        %5686 = vmatprep.subr.bf16.mxu0 %v5633
        %5687 = vmatpush1.bf16.xpose.msra.mxu0 %v5632
        %5688 = vmatprep.subr.bf16.mxu0 %v5635
        %5689 = vmatpush1.bf16.xpose.msra.mxu0 %v5634
        %5690 = vmatprep.subr.bf16.mxu0 %v5637
        %5691 = vmatpush1.bf16.xpose.msra.mxu0 %v5636
        %5692 = vmatprep.subr.bf16.mxu0 %v5639
        %5693 = vmatpush1.bf16.xpose.msra.mxu0 %v5638
        %5694 = vmatprep.subr.bf16.mxu0 %v5641
        %5695 = vmatpush1.bf16.xpose.msra.mxu0 %v5640
        %5696 = vmatprep.mubr.bf16.mxu0 %v5661
        %5697 = vmatmul.mubr.bf16.gmra.mrb[0].mxu0 %v5660
        %v5698 = vpop.f32.mrb[0].mxu0
        %v5699 = vadd.f32 %v5647, %v5698
        %v5700 = vpop.f32.mrb[0].mxu0
        %v5701 = vadd.f32 %v5647, %v5700
        %v5702 = vpop.f32.mrb[0].mxu0
        %v5703 = vadd.f32 %v5652, %v5702
        %v5704 = vpop.f32.mrb[0].mxu0
        %v5705 = vadd.f32 %v5652, %v5704
        %5706 = vdwg.mxu0
        %vm5707 = vcmp.gt.f32.partialorder %v488, 0.1
        %vm5708 = vcmp.gt.f32.partialorder %v489, 0.1
        %v5709 = vsel %vm5707, 1, 0
        %v5710 = vsel %vm5708, 1, 0
        %v5711 = vcvt.s32.f32 %v5709
        %v5712 = vcvt.s32.f32 %v5710
        %v5713 = vld [vmem:[%s432] sm:$0xff]
        %v5714 = vld [vmem:[%s432 + $0x8] sm:$0xff]
        %v5715 = vld [vmem:[%s432 + $0x10] sm:$0x1]
        %v5716 = vld [vmem:[%s432 + $0x18] sm:$0x1]
        %v5717 = vsel %vm2717, %v5715, -inf
        %v5718 = vmax.f32 %v5713, %v5717
        %v5719 = vrot.slane %v5718, 4
        %v5720 = vmax.f32 %v5718, %v5719
        %v5721 = vrot.slane %v5720, 2
        %v5722 = vmax.f32 %v5720, %v5721
        %v5723 = vrot.slane %v5722, 1
        %v5724 = vmax.f32 %v5722, %v5723
        %v5725 = vsel %vm2717, %v5716, -inf
        %v5726 = vmax.f32 %v5714, %v5725
        %v5727 = vrot.slane %v5726, 4
        %v5728 = vmax.f32 %v5726, %v5727
        %v5729 = vrot.slane %v5728, 2
        %v5730 = vmax.f32 %v5728, %v5729
        %v5731 = vrot.slane %v5730, 1
        %v5732 = vmax.f32 %v5730, %v5731
        %vm5733 = vcmp.gt.f32.partialorder %v5724, 0.1
        %vm5734 = vcmp.gt.f32.partialorder %v5732, 0.1
        %v5735 = vsel %vm5733, 1, 0
        %v5736 = vsel %vm5734, 1, 0
        %v5737 = vcvt.s32.f32 %v5735
        %v5738 = vcvt.s32.f32 %v5736
        %v5739 = vsub.f32 %v5737, %v5711
        %v5740 = vsub.f32 %v5738, %v5712
        %v5741 = vsub.f32 1.0, %v5739
        %v5742 = vsub.f32 1.0, %v5740
        %v5743 = vadd.f32 %v5741, 0.19
        %v5744 = vadd.f32 %v5742, 0.19
        %v5745 = vmax.f32 %v5743, 0.0
        %v5746 = vmax.f32 %v5744, 0.0
        %v5747 = vmin.f32 %v5745, 1.0
        %v5748 = vmin.f32 %v5746, 1.0
        %v5751 = vcombine.low %v5747, %v5748
        %v5753 = vunpack.c.l.s4 1966171168
        %v5754 = vunpack.c.0.s8 %v5753
        %v5755 = vlaneseq
        %v5756 = vshrl.u32 %v5755, 7
        %v5757 = vsub.s32 %v5754, %v5756
        %v5758 = vrot.slane %v5751, %v5757
        %v5759 = vcombine.high %v5758, %v5758
        %v5761 = vunpack.c.l.s4 1966171168
        %v5762 = vunpack.c.0.s8 %v5761
        %v5763 = vlaneseq
        %v5764 = vshrl.u32 %v5763, 7
        %v5765 = vsub.s32 %v5762, %v5764
        %v5766 = vrot.slane %v5759, %v5765
        %v5768 = vlaneseq
        %vm5769 = vcmp.ge.s32.totalorder %v5768, 0
        %vm5770 = vcmp.lt.s32.totalorder %v5768, 256
        %vm5771 = vmand %vm5769, %vm5770
        %5772 = vst.msk [vmem:[%s413] sm:$0x3] %vm5771, %v5766
        %v5775 = vcombine.low %v5737, %v5738
        %v5777 = vunpack.c.l.s4 1966171168
        %v5778 = vunpack.c.0.s8 %v5777
        %v5779 = vlaneseq
        %v5780 = vshrl.u32 %v5779, 7
        %v5781 = vsub.s32 %v5778, %v5780
        %v5782 = vrot.slane %v5775, %v5781
        %v5784 = vunpack.c.l.s4 1966171168
        %v5785 = vunpack.c.0.s8 %v5784
        %v5786 = vlaneseq
        %v5787 = vshrl.u32 %v5786, 7
        %v5788 = vsub.s32 %v5785, %v5787
        %v5789 = vrot.slane %v5782, %v5788
        %5791 = vst.msk [vmem:[%s406] sm:$0x3] %vm5771, %v5789
        %v5793 = vlaneseq
        %v5794 = vshrl.u32 %v5793, 7
        %v5795 = vsub.s32 0, %v5794
        %v5796 = vrot.slane %v492, %v5795
        %v5797 = vlaneseq
        %v5798 = vshrl.u32 %v5797, 7
        %v5799 = vsub.s32 1, %v5798
        %v5800 = vrot.slane %v492, %v5799
        %v5803 = vmul.f32 %v5699, %v5796
        %v5804 = vmul.f32 %v5701, %v5800
        %v5805 = vmul.f32 %v5703, %v5796
        %v5806 = vmul.f32 %v5705, %v5800
        %v5807 = vadd.f32 %v488, %v5803
        %v5808 = vadd.f32 %v489, %v5804
        %v5809 = vadd.f32 %v490, %v5805
        %v5810 = vadd.f32 %v491, %v5806
        %v5811 = vmul.f32 %v5807, %v5737
        %v5812 = vmul.f32 %v5808, %v5738
        %v5813 = vmul.f32 %v5809, %v5737
        %v5814 = vmul.f32 %v5810, %v5738
        %5815 = vst [vmem:[%s399] sm:$0xff] %v5811
        %5816 = vst [vmem:[%s399 + $0x8] sm:$0xff] %v5812
        %5817 = vst [vmem:[%s399 + $0x10] sm:$0xff] %v5813
        %5818 = vst [vmem:[%s399 + $0x18] sm:$0xff] %v5814
        %s5819 = sand.u32 %s224, 1
        %s5820 = scalar_lea.sflag [#allocation3], %s5819
        %s5821 = sand.u32 %s224, 1
        %s5822 = smul.addr %s5821, 32
        %s5823 = scalar_lea.vmem [#allocation2], %s5822
        %s5824 = sand.u32 %s28, 1
        %s5825 = scalar_lea.sflag [#allocation5], %s5824
        %s5826 = sand.u32 %s250, 1
        %s5827 = smul.addr %s5826, 2
        %s5828 = scalar_lea.vmem [#allocation4], %s5827
        %s5829 = sand.u32 %s28, 1
        %s5830 = scalar_lea.sflag [#allocation5], %s5829
        %s5831 = sand.u32 %s276, 1
        %s5832 = smul.addr %s5831, 2
        %s5833 = scalar_lea.vmem [#allocation6], %s5832
        // Predicated region
        $region53: #{tpu_custom_call.1} parent=51 // pred_check
          %p5834 = pneg %p234
        $region54: #{tpu_custom_call.1} parent=51 // pred_check_branch
          %5836 = sbr.rel (%p5834) target = $region56
        $region55: #{tpu_custom_call.1} parent=51 // pred_region
          %s5838 = ssub.s32 512, 512
          %5839 = vsyncadd %s5820, %s5838
          %s5840 = smul.addr %s28, 4
          %s5841 = smul.addr %s5840, 128
          %s5842 = scalar_lea.hbm %s8, %s5841
          %s5843 = sshll.u32 %s5823, 4
          %s5844 = int_to_ptr.vmem [resolvable:$true] %s5843
          %5849 = dma.vmem_to_hbm [thread:$0]  %s5844, 512, %s5842, %s5820, 256, 256, 16
        $region56: #{tpu_custom_call.1} parent=51 // pred_fallthru
          _
        // Predicated region
        $region57: #{tpu_custom_call.1} parent=51 // pred_check
          %p5850 = pneg %p260
        $region58: #{tpu_custom_call.1} parent=51 // pred_check_branch
          %5852 = sbr.rel (%p5850) target = $region60
        $region59: #{tpu_custom_call.1} parent=51 // pred_region
          %s5854 = ssub.s32 32, 32
          %5855 = vsyncadd %s5825, %s5854
          %s5856 = smul.addr %s28, 2
          %s5857 = smul.addr %s5856, 16
          %s5858 = scalar_lea.hbm %s9, %s5857
          %s5860 = sshll.u32 %s5828, 4
          %s5861 = int_to_ptr.vmem [resolvable:$true] %s5860
          %5863 = dma.vmem_to_hbm [thread:$0]  %s5861, 32, %s5858, %s5825
        $region60: #{tpu_custom_call.1} parent=51 // pred_fallthru
          _
        // Predicated region
        $region61: #{tpu_custom_call.1} parent=51 // pred_check
          %p5864 = pneg %p286
        $region62: #{tpu_custom_call.1} parent=51 // pred_check_branch
          %5866 = sbr.rel (%p5864) target = $region64
        $region63: #{tpu_custom_call.1} parent=51 // pred_region
          %s5868 = ssub.s32 32, 32
          %5869 = vsyncadd %s5830, %s5868
          %s5870 = smul.addr %s28, 2
          %s5871 = smul.addr %s5870, 16
          %s5872 = scalar_lea.hbm %s10, %s5871
          %s5874 = sshll.u32 %s5833, 4
          %s5875 = int_to_ptr.vmem [resolvable:$true] %s5874
          %5877 = dma.vmem_to_hbm [thread:$0]  %s5875, 32, %s5872, %s5830
        $region64: #{tpu_custom_call.1} parent=51 // pred_fallthru
          _
      $region52: #{tpu_custom_call.1} parent=5 // pred_fallthru
        _
      %p5878 = scmp.le.s32.totalorder 2, %s23
      // Predicated region
      $region65: #{tpu_custom_call.1} parent=5 // pred_check
        %p5879 = pneg %p5878
      $region66: #{tpu_custom_call.1} parent=5 // pred_check_branch
        %5881 = sbr.rel (%p5879) target = $region68
      $region67: #{tpu_custom_call.1} parent=5 // pred_region
        %s5882 = ssub.s32 %s23, 2
        // Predicated region
        $region69: #{tpu_custom_call.1} parent=67 // pred_check
          %p5883 = pneg %p240
        $region70: #{tpu_custom_call.1} parent=67 // pred_check_branch
          %5885 = sbr.rel (%p5883) target = $region72
        $region71: #{tpu_custom_call.1} parent=67 // pred_region
          %s5886 = sand.u32 %s225, 1
          %s5887 = scalar_lea.sflag [#allocation3], %s5886
          %s5888 = sand.u32 %s225, 1
          %s5889 = smul.addr %s5888, 32
          %s5890 = scalar_lea.vmem [#allocation2], %s5889
          %5891 = dma.done %s5887, 512
        $region72: #{tpu_custom_call.1} parent=67 // pred_fallthru
          _
        // Predicated region
        $region73: #{tpu_custom_call.1} parent=67 // pred_check
          %p5892 = pneg %p266
        $region74: #{tpu_custom_call.1} parent=67 // pred_check_branch
          %5894 = sbr.rel (%p5892) target = $region76
        $region75: #{tpu_custom_call.1} parent=67 // pred_region
          %s5895 = sand.u32 %s29, 1
          %s5896 = scalar_lea.sflag [#allocation5], %s5895
          %s5897 = sand.u32 %s251, 1
          %s5898 = smul.addr %s5897, 2
          %s5899 = scalar_lea.vmem [#allocation4], %s5898
          %5900 = dma.done %s5896, 32
        $region76: #{tpu_custom_call.1} parent=67 // pred_fallthru
          _
        // Predicated region
        $region77: #{tpu_custom_call.1} parent=67 // pred_check
          %p5901 = pneg %p292
        $region78: #{tpu_custom_call.1} parent=67 // pred_check_branch
          %5903 = sbr.rel (%p5901) target = $region80
        $region79: #{tpu_custom_call.1} parent=67 // pred_region
          %s5904 = sand.u32 %s29, 1
          %s5905 = scalar_lea.sflag [#allocation5], %s5904
          %s5906 = sand.u32 %s277, 1
          %s5907 = smul.addr %s5906, 2
          %s5908 = scalar_lea.vmem [#allocation6], %s5907
          %5909 = dma.done %s5905, 32
        $region80: #{tpu_custom_call.1} parent=67 // pred_fallthru
          _
      $region68: #{tpu_custom_call.1} parent=5 // pred_fallthru
        _
    $region6: #{tpu_custom_call.1} parent=1 // loop_footer
      %s27 = sadd.s32 1, %s23
    $region7: #{tpu_custom_call.1} parent=1 // loop_footer_branch
      %22 = sbr.rel target = $region3
    $region8: #{tpu_custom_call.1} parent=1 // loop_exit
      _
    %5910 = vsyncpa [#allocation3], 1
    %s5911 = scalar_lea.sflag [#allocation3], 1
    %5912 = vsyncpa %s5911, 1
    %5913 = vsyncpa [#allocation5], 1
    %s5914 = scalar_lea.sflag [#allocation5], 1
    %5915 = vsyncpa %s5914, 1

</llo_original>
